<compile_context>
chip_gen: v7x
topology: tpu7x:2x2x1
jax: 0.10.0
libtpu: 0.0.40
codegen_flags: <defaults>
</compile_context>

<pallas_src>
import functools

import jax
import jax.numpy as jnp
from jax.experimental import pallas as pl
from jax.experimental.pallas import tpu as pltpu


# ----------------------------------------------------------------------------
# Pallas kernel
# ----------------------------------------------------------------------------
def _lstm_cell(gates, c_prev, H):
    """PyTorch LSTM cell update. gates: (B, 4H) pre-activation, order i,f,g,o."""
    sg = jax.nn.sigmoid(gates)       # full-width EUP pass
    th = jnp.tanh(gates)             # full-width EUP pass
    i = sg[:, 0 * H:1 * H]
    f = sg[:, 1 * H:2 * H]
    g = th[:, 2 * H:3 * H]
    o = sg[:, 3 * H:4 * H]
    c = f * c_prev + i * g
    h = o * jnp.tanh(c)
    return h, c


def _bilstm_kernel(*refs, T, B, H, n_in, with_dec):
    """Fused bidirectional LSTM layer over a full sequence (optionally + decoder).

    Inputs (in order):
      x chunks           n_in refs, each (T*B, D_c)   time-major, flattened
      fwd: wi chunks     n_in refs, each (D_c, 4H)    pre-transposed
           wh            (H, 4H)
           b             (1, 4H)                      b_ih + b_hh
      bwd: wi chunks / wh / b                          same shapes
      [decoder w (4H, 2), decoder b (1, 2)]            only if with_dec
    Outputs:
      if with_dec:  (B, 2) logits
      else:         h_fwd (T, B, H), h_bwd (T, B, H)   (bwd stored in time order)
    """
    pos = 0
    x_refs = refs[pos:pos + n_in]; pos += n_in
    wi_f_refs = refs[pos:pos + n_in]; pos += n_in
    wh_f_ref = refs[pos]; pos += 1
    b_f_ref = refs[pos]; pos += 1
    wi_b_refs = refs[pos:pos + n_in]; pos += n_in
    wh_b_ref = refs[pos]; pos += 1
    b_b_ref = refs[pos]; pos += 1
    if with_dec:
        w_dec_ref = refs[pos]; pos += 1
        b_dec_ref = refs[pos]; pos += 1
        out_ref = refs[pos]; pos += 1
    else:
        out_f_ref = refs[pos]; pos += 1
        out_b_ref = refs[pos]; pos += 1

    # ---- Hoisted input projection: one big matmul per direction (off the
    # ---- recurrent critical path; also absorbs the bias broadcast once).
    gf = b_f_ref[...]                                        # (1, 4H)
    gb = b_b_ref[...]
    for x_ref, wf_ref, wb_ref in zip(x_refs, wi_f_refs, wi_b_refs):
        xv = x_ref[...]                                      # (T*B, D_c)
        gf = gf + jnp.dot(xv, wf_ref[...], preferred_element_type=jnp.float32)
        gb = gb + jnp.dot(xv, wb_ref[...], preferred_element_type=jnp.float32)
    # gf, gb: (T*B, 4H) pre-activation input contributions.

    wh_f = wh_f_ref[...]                                     # (H, 4H), loaded once
    wh_b = wh_b_ref[...]

    hf = jnp.zeros((B, H), jnp.float32)
    cf = jnp.zeros((B, H), jnp.float32)
    hb = jnp.zeros((B, H), jnp.float32)
    cb = jnp.zeros((B, H), jnp.float32)

    hf0 = hb0 = hfT = hbT = None

    # ---- Fully unrolled recurrence: step s runs fwd time s and bwd time T-1-s,
    # ---- two independent chains the scheduler can interleave.
    for s in range(T):
        tf = s
        tb = T - 1 - s
        gates_f = gf[tf * B:(tf + 1) * B, :] + jnp.dot(
            hf, wh_f, preferred_element_type=jnp.float32)
        gates_b = gb[tb * B:(tb + 1) * B, :] + jnp.dot(
            hb, wh_b, preferred_element_type=jnp.float32)
        hf, cf = _lstm_cell(gates_f, cf, H)
        hb, cb = _lstm_cell(gates_b, cb, H)

        if with_dec:
            if s == 0:
                hf0, hbT = hf, hb          # h_fwd[0], h_bwd[T-1]
            if s == T - 1:
                hfT, hb0 = hf, hb          # h_fwd[T-1], h_bwd[0]
        else:
            out_f_ref[tf] = hf.astype(out_f_ref.dtype)
            out_b_ref[tb] = hb.astype(out_b_ref.dtype)

    if with_dec:
        # encoding = cat(outputs[0], outputs[-1]) = [hf0, hb0, hfT, hbT] (B, 4H).
        # Decoder as four sliced matmuls (concat-free): enc @ W = sum of parts.
        wd = w_dec_ref[...]                                  # (4H, out)
        logits = (
            jnp.dot(hf0, wd[0 * H:1 * H, :], preferred_element_type=jnp.float32)
            + jnp.dot(hb0, wd[1 * H:2 * H, :], preferred_element_type=jnp.float32)
            + jnp.dot(hfT, wd[2 * H:3 * H, :], preferred_element_type=jnp.float32)
            + jnp.dot(hbT, wd[3 * H:4 * H, :], preferred_element_type=jnp.float32)
            + b_dec_ref[...]
        )
        out_ref[...] = logits.astype(out_ref.dtype)


# ----------------------------------------------------------------------------
# Wrapper around pallas_call
# ----------------------------------------------------------------------------
def _vmem_spec():
    return pl.BlockSpec(memory_space=pltpu.MemorySpace.VMEM)


def bilstm_layer(x_chunks, fwd_p, bwd_p, *, T, B, H, dec=None):
    """One fused bidirectional LSTM layer (optionally fused with the decoder).

    x_chunks: list of (T*B, D_c) f32 arrays whose feature concat is the layer input.
    Returns (h_fwd, h_bwd) each (T, B, H), or (B, out) logits if dec is given.
    """
    n_in = len(x_chunks)
    inputs = list(x_chunks)
    inputs += list(fwd_p["wi"]) + [fwd_p["wh"], fwd_p["b"]]
    inputs += list(bwd_p["wi"]) + [bwd_p["wh"], bwd_p["b"]]

    if dec is not None:
        inputs += [dec["w"], dec["b"]]
        out_shape = jax.ShapeDtypeStruct((B, dec["w"].shape[1]), jnp.float32)
        out_specs = _vmem_spec()
    else:
        out_shape = (
            jax.ShapeDtypeStruct((T, B, H), jnp.float32),
            jax.ShapeDtypeStruct((T, B, H), jnp.float32),
        )
        out_specs = (_vmem_spec(), _vmem_spec())

    kernel = functools.partial(
        _bilstm_kernel, T=T, B=B, H=H, n_in=n_in, with_dec=dec is not None
    )
    return pl.pallas_call(
        kernel,
        out_shape=out_shape,
        in_specs=[_vmem_spec()] * len(inputs),
        out_specs=out_specs,
        compiler_params=pltpu.CompilerParams(vmem_limit_bytes=32 * 1024 * 1024),
    )(*inputs)


# ----------------------------------------------------------------------------
# Parameter initialization (deterministic, matches PyTorch module shapes)
# ----------------------------------------------------------------------------
def init_params(key, vocab_size, embed_size, num_hiddens, num_layers):
    k_embed, k_lstm, k_dec = jax.random.split(key, 3)
    params = {}

    params["embedding"] = jax.random.normal(
        k_embed, (vocab_size, embed_size), jnp.float32
    )

    bound = 1.0 / float(num_hiddens) ** 0.5
    lstm = []
    keys = jax.random.split(k_lstm, num_layers * 2 * 4).reshape(num_layers, 2, 4, 2)
    for layer in range(num_layers):
        in_size = embed_size if layer == 0 else 2 * num_hiddens
        dirs = []
        for d in range(2):
            kw_ih, kw_hh, kb_ih, kb_hh = keys[layer, d]
            w_ih = jax.random.uniform(
                kw_ih, (4 * num_hiddens, in_size), jnp.float32, -bound, bound
            )
            w_hh = jax.random.uniform(
                kw_hh, (4 * num_hiddens, num_hiddens), jnp.float32, -bound, bound
            )
            b_ih = jax.random.uniform(
                kb_ih, (4 * num_hiddens,), jnp.float32, -bound, bound
            )
            b_hh = jax.random.uniform(
                kb_hh, (4 * num_hiddens,), jnp.float32, -bound, bound
            )
            w_ih_t = w_ih.T                                   # (in, 4H)
            if layer == 0:
                wi_chunks = (w_ih_t,)                         # single (E, 4H)
            else:
                # next layer consumes (h_fwd, h_bwd) separately: split rows
                wi_chunks = (w_ih_t[:num_hiddens], w_ih_t[num_hiddens:])
            dirs.append(
                {
                    "wi": wi_chunks,                          # tuple of (D_c, 4H)
                    "wh": w_hh.T,                             # (H, 4H)
                    "b": (b_ih + b_hh)[None, :],              # (1, 4H)
                }
            )
        lstm.append(dirs)
    params["lstm"] = lstm

    kd_w, kd_b = jax.random.split(k_dec)
    dec_bound = 1.0 / float(4 * num_hiddens) ** 0.5
    w_dec = jax.random.uniform(
        kd_w, (2, 4 * num_hiddens), jnp.float32, -dec_bound, dec_bound
    )
    b_dec = jax.random.uniform(kd_b, (2,), jnp.float32, -dec_bound, dec_bound)
    params["dec_w_t"] = w_dec.T        # (4H, 2)
    params["dec_b"] = b_dec[None, :]   # (1, 2)
    return params


# ----------------------------------------------------------------------------
# Forward pass (mirrors BiRNN.forward, eval mode)
# ----------------------------------------------------------------------------
@functools.partial(jax.jit, static_argnames=("num_layers",))
def birnn_forward(params, inputs, num_layers):
    # inputs: (batch, seq) int32 tokens; PyTorch does inputs.T -> (seq, batch)
    tokens_t = inputs.T                                   # (T, B)
    T, B = tokens_t.shape
    emb = jnp.take(params["embedding"], tokens_t, axis=0)  # (T, B, E) embedding lookup (glue)
    H = params["lstm"][0][0]["wh"].shape[0]

    x_chunks = [emb.reshape(T * B, -1)]                   # time-major, flattened
    outs = None
    for layer in range(num_layers):
        fwd_p, bwd_p = params["lstm"][layer]
        if layer == num_layers - 1:
            # Final layer: decoder fused into the kernel epilogue; no (T,B,2H) writeback.
            outs = bilstm_layer(
                x_chunks, fwd_p, bwd_p, T=T, B=B, H=H,
                dec={"w": params["dec_w_t"], "b": params["dec_b"]},
            )
        else:
            h_fwd, h_bwd = bilstm_layer(x_chunks, fwd_p, bwd_p, T=T, B=B, H=H)
            # No concatenate: next layer consumes the two halves directly
            # against the split w_ih chunks.
            x_chunks = [h_fwd.reshape(T * B, H), h_bwd.reshape(T * B, H)]
    return outs


# ----------------------------------------------------------------------------
# Main
# ----------------------------------------------------------------------------
if __name__ == "__main__":
    vocab_size = 50
    embed_size = 32
    num_hiddens = 32
    num_layers = 2
    batch = 2
    seq_len = 8

    key = jax.random.PRNGKey(0)
    k_params, k_tokens = jax.random.split(key)

    params = init_params(k_params, vocab_size, embed_size, num_hiddens, num_layers)
    inputs = jax.random.randint(k_tokens, (batch, seq_len), 0, vocab_size, jnp.int32)

    out = birnn_forward(params, inputs, num_layers)
    out = jax.block_until_ready(out)
    assert out.shape == (batch, 2), out.shape
    print("KERNEL_OK")
</pallas_src>

<mosaic_0001>
module attributes {stable_mosaic.version = 11 : i64} {
  func.func @_bilstm_kernel(%arg0: memref<16x32xf32, #tpu.memory_space<vmem>>, %arg1: memref<16x32xf32, #tpu.memory_space<vmem>>, %arg2: memref<32x128xf32, #tpu.memory_space<vmem>>, %arg3: memref<32x128xf32, #tpu.memory_space<vmem>>, %arg4: memref<32x128xf32, #tpu.memory_space<vmem>>, %arg5: memref<1x128xf32, #tpu.memory_space<vmem>>, %arg6: memref<32x128xf32, #tpu.memory_space<vmem>>, %arg7: memref<32x128xf32, #tpu.memory_space<vmem>>, %arg8: memref<32x128xf32, #tpu.memory_space<vmem>>, %arg9: memref<1x128xf32, #tpu.memory_space<vmem>>, %arg10: memref<128x2xf32, #tpu.memory_space<vmem>>, %arg11: memref<1x2xf32, #tpu.memory_space<vmem>>, %arg12: memref<2x2xf32, #tpu.memory_space<vmem>>) attributes {dimension_semantics = [], scalar_prefetch = 0 : i64, scratch_operands = 0 : i64, tpu.core_type = #tpu.core_type<tc>} {
    %c0 = arith.constant 0 : index
    %c0_0 = arith.constant 0 : index
    %0 = vector.load %arg5[%c0, %c0_0] : memref<1x128xf32, #tpu.memory_space<vmem>>, vector<1x128xf32>
    %c0_1 = arith.constant 0 : index
    %c0_2 = arith.constant 0 : index
    %1 = vector.load %arg9[%c0_1, %c0_2] : memref<1x128xf32, #tpu.memory_space<vmem>>, vector<1x128xf32>
    %c0_3 = arith.constant 0 : index
    %c0_4 = arith.constant 0 : index
    %2 = vector.load %arg0[%c0_3, %c0_4] : memref<16x32xf32, #tpu.memory_space<vmem>>, vector<16x32xf32>
    %c0_5 = arith.constant 0 : index
    %c0_6 = arith.constant 0 : index
    %3 = vector.load %arg2[%c0_5, %c0_6] : memref<32x128xf32, #tpu.memory_space<vmem>>, vector<32x128xf32>
    %cst = arith.constant dense<0.000000e+00> : vector<16x128xf32>
    %4 = tpu.matmul %2, %3, %cst {dimension_numbers = #tpu.dot_dimension_numbers<[1], [0], [0], [1], [0, 0, 1, 1], [], []>} : vector<16x32xf32>, vector<32x128xf32>, vector<16x128xf32> -> vector<16x128xf32>
    %5 = vector.broadcast %0 : vector<1x128xf32> to vector<16x128xf32>
    %6 = arith.addf %5, %4 : vector<16x128xf32>
    %c0_7 = arith.constant 0 : index
    %c0_8 = arith.constant 0 : index
    %7 = vector.load %arg6[%c0_7, %c0_8] : memref<32x128xf32, #tpu.memory_space<vmem>>, vector<32x128xf32>
    %cst_9 = arith.constant dense<0.000000e+00> : vector<16x128xf32>
    %8 = tpu.matmul %2, %7, %cst_9 {dimension_numbers = #tpu.dot_dimension_numbers<[1], [0], [0], [1], [0, 0, 1, 1], [], []>} : vector<16x32xf32>, vector<32x128xf32>, vector<16x128xf32> -> vector<16x128xf32>
    %9 = vector.broadcast %1 : vector<1x128xf32> to vector<16x128xf32>
    %10 = arith.addf %9, %8 : vector<16x128xf32>
    %c0_10 = arith.constant 0 : index
    %c0_11 = arith.constant 0 : index
    %11 = vector.load %arg1[%c0_10, %c0_11] : memref<16x32xf32, #tpu.memory_space<vmem>>, vector<16x32xf32>
    %c0_12 = arith.constant 0 : index
    %c0_13 = arith.constant 0 : index
    %12 = vector.load %arg3[%c0_12, %c0_13] : memref<32x128xf32, #tpu.memory_space<vmem>>, vector<32x128xf32>
    %cst_14 = arith.constant dense<0.000000e+00> : vector<16x128xf32>
    %13 = tpu.matmul %11, %12, %cst_14 {dimension_numbers = #tpu.dot_dimension_numbers<[1], [0], [0], [1], [0, 0, 1, 1], [], []>} : vector<16x32xf32>, vector<32x128xf32>, vector<16x128xf32> -> vector<16x128xf32>
    %14 = arith.addf %6, %13 : vector<16x128xf32>
    %c0_15 = arith.constant 0 : index
    %c0_16 = arith.constant 0 : index
    %15 = vector.load %arg7[%c0_15, %c0_16] : memref<32x128xf32, #tpu.memory_space<vmem>>, vector<32x128xf32>
    %cst_17 = arith.constant dense<0.000000e+00> : vector<16x128xf32>
    %16 = tpu.matmul %11, %15, %cst_17 {dimension_numbers = #tpu.dot_dimension_numbers<[1], [0], [0], [1], [0, 0, 1, 1], [], []>} : vector<16x32xf32>, vector<32x128xf32>, vector<16x128xf32> -> vector<16x128xf32>
    %17 = arith.addf %10, %16 : vector<16x128xf32>
    %c0_18 = arith.constant 0 : index
    %c0_19 = arith.constant 0 : index
    %18 = vector.load %arg4[%c0_18, %c0_19] : memref<32x128xf32, #tpu.memory_space<vmem>>, vector<32x128xf32>
    %c0_20 = arith.constant 0 : index
    %c0_21 = arith.constant 0 : index
    %19 = vector.load %arg8[%c0_20, %c0_21] : memref<32x128xf32, #tpu.memory_space<vmem>>, vector<32x128xf32>
    %cst_22 = arith.constant 0.000000e+00 : f32
    %20 = vector.broadcast %cst_22 : f32 to vector<2x32xf32>
    %cst_23 = arith.constant 0.000000e+00 : f32
    %21 = vector.broadcast %cst_23 : f32 to vector<2x32xf32>
    %cst_24 = arith.constant 0.000000e+00 : f32
    %22 = vector.broadcast %cst_24 : f32 to vector<2x32xf32>
    %cst_25 = arith.constant 0.000000e+00 : f32
    %23 = vector.broadcast %cst_25 : f32 to vector<2x32xf32>
    %24 = vector.extract_strided_slice %14 {offsets = [0, 0], sizes = [2, 128], strides = [1, 1]} : vector<16x128xf32> to vector<2x128xf32>
    %cst_26 = arith.constant dense<0.000000e+00> : vector<2x128xf32>
    %25 = tpu.matmul %20, %18, %cst_26 {dimension_numbers = #tpu.dot_dimension_numbers<[1], [0], [0], [1], [0, 0, 1, 1], [], []>} : vector<2x32xf32>, vector<32x128xf32>, vector<2x128xf32> -> vector<2x128xf32>
    %26 = arith.addf %24, %25 : vector<2x128xf32>
    %27 = vector.extract_strided_slice %17 {offsets = [14, 0], sizes = [2, 128], strides = [1, 1]} : vector<16x128xf32> to vector<2x128xf32>
    %cst_27 = arith.constant dense<0.000000e+00> : vector<2x128xf32>
    %28 = tpu.matmul %22, %19, %cst_27 {dimension_numbers = #tpu.dot_dimension_numbers<[1], [0], [0], [1], [0, 0, 1, 1], [], []>} : vector<2x32xf32>, vector<32x128xf32>, vector<2x128xf32> -> vector<2x128xf32>
    %29 = arith.addf %27, %28 : vector<2x128xf32>
    %30 = arith.negf %26 : vector<2x128xf32>
    %31 = math.exp %30 : vector<2x128xf32>
    %cst_28 = arith.constant 1.000000e+00 : f32
    %32 = vector.broadcast %cst_28 : f32 to vector<2x128xf32>
    %33 = arith.addf %32, %31 : vector<2x128xf32>
    %34 = arith.divf %32, %33 : vector<2x128xf32>
    %35 = math.tanh %26 : vector<2x128xf32>
    %36 = vector.extract_strided_slice %34 {offsets = [0, 0], sizes = [2, 32], strides = [1, 1]} : vector<2x128xf32> to vector<2x32xf32>
    %37 = vector.extract_strided_slice %34 {offsets = [0, 32], sizes = [2, 32], strides = [1, 1]} : vector<2x128xf32> to vector<2x32xf32>
    %38 = vector.extract_strided_slice %35 {offsets = [0, 64], sizes = [2, 32], strides = [1, 1]} : vector<2x128xf32> to vector<2x32xf32>
    %39 = vector.extract_strided_slice %34 {offsets = [0, 96], sizes = [2, 32], strides = [1, 1]} : vector<2x128xf32> to vector<2x32xf32>
    %40 = arith.mulf %37, %21 : vector<2x32xf32>
    %41 = arith.mulf %36, %38 : vector<2x32xf32>
    %42 = arith.addf %40, %41 : vector<2x32xf32>
    %43 = math.tanh %42 : vector<2x32xf32>
    %44 = arith.mulf %39, %43 : vector<2x32xf32>
    %45 = arith.negf %29 : vector<2x128xf32>
    %46 = math.exp %45 : vector<2x128xf32>
    %cst_29 = arith.constant 1.000000e+00 : f32
    %47 = vector.broadcast %cst_29 : f32 to vector<2x128xf32>
    %48 = arith.addf %47, %46 : vector<2x128xf32>
    %49 = arith.divf %47, %48 : vector<2x128xf32>
    %50 = math.tanh %29 : vector<2x128xf32>
    %51 = vector.extract_strided_slice %49 {offsets = [0, 0], sizes = [2, 32], strides = [1, 1]} : vector<2x128xf32> to vector<2x32xf32>
    %52 = vector.extract_strided_slice %49 {offsets = [0, 32], sizes = [2, 32], strides = [1, 1]} : vector<2x128xf32> to vector<2x32xf32>
    %53 = vector.extract_strided_slice %50 {offsets = [0, 64], sizes = [2, 32], strides = [1, 1]} : vector<2x128xf32> to vector<2x32xf32>
    %54 = vector.extract_strided_slice %49 {offsets = [0, 96], sizes = [2, 32], strides = [1, 1]} : vector<2x128xf32> to vector<2x32xf32>
    %55 = arith.mulf %52, %23 : vector<2x32xf32>
    %56 = arith.mulf %51, %53 : vector<2x32xf32>
    %57 = arith.addf %55, %56 : vector<2x32xf32>
    %58 = math.tanh %57 : vector<2x32xf32>
    %59 = arith.mulf %54, %58 : vector<2x32xf32>
    %60 = vector.extract_strided_slice %14 {offsets = [2, 0], sizes = [2, 128], strides = [1, 1]} : vector<16x128xf32> to vector<2x128xf32>
    %cst_30 = arith.constant dense<0.000000e+00> : vector<2x128xf32>
    %61 = tpu.matmul %44, %18, %cst_30 {dimension_numbers = #tpu.dot_dimension_numbers<[1], [0], [0], [1], [0, 0, 1, 1], [], []>} : vector<2x32xf32>, vector<32x128xf32>, vector<2x128xf32> -> vector<2x128xf32>
    %62 = arith.addf %60, %61 : vector<2x128xf32>
    %63 = vector.extract_strided_slice %17 {offsets = [12, 0], sizes = [2, 128], strides = [1, 1]} : vector<16x128xf32> to vector<2x128xf32>
    %cst_31 = arith.constant dense<0.000000e+00> : vector<2x128xf32>
    %64 = tpu.matmul %59, %19, %cst_31 {dimension_numbers = #tpu.dot_dimension_numbers<[1], [0], [0], [1], [0, 0, 1, 1], [], []>} : vector<2x32xf32>, vector<32x128xf32>, vector<2x128xf32> -> vector<2x128xf32>
    %65 = arith.addf %63, %64 : vector<2x128xf32>
    %66 = arith.negf %62 : vector<2x128xf32>
    %67 = math.exp %66 : vector<2x128xf32>
    %cst_32 = arith.constant 1.000000e+00 : f32
    %68 = vector.broadcast %cst_32 : f32 to vector<2x128xf32>
    %69 = arith.addf %68, %67 : vector<2x128xf32>
    %70 = arith.divf %68, %69 : vector<2x128xf32>
    %71 = math.tanh %62 : vector<2x128xf32>
    %72 = vector.extract_strided_slice %70 {offsets = [0, 0], sizes = [2, 32], strides = [1, 1]} : vector<2x128xf32> to vector<2x32xf32>
    %73 = vector.extract_strided_slice %70 {offsets = [0, 32], sizes = [2, 32], strides = [1, 1]} : vector<2x128xf32> to vector<2x32xf32>
    %74 = vector.extract_strided_slice %71 {offsets = [0, 64], sizes = [2, 32], strides = [1, 1]} : vector<2x128xf32> to vector<2x32xf32>
    %75 = vector.extract_strided_slice %70 {offsets = [0, 96], sizes = [2, 32], strides = [1, 1]} : vector<2x128xf32> to vector<2x32xf32>
    %76 = arith.mulf %73, %42 : vector<2x32xf32>
    %77 = arith.mulf %72, %74 : vector<2x32xf32>
    %78 = arith.addf %76, %77 : vector<2x32xf32>
    %79 = math.tanh %78 : vector<2x32xf32>
    %80 = arith.mulf %75, %79 : vector<2x32xf32>
    %81 = arith.negf %65 : vector<2x128xf32>
    %82 = math.exp %81 : vector<2x128xf32>
    %cst_33 = arith.constant 1.000000e+00 : f32
    %83 = vector.broadcast %cst_33 : f32 to vector<2x128xf32>
    %84 = arith.addf %83, %82 : vector<2x128xf32>
    %85 = arith.divf %83, %84 : vector<2x128xf32>
    %86 = math.tanh %65 : vector<2x128xf32>
    %87 = vector.extract_strided_slice %85 {offsets = [0, 0], sizes = [2, 32], strides = [1, 1]} : vector<2x128xf32> to vector<2x32xf32>
    %88 = vector.extract_strided_slice %85 {offsets = [0, 32], sizes = [2, 32], strides = [1, 1]} : vector<2x128xf32> to vector<2x32xf32>
    %89 = vector.extract_strided_slice %86 {offsets = [0, 64], sizes = [2, 32], strides = [1, 1]} : vector<2x128xf32> to vector<2x32xf32>
    %90 = vector.extract_strided_slice %85 {offsets = [0, 96], sizes = [2, 32], strides = [1, 1]} : vector<2x128xf32> to vector<2x32xf32>
    %91 = arith.mulf %88, %57 : vector<2x32xf32>
    %92 = arith.mulf %87, %89 : vector<2x32xf32>
    %93 = arith.addf %91, %92 : vector<2x32xf32>
    %94 = math.tanh %93 : vector<2x32xf32>
    %95 = arith.mulf %90, %94 : vector<2x32xf32>
    %96 = vector.extract_strided_slice %14 {offsets = [4, 0], sizes = [2, 128], strides = [1, 1]} : vector<16x128xf32> to vector<2x128xf32>
    %cst_34 = arith.constant dense<0.000000e+00> : vector<2x128xf32>
    %97 = tpu.matmul %80, %18, %cst_34 {dimension_numbers = #tpu.dot_dimension_numbers<[1], [0], [0], [1], [0, 0, 1, 1], [], []>} : vector<2x32xf32>, vector<32x128xf32>, vector<2x128xf32> -> vector<2x128xf32>
    %98 = arith.addf %96, %97 : vector<2x128xf32>
    %99 = vector.extract_strided_slice %17 {offsets = [10, 0], sizes = [2, 128], strides = [1, 1]} : vector<16x128xf32> to vector<2x128xf32>
    %cst_35 = arith.constant dense<0.000000e+00> : vector<2x128xf32>
    %100 = tpu.matmul %95, %19, %cst_35 {dimension_numbers = #tpu.dot_dimension_numbers<[1], [0], [0], [1], [0, 0, 1, 1], [], []>} : vector<2x32xf32>, vector<32x128xf32>, vector<2x128xf32> -> vector<2x128xf32>
    %101 = arith.addf %99, %100 : vector<2x128xf32>
    %102 = arith.negf %98 : vector<2x128xf32>
    %103 = math.exp %102 : vector<2x128xf32>
    %cst_36 = arith.constant 1.000000e+00 : f32
    %104 = vector.broadcast %cst_36 : f32 to vector<2x128xf32>
    %105 = arith.addf %104, %103 : vector<2x128xf32>
    %106 = arith.divf %104, %105 : vector<2x128xf32>
    %107 = math.tanh %98 : vector<2x128xf32>
    %108 = vector.extract_strided_slice %106 {offsets = [0, 0], sizes = [2, 32], strides = [1, 1]} : vector<2x128xf32> to vector<2x32xf32>
    %109 = vector.extract_strided_slice %106 {offsets = [0, 32], sizes = [2, 32], strides = [1, 1]} : vector<2x128xf32> to vector<2x32xf32>
    %110 = vector.extract_strided_slice %107 {offsets = [0, 64], sizes = [2, 32], strides = [1, 1]} : vector<2x128xf32> to vector<2x32xf32>
    %111 = vector.extract_strided_slice %106 {offsets = [0, 96], sizes = [2, 32], strides = [1, 1]} : vector<2x128xf32> to vector<2x32xf32>
    %112 = arith.mulf %109, %78 : vector<2x32xf32>
    %113 = arith.mulf %108, %110 : vector<2x32xf32>
    %114 = arith.addf %112, %113 : vector<2x32xf32>
    %115 = math.tanh %114 : vector<2x32xf32>
    %116 = arith.mulf %111, %115 : vector<2x32xf32>
    %117 = arith.negf %101 : vector<2x128xf32>
    %118 = math.exp %117 : vector<2x128xf32>
    %cst_37 = arith.constant 1.000000e+00 : f32
    %119 = vector.broadcast %cst_37 : f32 to vector<2x128xf32>
    %120 = arith.addf %119, %118 : vector<2x128xf32>
    %121 = arith.divf %119, %120 : vector<2x128xf32>
    %122 = math.tanh %101 : vector<2x128xf32>
    %123 = vector.extract_strided_slice %121 {offsets = [0, 0], sizes = [2, 32], strides = [1, 1]} : vector<2x128xf32> to vector<2x32xf32>
    %124 = vector.extract_strided_slice %121 {offsets = [0, 32], sizes = [2, 32], strides = [1, 1]} : vector<2x128xf32> to vector<2x32xf32>
    %125 = vector.extract_strided_slice %122 {offsets = [0, 64], sizes = [2, 32], strides = [1, 1]} : vector<2x128xf32> to vector<2x32xf32>
    %126 = vector.extract_strided_slice %121 {offsets = [0, 96], sizes = [2, 32], strides = [1, 1]} : vector<2x128xf32> to vector<2x32xf32>
    %127 = arith.mulf %124, %93 : vector<2x32xf32>
    %128 = arith.mulf %123, %125 : vector<2x32xf32>
    %129 = arith.addf %127, %128 : vector<2x32xf32>
    %130 = math.tanh %129 : vector<2x32xf32>
    %131 = arith.mulf %126, %130 : vector<2x32xf32>
    %132 = vector.extract_strided_slice %14 {offsets = [6, 0], sizes = [2, 128], strides = [1, 1]} : vector<16x128xf32> to vector<2x128xf32>
    %cst_38 = arith.constant dense<0.000000e+00> : vector<2x128xf32>
    %133 = tpu.matmul %116, %18, %cst_38 {dimension_numbers = #tpu.dot_dimension_numbers<[1], [0], [0], [1], [0, 0, 1, 1], [], []>} : vector<2x32xf32>, vector<32x128xf32>, vector<2x128xf32> -> vector<2x128xf32>
    %134 = arith.addf %132, %133 : vector<2x128xf32>
    %135 = vector.extract_strided_slice %17 {offsets = [8, 0], sizes = [2, 128], strides = [1, 1]} : vector<16x128xf32> to vector<2x128xf32>
    %cst_39 = arith.constant dense<0.000000e+00> : vector<2x128xf32>
    %136 = tpu.matmul %131, %19, %cst_39 {dimension_numbers = #tpu.dot_dimension_numbers<[1], [0], [0], [1], [0, 0, 1, 1], [], []>} : vector<2x32xf32>, vector<32x128xf32>, vector<2x128xf32> -> vector<2x128xf32>
    %137 = arith.addf %135, %136 : vector<2x128xf32>
    %138 = arith.negf %134 : vector<2x128xf32>
    %139 = math.exp %138 : vector<2x128xf32>
    %cst_40 = arith.constant 1.000000e+00 : f32
    %140 = vector.broadcast %cst_40 : f32 to vector<2x128xf32>
    %141 = arith.addf %140, %139 : vector<2x128xf32>
    %142 = arith.divf %140, %141 : vector<2x128xf32>
    %143 = math.tanh %134 : vector<2x128xf32>
    %144 = vector.extract_strided_slice %142 {offsets = [0, 0], sizes = [2, 32], strides = [1, 1]} : vector<2x128xf32> to vector<2x32xf32>
    %145 = vector.extract_strided_slice %142 {offsets = [0, 32], sizes = [2, 32], strides = [1, 1]} : vector<2x128xf32> to vector<2x32xf32>
    %146 = vector.extract_strided_slice %143 {offsets = [0, 64], sizes = [2, 32], strides = [1, 1]} : vector<2x128xf32> to vector<2x32xf32>
    %147 = vector.extract_strided_slice %142 {offsets = [0, 96], sizes = [2, 32], strides = [1, 1]} : vector<2x128xf32> to vector<2x32xf32>
    %148 = arith.mulf %145, %114 : vector<2x32xf32>
    %149 = arith.mulf %144, %146 : vector<2x32xf32>
    %150 = arith.addf %148, %149 : vector<2x32xf32>
    %151 = math.tanh %150 : vector<2x32xf32>
    %152 = arith.mulf %147, %151 : vector<2x32xf32>
    %153 = arith.negf %137 : vector<2x128xf32>
    %154 = math.exp %153 : vector<2x128xf32>
    %cst_41 = arith.constant 1.000000e+00 : f32
    %155 = vector.broadcast %cst_41 : f32 to vector<2x128xf32>
    %156 = arith.addf %155, %154 : vector<2x128xf32>
    %157 = arith.divf %155, %156 : vector<2x128xf32>
    %158 = math.tanh %137 : vector<2x128xf32>
    %159 = vector.extract_strided_slice %157 {offsets = [0, 0], sizes = [2, 32], strides = [1, 1]} : vector<2x128xf32> to vector<2x32xf32>
    %160 = vector.extract_strided_slice %157 {offsets = [0, 32], sizes = [2, 32], strides = [1, 1]} : vector<2x128xf32> to vector<2x32xf32>
    %161 = vector.extract_strided_slice %158 {offsets = [0, 64], sizes = [2, 32], strides = [1, 1]} : vector<2x128xf32> to vector<2x32xf32>
    %162 = vector.extract_strided_slice %157 {offsets = [0, 96], sizes = [2, 32], strides = [1, 1]} : vector<2x128xf32> to vector<2x32xf32>
    %163 = arith.mulf %160, %129 : vector<2x32xf32>
    %164 = arith.mulf %159, %161 : vector<2x32xf32>
    %165 = arith.addf %163, %164 : vector<2x32xf32>
    %166 = math.tanh %165 : vector<2x32xf32>
    %167 = arith.mulf %162, %166 : vector<2x32xf32>
    %168 = vector.extract_strided_slice %14 {offsets = [8, 0], sizes = [2, 128], strides = [1, 1]} : vector<16x128xf32> to vector<2x128xf32>
    %cst_42 = arith.constant dense<0.000000e+00> : vector<2x128xf32>
    %169 = tpu.matmul %152, %18, %cst_42 {dimension_numbers = #tpu.dot_dimension_numbers<[1], [0], [0], [1], [0, 0, 1, 1], [], []>} : vector<2x32xf32>, vector<32x128xf32>, vector<2x128xf32> -> vector<2x128xf32>
    %170 = arith.addf %168, %169 : vector<2x128xf32>
    %171 = vector.extract_strided_slice %17 {offsets = [6, 0], sizes = [2, 128], strides = [1, 1]} : vector<16x128xf32> to vector<2x128xf32>
    %cst_43 = arith.constant dense<0.000000e+00> : vector<2x128xf32>
    %172 = tpu.matmul %167, %19, %cst_43 {dimension_numbers = #tpu.dot_dimension_numbers<[1], [0], [0], [1], [0, 0, 1, 1], [], []>} : vector<2x32xf32>, vector<32x128xf32>, vector<2x128xf32> -> vector<2x128xf32>
    %173 = arith.addf %171, %172 : vector<2x128xf32>
    %174 = arith.negf %170 : vector<2x128xf32>
    %175 = math.exp %174 : vector<2x128xf32>
    %cst_44 = arith.constant 1.000000e+00 : f32
    %176 = vector.broadcast %cst_44 : f32 to vector<2x128xf32>
    %177 = arith.addf %176, %175 : vector<2x128xf32>
    %178 = arith.divf %176, %177 : vector<2x128xf32>
    %179 = math.tanh %170 : vector<2x128xf32>
    %180 = vector.extract_strided_slice %178 {offsets = [0, 0], sizes = [2, 32], strides = [1, 1]} : vector<2x128xf32> to vector<2x32xf32>
    %181 = vector.extract_strided_slice %178 {offsets = [0, 32], sizes = [2, 32], strides = [1, 1]} : vector<2x128xf32> to vector<2x32xf32>
    %182 = vector.extract_strided_slice %179 {offsets = [0, 64], sizes = [2, 32], strides = [1, 1]} : vector<2x128xf32> to vector<2x32xf32>
    %183 = vector.extract_strided_slice %178 {offsets = [0, 96], sizes = [2, 32], strides = [1, 1]} : vector<2x128xf32> to vector<2x32xf32>
    %184 = arith.mulf %181, %150 : vector<2x32xf32>
    %185 = arith.mulf %180, %182 : vector<2x32xf32>
    %186 = arith.addf %184, %185 : vector<2x32xf32>
    %187 = math.tanh %186 : vector<2x32xf32>
    %188 = arith.mulf %183, %187 : vector<2x32xf32>
    %189 = arith.negf %173 : vector<2x128xf32>
    %190 = math.exp %189 : vector<2x128xf32>
    %cst_45 = arith.constant 1.000000e+00 : f32
    %191 = vector.broadcast %cst_45 : f32 to vector<2x128xf32>
    %192 = arith.addf %191, %190 : vector<2x128xf32>
    %193 = arith.divf %191, %192 : vector<2x128xf32>
    %194 = math.tanh %173 : vector<2x128xf32>
    %195 = vector.extract_strided_slice %193 {offsets = [0, 0], sizes = [2, 32], strides = [1, 1]} : vector<2x128xf32> to vector<2x32xf32>
    %196 = vector.extract_strided_slice %193 {offsets = [0, 32], sizes = [2, 32], strides = [1, 1]} : vector<2x128xf32> to vector<2x32xf32>
    %197 = vector.extract_strided_slice %194 {offsets = [0, 64], sizes = [2, 32], strides = [1, 1]} : vector<2x128xf32> to vector<2x32xf32>
    %198 = vector.extract_strided_slice %193 {offsets = [0, 96], sizes = [2, 32], strides = [1, 1]} : vector<2x128xf32> to vector<2x32xf32>
    %199 = arith.mulf %196, %165 : vector<2x32xf32>
    %200 = arith.mulf %195, %197 : vector<2x32xf32>
    %201 = arith.addf %199, %200 : vector<2x32xf32>
    %202 = math.tanh %201 : vector<2x32xf32>
    %203 = arith.mulf %198, %202 : vector<2x32xf32>
    %204 = vector.extract_strided_slice %14 {offsets = [10, 0], sizes = [2, 128], strides = [1, 1]} : vector<16x128xf32> to vector<2x128xf32>
    %cst_46 = arith.constant dense<0.000000e+00> : vector<2x128xf32>
    %205 = tpu.matmul %188, %18, %cst_46 {dimension_numbers = #tpu.dot_dimension_numbers<[1], [0], [0], [1], [0, 0, 1, 1], [], []>} : vector<2x32xf32>, vector<32x128xf32>, vector<2x128xf32> -> vector<2x128xf32>
    %206 = arith.addf %204, %205 : vector<2x128xf32>
    %207 = vector.extract_strided_slice %17 {offsets = [4, 0], sizes = [2, 128], strides = [1, 1]} : vector<16x128xf32> to vector<2x128xf32>
    %cst_47 = arith.constant dense<0.000000e+00> : vector<2x128xf32>
    %208 = tpu.matmul %203, %19, %cst_47 {dimension_numbers = #tpu.dot_dimension_numbers<[1], [0], [0], [1], [0, 0, 1, 1], [], []>} : vector<2x32xf32>, vector<32x128xf32>, vector<2x128xf32> -> vector<2x128xf32>
    %209 = arith.addf %207, %208 : vector<2x128xf32>
    %210 = arith.negf %206 : vector<2x128xf32>
    %211 = math.exp %210 : vector<2x128xf32>
    %cst_48 = arith.constant 1.000000e+00 : f32
    %212 = vector.broadcast %cst_48 : f32 to vector<2x128xf32>
    %213 = arith.addf %212, %211 : vector<2x128xf32>
    %214 = arith.divf %212, %213 : vector<2x128xf32>
    %215 = math.tanh %206 : vector<2x128xf32>
    %216 = vector.extract_strided_slice %214 {offsets = [0, 0], sizes = [2, 32], strides = [1, 1]} : vector<2x128xf32> to vector<2x32xf32>
    %217 = vector.extract_strided_slice %214 {offsets = [0, 32], sizes = [2, 32], strides = [1, 1]} : vector<2x128xf32> to vector<2x32xf32>
    %218 = vector.extract_strided_slice %215 {offsets = [0, 64], sizes = [2, 32], strides = [1, 1]} : vector<2x128xf32> to vector<2x32xf32>
    %219 = vector.extract_strided_slice %214 {offsets = [0, 96], sizes = [2, 32], strides = [1, 1]} : vector<2x128xf32> to vector<2x32xf32>
    %220 = arith.mulf %217, %186 : vector<2x32xf32>
    %221 = arith.mulf %216, %218 : vector<2x32xf32>
    %222 = arith.addf %220, %221 : vector<2x32xf32>
    %223 = math.tanh %222 : vector<2x32xf32>
    %224 = arith.mulf %219, %223 : vector<2x32xf32>
    %225 = arith.negf %209 : vector<2x128xf32>
    %226 = math.exp %225 : vector<2x128xf32>
    %cst_49 = arith.constant 1.000000e+00 : f32
    %227 = vector.broadcast %cst_49 : f32 to vector<2x128xf32>
    %228 = arith.addf %227, %226 : vector<2x128xf32>
    %229 = arith.divf %227, %228 : vector<2x128xf32>
    %230 = math.tanh %209 : vector<2x128xf32>
    %231 = vector.extract_strided_slice %229 {offsets = [0, 0], sizes = [2, 32], strides = [1, 1]} : vector<2x128xf32> to vector<2x32xf32>
    %232 = vector.extract_strided_slice %229 {offsets = [0, 32], sizes = [2, 32], strides = [1, 1]} : vector<2x128xf32> to vector<2x32xf32>
    %233 = vector.extract_strided_slice %230 {offsets = [0, 64], sizes = [2, 32], strides = [1, 1]} : vector<2x128xf32> to vector<2x32xf32>
    %234 = vector.extract_strided_slice %229 {offsets = [0, 96], sizes = [2, 32], strides = [1, 1]} : vector<2x128xf32> to vector<2x32xf32>
    %235 = arith.mulf %232, %201 : vector<2x32xf32>
    %236 = arith.mulf %231, %233 : vector<2x32xf32>
    %237 = arith.addf %235, %236 : vector<2x32xf32>
    %238 = math.tanh %237 : vector<2x32xf32>
    %239 = arith.mulf %234, %238 : vector<2x32xf32>
    %240 = vector.extract_strided_slice %14 {offsets = [12, 0], sizes = [2, 128], strides = [1, 1]} : vector<16x128xf32> to vector<2x128xf32>
    %cst_50 = arith.constant dense<0.000000e+00> : vector<2x128xf32>
    %241 = tpu.matmul %224, %18, %cst_50 {dimension_numbers = #tpu.dot_dimension_numbers<[1], [0], [0], [1], [0, 0, 1, 1], [], []>} : vector<2x32xf32>, vector<32x128xf32>, vector<2x128xf32> -> vector<2x128xf32>
    %242 = arith.addf %240, %241 : vector<2x128xf32>
    %243 = vector.extract_strided_slice %17 {offsets = [2, 0], sizes = [2, 128], strides = [1, 1]} : vector<16x128xf32> to vector<2x128xf32>
    %cst_51 = arith.constant dense<0.000000e+00> : vector<2x128xf32>
    %244 = tpu.matmul %239, %19, %cst_51 {dimension_numbers = #tpu.dot_dimension_numbers<[1], [0], [0], [1], [0, 0, 1, 1], [], []>} : vector<2x32xf32>, vector<32x128xf32>, vector<2x128xf32> -> vector<2x128xf32>
    %245 = arith.addf %243, %244 : vector<2x128xf32>
    %246 = arith.negf %242 : vector<2x128xf32>
    %247 = math.exp %246 : vector<2x128xf32>
    %cst_52 = arith.constant 1.000000e+00 : f32
    %248 = vector.broadcast %cst_52 : f32 to vector<2x128xf32>
    %249 = arith.addf %248, %247 : vector<2x128xf32>
    %250 = arith.divf %248, %249 : vector<2x128xf32>
    %251 = math.tanh %242 : vector<2x128xf32>
    %252 = vector.extract_strided_slice %250 {offsets = [0, 0], sizes = [2, 32], strides = [1, 1]} : vector<2x128xf32> to vector<2x32xf32>
    %253 = vector.extract_strided_slice %250 {offsets = [0, 32], sizes = [2, 32], strides = [1, 1]} : vector<2x128xf32> to vector<2x32xf32>
    %254 = vector.extract_strided_slice %251 {offsets = [0, 64], sizes = [2, 32], strides = [1, 1]} : vector<2x128xf32> to vector<2x32xf32>
    %255 = vector.extract_strided_slice %250 {offsets = [0, 96], sizes = [2, 32], strides = [1, 1]} : vector<2x128xf32> to vector<2x32xf32>
    %256 = arith.mulf %253, %222 : vector<2x32xf32>
    %257 = arith.mulf %252, %254 : vector<2x32xf32>
    %258 = arith.addf %256, %257 : vector<2x32xf32>
    %259 = math.tanh %258 : vector<2x32xf32>
    %260 = arith.mulf %255, %259 : vector<2x32xf32>
    %261 = arith.negf %245 : vector<2x128xf32>
    %262 = math.exp %261 : vector<2x128xf32>
    %cst_53 = arith.constant 1.000000e+00 : f32
    %263 = vector.broadcast %cst_53 : f32 to vector<2x128xf32>
    %264 = arith.addf %263, %262 : vector<2x128xf32>
    %265 = arith.divf %263, %264 : vector<2x128xf32>
    %266 = math.tanh %245 : vector<2x128xf32>
    %267 = vector.extract_strided_slice %265 {offsets = [0, 0], sizes = [2, 32], strides = [1, 1]} : vector<2x128xf32> to vector<2x32xf32>
    %268 = vector.extract_strided_slice %265 {offsets = [0, 32], sizes = [2, 32], strides = [1, 1]} : vector<2x128xf32> to vector<2x32xf32>
    %269 = vector.extract_strided_slice %266 {offsets = [0, 64], sizes = [2, 32], strides = [1, 1]} : vector<2x128xf32> to vector<2x32xf32>
    %270 = vector.extract_strided_slice %265 {offsets = [0, 96], sizes = [2, 32], strides = [1, 1]} : vector<2x128xf32> to vector<2x32xf32>
    %271 = arith.mulf %268, %237 : vector<2x32xf32>
    %272 = arith.mulf %267, %269 : vector<2x32xf32>
    %273 = arith.addf %271, %272 : vector<2x32xf32>
    %274 = math.tanh %273 : vector<2x32xf32>
    %275 = arith.mulf %270, %274 : vector<2x32xf32>
    %276 = vector.extract_strided_slice %14 {offsets = [14, 0], sizes = [2, 128], strides = [1, 1]} : vector<16x128xf32> to vector<2x128xf32>
    %cst_54 = arith.constant dense<0.000000e+00> : vector<2x128xf32>
    %277 = tpu.matmul %260, %18, %cst_54 {dimension_numbers = #tpu.dot_dimension_numbers<[1], [0], [0], [1], [0, 0, 1, 1], [], []>} : vector<2x32xf32>, vector<32x128xf32>, vector<2x128xf32> -> vector<2x128xf32>
    %278 = arith.addf %276, %277 : vector<2x128xf32>
    %279 = vector.extract_strided_slice %17 {offsets = [0, 0], sizes = [2, 128], strides = [1, 1]} : vector<16x128xf32> to vector<2x128xf32>
    %cst_55 = arith.constant dense<0.000000e+00> : vector<2x128xf32>
    %280 = tpu.matmul %275, %19, %cst_55 {dimension_numbers = #tpu.dot_dimension_numbers<[1], [0], [0], [1], [0, 0, 1, 1], [], []>} : vector<2x32xf32>, vector<32x128xf32>, vector<2x128xf32> -> vector<2x128xf32>
    %281 = arith.addf %279, %280 : vector<2x128xf32>
    %282 = arith.negf %278 : vector<2x128xf32>
    %283 = math.exp %282 : vector<2x128xf32>
    %cst_56 = arith.constant 1.000000e+00 : f32
    %284 = vector.broadcast %cst_56 : f32 to vector<2x128xf32>
    %285 = arith.addf %284, %283 : vector<2x128xf32>
    %286 = arith.divf %284, %285 : vector<2x128xf32>
    %287 = math.tanh %278 : vector<2x128xf32>
    %288 = vector.extract_strided_slice %286 {offsets = [0, 0], sizes = [2, 32], strides = [1, 1]} : vector<2x128xf32> to vector<2x32xf32>
    %289 = vector.extract_strided_slice %286 {offsets = [0, 32], sizes = [2, 32], strides = [1, 1]} : vector<2x128xf32> to vector<2x32xf32>
    %290 = vector.extract_strided_slice %287 {offsets = [0, 64], sizes = [2, 32], strides = [1, 1]} : vector<2x128xf32> to vector<2x32xf32>
    %291 = vector.extract_strided_slice %286 {offsets = [0, 96], sizes = [2, 32], strides = [1, 1]} : vector<2x128xf32> to vector<2x32xf32>
    %292 = arith.mulf %289, %258 : vector<2x32xf32>
    %293 = arith.mulf %288, %290 : vector<2x32xf32>
    %294 = arith.addf %292, %293 : vector<2x32xf32>
    %295 = math.tanh %294 : vector<2x32xf32>
    %296 = arith.mulf %291, %295 : vector<2x32xf32>
    %297 = arith.negf %281 : vector<2x128xf32>
    %298 = math.exp %297 : vector<2x128xf32>
    %cst_57 = arith.constant 1.000000e+00 : f32
    %299 = vector.broadcast %cst_57 : f32 to vector<2x128xf32>
    %300 = arith.addf %299, %298 : vector<2x128xf32>
    %301 = arith.divf %299, %300 : vector<2x128xf32>
    %302 = math.tanh %281 : vector<2x128xf32>
    %303 = vector.extract_strided_slice %301 {offsets = [0, 0], sizes = [2, 32], strides = [1, 1]} : vector<2x128xf32> to vector<2x32xf32>
    %304 = vector.extract_strided_slice %301 {offsets = [0, 32], sizes = [2, 32], strides = [1, 1]} : vector<2x128xf32> to vector<2x32xf32>
    %305 = vector.extract_strided_slice %302 {offsets = [0, 64], sizes = [2, 32], strides = [1, 1]} : vector<2x128xf32> to vector<2x32xf32>
    %306 = vector.extract_strided_slice %301 {offsets = [0, 96], sizes = [2, 32], strides = [1, 1]} : vector<2x128xf32> to vector<2x32xf32>
    %307 = arith.mulf %304, %273 : vector<2x32xf32>
    %308 = arith.mulf %303, %305 : vector<2x32xf32>
    %309 = arith.addf %307, %308 : vector<2x32xf32>
    %310 = math.tanh %309 : vector<2x32xf32>
    %311 = arith.mulf %306, %310 : vector<2x32xf32>
    %c0_58 = arith.constant 0 : index
    %c0_59 = arith.constant 0 : index
    %312 = vector.load %arg10[%c0_58, %c0_59] : memref<128x2xf32, #tpu.memory_space<vmem>>, vector<128x2xf32>
    %313 = vector.extract_strided_slice %312 {offsets = [0, 0], sizes = [32, 2], strides = [1, 1]} : vector<128x2xf32> to vector<32x2xf32>
    %cst_60 = arith.constant dense<0.000000e+00> : vector<2x2xf32>
    %314 = tpu.matmul %44, %313, %cst_60 {dimension_numbers = #tpu.dot_dimension_numbers<[1], [0], [0], [1], [0, 0, 1, 1], [], []>} : vector<2x32xf32>, vector<32x2xf32>, vector<2x2xf32> -> vector<2x2xf32>
    %315 = vector.extract_strided_slice %312 {offsets = [32, 0], sizes = [32, 2], strides = [1, 1]} : vector<128x2xf32> to vector<32x2xf32>
    %cst_61 = arith.constant dense<0.000000e+00> : vector<2x2xf32>
    %316 = tpu.matmul %311, %315, %cst_61 {dimension_numbers = #tpu.dot_dimension_numbers<[1], [0], [0], [1], [0, 0, 1, 1], [], []>} : vector<2x32xf32>, vector<32x2xf32>, vector<2x2xf32> -> vector<2x2xf32>
    %317 = arith.addf %314, %316 : vector<2x2xf32>
    %318 = vector.extract_strided_slice %312 {offsets = [64, 0], sizes = [32, 2], strides = [1, 1]} : vector<128x2xf32> to vector<32x2xf32>
    %cst_62 = arith.constant dense<0.000000e+00> : vector<2x2xf32>
    %319 = tpu.matmul %296, %318, %cst_62 {dimension_numbers = #tpu.dot_dimension_numbers<[1], [0], [0], [1], [0, 0, 1, 1], [], []>} : vector<2x32xf32>, vector<32x2xf32>, vector<2x2xf32> -> vector<2x2xf32>
    %320 = arith.addf %317, %319 : vector<2x2xf32>
    %321 = vector.extract_strided_slice %312 {offsets = [96, 0], sizes = [32, 2], strides = [1, 1]} : vector<128x2xf32> to vector<32x2xf32>
    %cst_63 = arith.constant dense<0.000000e+00> : vector<2x2xf32>
    %322 = tpu.matmul %59, %321, %cst_63 {dimension_numbers = #tpu.dot_dimension_numbers<[1], [0], [0], [1], [0, 0, 1, 1], [], []>} : vector<2x32xf32>, vector<32x2xf32>, vector<2x2xf32> -> vector<2x2xf32>
    %323 = arith.addf %320, %322 : vector<2x2xf32>
    %c0_64 = arith.constant 0 : index
    %c0_65 = arith.constant 0 : index
    %324 = vector.load %arg11[%c0_64, %c0_65] : memref<1x2xf32, #tpu.memory_space<vmem>>, vector<1x2xf32>
    %325 = vector.broadcast %324 : vector<1x2xf32> to vector<2x2xf32>
    %326 = arith.addf %323, %325 : vector<2x2xf32>
    %c0_66 = arith.constant 0 : index
    %c0_67 = arith.constant 0 : index
    %327 = vector.load %arg12[%c0_66, %c0_67] : memref<2x2xf32, #tpu.memory_space<vmem>>, vector<2x2xf32>
    tpu.vector_store %arg12[%c0_66, %c0_67], %326 {strides = array<i32>} : memref<2x2xf32, #tpu.memory_space<vmem>>, vector<2x2xf32>,
    return
  }
}

module attributes {stable_mosaic.version = 11 : i64} {
  func.func @_bilstm_kernel(%arg0: memref<16x32xf32, #tpu.memory_space<vmem>>, %arg1: memref<32x128xf32, #tpu.memory_space<vmem>>, %arg2: memref<32x128xf32, #tpu.memory_space<vmem>>, %arg3: memref<1x128xf32, #tpu.memory_space<vmem>>, %arg4: memref<32x128xf32, #tpu.memory_space<vmem>>, %arg5: memref<32x128xf32, #tpu.memory_space<vmem>>, %arg6: memref<1x128xf32, #tpu.memory_space<vmem>>, %arg7: memref<8x2x32xf32, #tpu.memory_space<vmem>>, %arg8: memref<8x2x32xf32, #tpu.memory_space<vmem>>) attributes {dimension_semantics = [], scalar_prefetch = 0 : i64, scratch_operands = 0 : i64, tpu.core_type = #tpu.core_type<tc>} {
    %c0 = arith.constant 0 : index
    %c0_0 = arith.constant 0 : index
    %0 = vector.load %arg3[%c0, %c0_0] : memref<1x128xf32, #tpu.memory_space<vmem>>, vector<1x128xf32>
    %c0_1 = arith.constant 0 : index
    %c0_2 = arith.constant 0 : index
    %1 = vector.load %arg6[%c0_1, %c0_2] : memref<1x128xf32, #tpu.memory_space<vmem>>, vector<1x128xf32>
    %c0_3 = arith.constant 0 : index
    %c0_4 = arith.constant 0 : index
    %2 = vector.load %arg0[%c0_3, %c0_4] : memref<16x32xf32, #tpu.memory_space<vmem>>, vector<16x32xf32>
    %c0_5 = arith.constant 0 : index
    %c0_6 = arith.constant 0 : index
    %3 = vector.load %arg1[%c0_5, %c0_6] : memref<32x128xf32, #tpu.memory_space<vmem>>, vector<32x128xf32>
    %cst = arith.constant dense<0.000000e+00> : vector<16x128xf32>
    %4 = tpu.matmul %2, %3, %cst {dimension_numbers = #tpu.dot_dimension_numbers<[1], [0], [0], [1], [0, 0, 1, 1], [], []>} : vector<16x32xf32>, vector<32x128xf32>, vector<16x128xf32> -> vector<16x128xf32>
    %5 = vector.broadcast %0 : vector<1x128xf32> to vector<16x128xf32>
    %6 = arith.addf %5, %4 : vector<16x128xf32>
    %c0_7 = arith.constant 0 : index
    %c0_8 = arith.constant 0 : index
    %7 = vector.load %arg4[%c0_7, %c0_8] : memref<32x128xf32, #tpu.memory_space<vmem>>, vector<32x128xf32>
    %cst_9 = arith.constant dense<0.000000e+00> : vector<16x128xf32>
    %8 = tpu.matmul %2, %7, %cst_9 {dimension_numbers = #tpu.dot_dimension_numbers<[1], [0], [0], [1], [0, 0, 1, 1], [], []>} : vector<16x32xf32>, vector<32x128xf32>, vector<16x128xf32> -> vector<16x128xf32>
    %9 = vector.broadcast %1 : vector<1x128xf32> to vector<16x128xf32>
    %10 = arith.addf %9, %8 : vector<16x128xf32>
    %c0_10 = arith.constant 0 : index
    %c0_11 = arith.constant 0 : index
    %11 = vector.load %arg2[%c0_10, %c0_11] : memref<32x128xf32, #tpu.memory_space<vmem>>, vector<32x128xf32>
    %c0_12 = arith.constant 0 : index
    %c0_13 = arith.constant 0 : index
    %12 = vector.load %arg5[%c0_12, %c0_13] : memref<32x128xf32, #tpu.memory_space<vmem>>, vector<32x128xf32>
    %cst_14 = arith.constant 0.000000e+00 : f32
    %13 = vector.broadcast %cst_14 : f32 to vector<2x32xf32>
    %cst_15 = arith.constant 0.000000e+00 : f32
    %14 = vector.broadcast %cst_15 : f32 to vector<2x32xf32>
    %cst_16 = arith.constant 0.000000e+00 : f32
    %15 = vector.broadcast %cst_16 : f32 to vector<2x32xf32>
    %cst_17 = arith.constant 0.000000e+00 : f32
    %16 = vector.broadcast %cst_17 : f32 to vector<2x32xf32>
    %17 = vector.extract_strided_slice %6 {offsets = [0, 0], sizes = [2, 128], strides = [1, 1]} : vector<16x128xf32> to vector<2x128xf32>
    %cst_18 = arith.constant dense<0.000000e+00> : vector<2x128xf32>
    %18 = tpu.matmul %13, %11, %cst_18 {dimension_numbers = #tpu.dot_dimension_numbers<[1], [0], [0], [1], [0, 0, 1, 1], [], []>} : vector<2x32xf32>, vector<32x128xf32>, vector<2x128xf32> -> vector<2x128xf32>
    %19 = arith.addf %17, %18 : vector<2x128xf32>
    %20 = vector.extract_strided_slice %10 {offsets = [14, 0], sizes = [2, 128], strides = [1, 1]} : vector<16x128xf32> to vector<2x128xf32>
    %cst_19 = arith.constant dense<0.000000e+00> : vector<2x128xf32>
    %21 = tpu.matmul %15, %12, %cst_19 {dimension_numbers = #tpu.dot_dimension_numbers<[1], [0], [0], [1], [0, 0, 1, 1], [], []>} : vector<2x32xf32>, vector<32x128xf32>, vector<2x128xf32> -> vector<2x128xf32>
    %22 = arith.addf %20, %21 : vector<2x128xf32>
    %23 = arith.negf %19 : vector<2x128xf32>
    %24 = math.exp %23 : vector<2x128xf32>
    %cst_20 = arith.constant 1.000000e+00 : f32
    %25 = vector.broadcast %cst_20 : f32 to vector<2x128xf32>
    %26 = arith.addf %25, %24 : vector<2x128xf32>
    %27 = arith.divf %25, %26 : vector<2x128xf32>
    %28 = math.tanh %19 : vector<2x128xf32>
    %29 = vector.extract_strided_slice %27 {offsets = [0, 0], sizes = [2, 32], strides = [1, 1]} : vector<2x128xf32> to vector<2x32xf32>
    %30 = vector.extract_strided_slice %27 {offsets = [0, 32], sizes = [2, 32], strides = [1, 1]} : vector<2x128xf32> to vector<2x32xf32>
    %31 = vector.extract_strided_slice %28 {offsets = [0, 64], sizes = [2, 32], strides = [1, 1]} : vector<2x128xf32> to vector<2x32xf32>
    %32 = vector.extract_strided_slice %27 {offsets = [0, 96], sizes = [2, 32], strides = [1, 1]} : vector<2x128xf32> to vector<2x32xf32>
    %33 = arith.mulf %30, %14 : vector<2x32xf32>
    %34 = arith.mulf %29, %31 : vector<2x32xf32>
    %35 = arith.addf %33, %34 : vector<2x32xf32>
    %36 = math.tanh %35 : vector<2x32xf32>
    %37 = arith.mulf %32, %36 : vector<2x32xf32>
    %38 = arith.negf %22 : vector<2x128xf32>
    %39 = math.exp %38 : vector<2x128xf32>
    %cst_21 = arith.constant 1.000000e+00 : f32
    %40 = vector.broadcast %cst_21 : f32 to vector<2x128xf32>
    %41 = arith.addf %40, %39 : vector<2x128xf32>
    %42 = arith.divf %40, %41 : vector<2x128xf32>
    %43 = math.tanh %22 : vector<2x128xf32>
    %44 = vector.extract_strided_slice %42 {offsets = [0, 0], sizes = [2, 32], strides = [1, 1]} : vector<2x128xf32> to vector<2x32xf32>
    %45 = vector.extract_strided_slice %42 {offsets = [0, 32], sizes = [2, 32], strides = [1, 1]} : vector<2x128xf32> to vector<2x32xf32>
    %46 = vector.extract_strided_slice %43 {offsets = [0, 64], sizes = [2, 32], strides = [1, 1]} : vector<2x128xf32> to vector<2x32xf32>
    %47 = vector.extract_strided_slice %42 {offsets = [0, 96], sizes = [2, 32], strides = [1, 1]} : vector<2x128xf32> to vector<2x32xf32>
    %48 = arith.mulf %45, %16 : vector<2x32xf32>
    %49 = arith.mulf %44, %46 : vector<2x32xf32>
    %50 = arith.addf %48, %49 : vector<2x32xf32>
    %51 = math.tanh %50 : vector<2x32xf32>
    %52 = arith.mulf %47, %51 : vector<2x32xf32>
    %c0_22 = arith.constant 0 : index
    %c0_23 = arith.constant 0 : index
    %c0_24 = arith.constant 0 : index
    %53 = vector.load %arg7[%c0_22, %c0_23, %c0_24] : memref<8x2x32xf32, #tpu.memory_space<vmem>>, vector<1x2x32xf32>
    %54 = vector.shape_cast %53 : vector<1x2x32xf32> to vector<2x32xf32>
    %55 = vector.shape_cast %37 : vector<2x32xf32> to vector<1x2x32xf32>
    tpu.vector_store %arg7[%c0_22, %c0_23, %c0_24], %55 {strides = array<i32>} : memref<8x2x32xf32, #tpu.memory_space<vmem>>, vector<1x2x32xf32>,
    %c7 = arith.constant 7 : index
    %c0_25 = arith.constant 0 : index
    %c0_26 = arith.constant 0 : index
    %56 = vector.load %arg8[%c7, %c0_25, %c0_26] : memref<8x2x32xf32, #tpu.memory_space<vmem>>, vector<1x2x32xf32>
    %57 = vector.shape_cast %56 : vector<1x2x32xf32> to vector<2x32xf32>
    %58 = vector.shape_cast %52 : vector<2x32xf32> to vector<1x2x32xf32>
    tpu.vector_store %arg8[%c7, %c0_25, %c0_26], %58 {strides = array<i32>} : memref<8x2x32xf32, #tpu.memory_space<vmem>>, vector<1x2x32xf32>,
    %59 = vector.extract_strided_slice %6 {offsets = [2, 0], sizes = [2, 128], strides = [1, 1]} : vector<16x128xf32> to vector<2x128xf32>
    %cst_27 = arith.constant dense<0.000000e+00> : vector<2x128xf32>
    %60 = tpu.matmul %37, %11, %cst_27 {dimension_numbers = #tpu.dot_dimension_numbers<[1], [0], [0], [1], [0, 0, 1, 1], [], []>} : vector<2x32xf32>, vector<32x128xf32>, vector<2x128xf32> -> vector<2x128xf32>
    %61 = arith.addf %59, %60 : vector<2x128xf32>
    %62 = vector.extract_strided_slice %10 {offsets = [12, 0], sizes = [2, 128], strides = [1, 1]} : vector<16x128xf32> to vector<2x128xf32>
    %cst_28 = arith.constant dense<0.000000e+00> : vector<2x128xf32>
    %63 = tpu.matmul %52, %12, %cst_28 {dimension_numbers = #tpu.dot_dimension_numbers<[1], [0], [0], [1], [0, 0, 1, 1], [], []>} : vector<2x32xf32>, vector<32x128xf32>, vector<2x128xf32> -> vector<2x128xf32>
    %64 = arith.addf %62, %63 : vector<2x128xf32>
    %65 = arith.negf %61 : vector<2x128xf32>
    %66 = math.exp %65 : vector<2x128xf32>
    %cst_29 = arith.constant 1.000000e+00 : f32
    %67 = vector.broadcast %cst_29 : f32 to vector<2x128xf32>
    %68 = arith.addf %67, %66 : vector<2x128xf32>
    %69 = arith.divf %67, %68 : vector<2x128xf32>
    %70 = math.tanh %61 : vector<2x128xf32>
    %71 = vector.extract_strided_slice %69 {offsets = [0, 0], sizes = [2, 32], strides = [1, 1]} : vector<2x128xf32> to vector<2x32xf32>
    %72 = vector.extract_strided_slice %69 {offsets = [0, 32], sizes = [2, 32], strides = [1, 1]} : vector<2x128xf32> to vector<2x32xf32>
    %73 = vector.extract_strided_slice %70 {offsets = [0, 64], sizes = [2, 32], strides = [1, 1]} : vector<2x128xf32> to vector<2x32xf32>
    %74 = vector.extract_strided_slice %69 {offsets = [0, 96], sizes = [2, 32], strides = [1, 1]} : vector<2x128xf32> to vector<2x32xf32>
    %75 = arith.mulf %72, %35 : vector<2x32xf32>
    %76 = arith.mulf %71, %73 : vector<2x32xf32>
    %77 = arith.addf %75, %76 : vector<2x32xf32>
    %78 = math.tanh %77 : vector<2x32xf32>
    %79 = arith.mulf %74, %78 : vector<2x32xf32>
    %80 = arith.negf %64 : vector<2x128xf32>
    %81 = math.exp %80 : vector<2x128xf32>
    %cst_30 = arith.constant 1.000000e+00 : f32
    %82 = vector.broadcast %cst_30 : f32 to vector<2x128xf32>
    %83 = arith.addf %82, %81 : vector<2x128xf32>
    %84 = arith.divf %82, %83 : vector<2x128xf32>
    %85 = math.tanh %64 : vector<2x128xf32>
    %86 = vector.extract_strided_slice %84 {offsets = [0, 0], sizes = [2, 32], strides = [1, 1]} : vector<2x128xf32> to vector<2x32xf32>
    %87 = vector.extract_strided_slice %84 {offsets = [0, 32], sizes = [2, 32], strides = [1, 1]} : vector<2x128xf32> to vector<2x32xf32>
    %88 = vector.extract_strided_slice %85 {offsets = [0, 64], sizes = [2, 32], strides = [1, 1]} : vector<2x128xf32> to vector<2x32xf32>
    %89 = vector.extract_strided_slice %84 {offsets = [0, 96], sizes = [2, 32], strides = [1, 1]} : vector<2x128xf32> to vector<2x32xf32>
    %90 = arith.mulf %87, %50 : vector<2x32xf32>
    %91 = arith.mulf %86, %88 : vector<2x32xf32>
    %92 = arith.addf %90, %91 : vector<2x32xf32>
    %93 = math.tanh %92 : vector<2x32xf32>
    %94 = arith.mulf %89, %93 : vector<2x32xf32>
    %c1 = arith.constant 1 : index
    %c0_31 = arith.constant 0 : index
    %c0_32 = arith.constant 0 : index
    %95 = vector.load %arg7[%c1, %c0_31, %c0_32] : memref<8x2x32xf32, #tpu.memory_space<vmem>>, vector<1x2x32xf32>
    %96 = vector.shape_cast %95 : vector<1x2x32xf32> to vector<2x32xf32>
    %97 = vector.shape_cast %79 : vector<2x32xf32> to vector<1x2x32xf32>
    tpu.vector_store %arg7[%c1, %c0_31, %c0_32], %97 {strides = array<i32>} : memref<8x2x32xf32, #tpu.memory_space<vmem>>, vector<1x2x32xf32>,
    %c6 = arith.constant 6 : index
    %c0_33 = arith.constant 0 : index
    %c0_34 = arith.constant 0 : index
    %98 = vector.load %arg8[%c6, %c0_33, %c0_34] : memref<8x2x32xf32, #tpu.memory_space<vmem>>, vector<1x2x32xf32>
    %99 = vector.shape_cast %98 : vector<1x2x32xf32> to vector<2x32xf32>
    %100 = vector.shape_cast %94 : vector<2x32xf32> to vector<1x2x32xf32>
    tpu.vector_store %arg8[%c6, %c0_33, %c0_34], %100 {strides = array<i32>} : memref<8x2x32xf32, #tpu.memory_space<vmem>>, vector<1x2x32xf32>,
    %101 = vector.extract_strided_slice %6 {offsets = [4, 0], sizes = [2, 128], strides = [1, 1]} : vector<16x128xf32> to vector<2x128xf32>
    %cst_35 = arith.constant dense<0.000000e+00> : vector<2x128xf32>
    %102 = tpu.matmul %79, %11, %cst_35 {dimension_numbers = #tpu.dot_dimension_numbers<[1], [0], [0], [1], [0, 0, 1, 1], [], []>} : vector<2x32xf32>, vector<32x128xf32>, vector<2x128xf32> -> vector<2x128xf32>
    %103 = arith.addf %101, %102 : vector<2x128xf32>
    %104 = vector.extract_strided_slice %10 {offsets = [10, 0], sizes = [2, 128], strides = [1, 1]} : vector<16x128xf32> to vector<2x128xf32>
    %cst_36 = arith.constant dense<0.000000e+00> : vector<2x128xf32>
    %105 = tpu.matmul %94, %12, %cst_36 {dimension_numbers = #tpu.dot_dimension_numbers<[1], [0], [0], [1], [0, 0, 1, 1], [], []>} : vector<2x32xf32>, vector<32x128xf32>, vector<2x128xf32> -> vector<2x128xf32>
    %106 = arith.addf %104, %105 : vector<2x128xf32>
    %107 = arith.negf %103 : vector<2x128xf32>
    %108 = math.exp %107 : vector<2x128xf32>
    %cst_37 = arith.constant 1.000000e+00 : f32
    %109 = vector.broadcast %cst_37 : f32 to vector<2x128xf32>
    %110 = arith.addf %109, %108 : vector<2x128xf32>
    %111 = arith.divf %109, %110 : vector<2x128xf32>
    %112 = math.tanh %103 : vector<2x128xf32>
    %113 = vector.extract_strided_slice %111 {offsets = [0, 0], sizes = [2, 32], strides = [1, 1]} : vector<2x128xf32> to vector<2x32xf32>
    %114 = vector.extract_strided_slice %111 {offsets = [0, 32], sizes = [2, 32], strides = [1, 1]} : vector<2x128xf32> to vector<2x32xf32>
    %115 = vector.extract_strided_slice %112 {offsets = [0, 64], sizes = [2, 32], strides = [1, 1]} : vector<2x128xf32> to vector<2x32xf32>
    %116 = vector.extract_strided_slice %111 {offsets = [0, 96], sizes = [2, 32], strides = [1, 1]} : vector<2x128xf32> to vector<2x32xf32>
    %117 = arith.mulf %114, %77 : vector<2x32xf32>
    %118 = arith.mulf %113, %115 : vector<2x32xf32>
    %119 = arith.addf %117, %118 : vector<2x32xf32>
    %120 = math.tanh %119 : vector<2x32xf32>
    %121 = arith.mulf %116, %120 : vector<2x32xf32>
    %122 = arith.negf %106 : vector<2x128xf32>
    %123 = math.exp %122 : vector<2x128xf32>
    %cst_38 = arith.constant 1.000000e+00 : f32
    %124 = vector.broadcast %cst_38 : f32 to vector<2x128xf32>
    %125 = arith.addf %124, %123 : vector<2x128xf32>
    %126 = arith.divf %124, %125 : vector<2x128xf32>
    %127 = math.tanh %106 : vector<2x128xf32>
    %128 = vector.extract_strided_slice %126 {offsets = [0, 0], sizes = [2, 32], strides = [1, 1]} : vector<2x128xf32> to vector<2x32xf32>
    %129 = vector.extract_strided_slice %126 {offsets = [0, 32], sizes = [2, 32], strides = [1, 1]} : vector<2x128xf32> to vector<2x32xf32>
    %130 = vector.extract_strided_slice %127 {offsets = [0, 64], sizes = [2, 32], strides = [1, 1]} : vector<2x128xf32> to vector<2x32xf32>
    %131 = vector.extract_strided_slice %126 {offsets = [0, 96], sizes = [2, 32], strides = [1, 1]} : vector<2x128xf32> to vector<2x32xf32>
    %132 = arith.mulf %129, %92 : vector<2x32xf32>
    %133 = arith.mulf %128, %130 : vector<2x32xf32>
    %134 = arith.addf %132, %133 : vector<2x32xf32>
    %135 = math.tanh %134 : vector<2x32xf32>
    %136 = arith.mulf %131, %135 : vector<2x32xf32>
    %c2 = arith.constant 2 : index
    %c0_39 = arith.constant 0 : index
    %c0_40 = arith.constant 0 : index
    %137 = vector.load %arg7[%c2, %c0_39, %c0_40] : memref<8x2x32xf32, #tpu.memory_space<vmem>>, vector<1x2x32xf32>
    %138 = vector.shape_cast %137 : vector<1x2x32xf32> to vector<2x32xf32>
    %139 = vector.shape_cast %121 : vector<2x32xf32> to vector<1x2x32xf32>
    tpu.vector_store %arg7[%c2, %c0_39, %c0_40], %139 {strides = array<i32>} : memref<8x2x32xf32, #tpu.memory_space<vmem>>, vector<1x2x32xf32>,
    %c5 = arith.constant 5 : index
    %c0_41 = arith.constant 0 : index
    %c0_42 = arith.constant 0 : index
    %140 = vector.load %arg8[%c5, %c0_41, %c0_42] : memref<8x2x32xf32, #tpu.memory_space<vmem>>, vector<1x2x32xf32>
    %141 = vector.shape_cast %140 : vector<1x2x32xf32> to vector<2x32xf32>
    %142 = vector.shape_cast %136 : vector<2x32xf32> to vector<1x2x32xf32>
    tpu.vector_store %arg8[%c5, %c0_41, %c0_42], %142 {strides = array<i32>} : memref<8x2x32xf32, #tpu.memory_space<vmem>>, vector<1x2x32xf32>,
    %143 = vector.extract_strided_slice %6 {offsets = [6, 0], sizes = [2, 128], strides = [1, 1]} : vector<16x128xf32> to vector<2x128xf32>
    %cst_43 = arith.constant dense<0.000000e+00> : vector<2x128xf32>
    %144 = tpu.matmul %121, %11, %cst_43 {dimension_numbers = #tpu.dot_dimension_numbers<[1], [0], [0], [1], [0, 0, 1, 1], [], []>} : vector<2x32xf32>, vector<32x128xf32>, vector<2x128xf32> -> vector<2x128xf32>
    %145 = arith.addf %143, %144 : vector<2x128xf32>
    %146 = vector.extract_strided_slice %10 {offsets = [8, 0], sizes = [2, 128], strides = [1, 1]} : vector<16x128xf32> to vector<2x128xf32>
    %cst_44 = arith.constant dense<0.000000e+00> : vector<2x128xf32>
    %147 = tpu.matmul %136, %12, %cst_44 {dimension_numbers = #tpu.dot_dimension_numbers<[1], [0], [0], [1], [0, 0, 1, 1], [], []>} : vector<2x32xf32>, vector<32x128xf32>, vector<2x128xf32> -> vector<2x128xf32>
    %148 = arith.addf %146, %147 : vector<2x128xf32>
    %149 = arith.negf %145 : vector<2x128xf32>
    %150 = math.exp %149 : vector<2x128xf32>
    %cst_45 = arith.constant 1.000000e+00 : f32
    %151 = vector.broadcast %cst_45 : f32 to vector<2x128xf32>
    %152 = arith.addf %151, %150 : vector<2x128xf32>
    %153 = arith.divf %151, %152 : vector<2x128xf32>
    %154 = math.tanh %145 : vector<2x128xf32>
    %155 = vector.extract_strided_slice %153 {offsets = [0, 0], sizes = [2, 32], strides = [1, 1]} : vector<2x128xf32> to vector<2x32xf32>
    %156 = vector.extract_strided_slice %153 {offsets = [0, 32], sizes = [2, 32], strides = [1, 1]} : vector<2x128xf32> to vector<2x32xf32>
    %157 = vector.extract_strided_slice %154 {offsets = [0, 64], sizes = [2, 32], strides = [1, 1]} : vector<2x128xf32> to vector<2x32xf32>
    %158 = vector.extract_strided_slice %153 {offsets = [0, 96], sizes = [2, 32], strides = [1, 1]} : vector<2x128xf32> to vector<2x32xf32>
    %159 = arith.mulf %156, %119 : vector<2x32xf32>
    %160 = arith.mulf %155, %157 : vector<2x32xf32>
    %161 = arith.addf %159, %160 : vector<2x32xf32>
    %162 = math.tanh %161 : vector<2x32xf32>
    %163 = arith.mulf %158, %162 : vector<2x32xf32>
    %164 = arith.negf %148 : vector<2x128xf32>
    %165 = math.exp %164 : vector<2x128xf32>
    %cst_46 = arith.constant 1.000000e+00 : f32
    %166 = vector.broadcast %cst_46 : f32 to vector<2x128xf32>
    %167 = arith.addf %166, %165 : vector<2x128xf32>
    %168 = arith.divf %166, %167 : vector<2x128xf32>
    %169 = math.tanh %148 : vector<2x128xf32>
    %170 = vector.extract_strided_slice %168 {offsets = [0, 0], sizes = [2, 32], strides = [1, 1]} : vector<2x128xf32> to vector<2x32xf32>
    %171 = vector.extract_strided_slice %168 {offsets = [0, 32], sizes = [2, 32], strides = [1, 1]} : vector<2x128xf32> to vector<2x32xf32>
    %172 = vector.extract_strided_slice %169 {offsets = [0, 64], sizes = [2, 32], strides = [1, 1]} : vector<2x128xf32> to vector<2x32xf32>
    %173 = vector.extract_strided_slice %168 {offsets = [0, 96], sizes = [2, 32], strides = [1, 1]} : vector<2x128xf32> to vector<2x32xf32>
    %174 = arith.mulf %171, %134 : vector<2x32xf32>
    %175 = arith.mulf %170, %172 : vector<2x32xf32>
    %176 = arith.addf %174, %175 : vector<2x32xf32>
    %177 = math.tanh %176 : vector<2x32xf32>
    %178 = arith.mulf %173, %177 : vector<2x32xf32>
    %c3 = arith.constant 3 : index
    %c0_47 = arith.constant 0 : index
    %c0_48 = arith.constant 0 : index
    %179 = vector.load %arg7[%c3, %c0_47, %c0_48] : memref<8x2x32xf32, #tpu.memory_space<vmem>>, vector<1x2x32xf32>
    %180 = vector.shape_cast %179 : vector<1x2x32xf32> to vector<2x32xf32>
    %181 = vector.shape_cast %163 : vector<2x32xf32> to vector<1x2x32xf32>
    tpu.vector_store %arg7[%c3, %c0_47, %c0_48], %181 {strides = array<i32>} : memref<8x2x32xf32, #tpu.memory_space<vmem>>, vector<1x2x32xf32>,
    %c4 = arith.constant 4 : index
    %c0_49 = arith.constant 0 : index
    %c0_50 = arith.constant 0 : index
    %182 = vector.load %arg8[%c4, %c0_49, %c0_50] : memref<8x2x32xf32, #tpu.memory_space<vmem>>, vector<1x2x32xf32>
    %183 = vector.shape_cast %182 : vector<1x2x32xf32> to vector<2x32xf32>
    %184 = vector.shape_cast %178 : vector<2x32xf32> to vector<1x2x32xf32>
    tpu.vector_store %arg8[%c4, %c0_49, %c0_50], %184 {strides = array<i32>} : memref<8x2x32xf32, #tpu.memory_space<vmem>>, vector<1x2x32xf32>,
    %185 = vector.extract_strided_slice %6 {offsets = [8, 0], sizes = [2, 128], strides = [1, 1]} : vector<16x128xf32> to vector<2x128xf32>
    %cst_51 = arith.constant dense<0.000000e+00> : vector<2x128xf32>
    %186 = tpu.matmul %163, %11, %cst_51 {dimension_numbers = #tpu.dot_dimension_numbers<[1], [0], [0], [1], [0, 0, 1, 1], [], []>} : vector<2x32xf32>, vector<32x128xf32>, vector<2x128xf32> -> vector<2x128xf32>
    %187 = arith.addf %185, %186 : vector<2x128xf32>
    %188 = vector.extract_strided_slice %10 {offsets = [6, 0], sizes = [2, 128], strides = [1, 1]} : vector<16x128xf32> to vector<2x128xf32>
    %cst_52 = arith.constant dense<0.000000e+00> : vector<2x128xf32>
    %189 = tpu.matmul %178, %12, %cst_52 {dimension_numbers = #tpu.dot_dimension_numbers<[1], [0], [0], [1], [0, 0, 1, 1], [], []>} : vector<2x32xf32>, vector<32x128xf32>, vector<2x128xf32> -> vector<2x128xf32>
    %190 = arith.addf %188, %189 : vector<2x128xf32>
    %191 = arith.negf %187 : vector<2x128xf32>
    %192 = math.exp %191 : vector<2x128xf32>
    %cst_53 = arith.constant 1.000000e+00 : f32
    %193 = vector.broadcast %cst_53 : f32 to vector<2x128xf32>
    %194 = arith.addf %193, %192 : vector<2x128xf32>
    %195 = arith.divf %193, %194 : vector<2x128xf32>
    %196 = math.tanh %187 : vector<2x128xf32>
    %197 = vector.extract_strided_slice %195 {offsets = [0, 0], sizes = [2, 32], strides = [1, 1]} : vector<2x128xf32> to vector<2x32xf32>
    %198 = vector.extract_strided_slice %195 {offsets = [0, 32], sizes = [2, 32], strides = [1, 1]} : vector<2x128xf32> to vector<2x32xf32>
    %199 = vector.extract_strided_slice %196 {offsets = [0, 64], sizes = [2, 32], strides = [1, 1]} : vector<2x128xf32> to vector<2x32xf32>
    %200 = vector.extract_strided_slice %195 {offsets = [0, 96], sizes = [2, 32], strides = [1, 1]} : vector<2x128xf32> to vector<2x32xf32>
    %201 = arith.mulf %198, %161 : vector<2x32xf32>
    %202 = arith.mulf %197, %199 : vector<2x32xf32>
    %203 = arith.addf %201, %202 : vector<2x32xf32>
    %204 = math.tanh %203 : vector<2x32xf32>
    %205 = arith.mulf %200, %204 : vector<2x32xf32>
    %206 = arith.negf %190 : vector<2x128xf32>
    %207 = math.exp %206 : vector<2x128xf32>
    %cst_54 = arith.constant 1.000000e+00 : f32
    %208 = vector.broadcast %cst_54 : f32 to vector<2x128xf32>
    %209 = arith.addf %208, %207 : vector<2x128xf32>
    %210 = arith.divf %208, %209 : vector<2x128xf32>
    %211 = math.tanh %190 : vector<2x128xf32>
    %212 = vector.extract_strided_slice %210 {offsets = [0, 0], sizes = [2, 32], strides = [1, 1]} : vector<2x128xf32> to vector<2x32xf32>
    %213 = vector.extract_strided_slice %210 {offsets = [0, 32], sizes = [2, 32], strides = [1, 1]} : vector<2x128xf32> to vector<2x32xf32>
    %214 = vector.extract_strided_slice %211 {offsets = [0, 64], sizes = [2, 32], strides = [1, 1]} : vector<2x128xf32> to vector<2x32xf32>
    %215 = vector.extract_strided_slice %210 {offsets = [0, 96], sizes = [2, 32], strides = [1, 1]} : vector<2x128xf32> to vector<2x32xf32>
    %216 = arith.mulf %213, %176 : vector<2x32xf32>
    %217 = arith.mulf %212, %214 : vector<2x32xf32>
    %218 = arith.addf %216, %217 : vector<2x32xf32>
    %219 = math.tanh %218 : vector<2x32xf32>
    %220 = arith.mulf %215, %219 : vector<2x32xf32>
    %c4_55 = arith.constant 4 : index
    %c0_56 = arith.constant 0 : index
    %c0_57 = arith.constant 0 : index
    %221 = vector.load %arg7[%c4_55, %c0_56, %c0_57] : memref<8x2x32xf32, #tpu.memory_space<vmem>>, vector<1x2x32xf32>
    %222 = vector.shape_cast %221 : vector<1x2x32xf32> to vector<2x32xf32>
    %223 = vector.shape_cast %205 : vector<2x32xf32> to vector<1x2x32xf32>
    tpu.vector_store %arg7[%c4_55, %c0_56, %c0_57], %223 {strides = array<i32>} : memref<8x2x32xf32, #tpu.memory_space<vmem>>, vector<1x2x32xf32>,
    %c3_58 = arith.constant 3 : index
    %c0_59 = arith.constant 0 : index
    %c0_60 = arith.constant 0 : index
    %224 = vector.load %arg8[%c3_58, %c0_59, %c0_60] : memref<8x2x32xf32, #tpu.memory_space<vmem>>, vector<1x2x32xf32>
    %225 = vector.shape_cast %224 : vector<1x2x32xf32> to vector<2x32xf32>
    %226 = vector.shape_cast %220 : vector<2x32xf32> to vector<1x2x32xf32>
    tpu.vector_store %arg8[%c3_58, %c0_59, %c0_60], %226 {strides = array<i32>} : memref<8x2x32xf32, #tpu.memory_space<vmem>>, vector<1x2x32xf32>,
    %227 = vector.extract_strided_slice %6 {offsets = [10, 0], sizes = [2, 128], strides = [1, 1]} : vector<16x128xf32> to vector<2x128xf32>
    %cst_61 = arith.constant dense<0.000000e+00> : vector<2x128xf32>
    %228 = tpu.matmul %205, %11, %cst_61 {dimension_numbers = #tpu.dot_dimension_numbers<[1], [0], [0], [1], [0, 0, 1, 1], [], []>} : vector<2x32xf32>, vector<32x128xf32>, vector<2x128xf32> -> vector<2x128xf32>
    %229 = arith.addf %227, %228 : vector<2x128xf32>
    %230 = vector.extract_strided_slice %10 {offsets = [4, 0], sizes = [2, 128], strides = [1, 1]} : vector<16x128xf32> to vector<2x128xf32>
    %cst_62 = arith.constant dense<0.000000e+00> : vector<2x128xf32>
    %231 = tpu.matmul %220, %12, %cst_62 {dimension_numbers = #tpu.dot_dimension_numbers<[1], [0], [0], [1], [0, 0, 1, 1], [], []>} : vector<2x32xf32>, vector<32x128xf32>, vector<2x128xf32> -> vector<2x128xf32>
    %232 = arith.addf %230, %231 : vector<2x128xf32>
    %233 = arith.negf %229 : vector<2x128xf32>
    %234 = math.exp %233 : vector<2x128xf32>
    %cst_63 = arith.constant 1.000000e+00 : f32
    %235 = vector.broadcast %cst_63 : f32 to vector<2x128xf32>
    %236 = arith.addf %235, %234 : vector<2x128xf32>
    %237 = arith.divf %235, %236 : vector<2x128xf32>
    %238 = math.tanh %229 : vector<2x128xf32>
    %239 = vector.extract_strided_slice %237 {offsets = [0, 0], sizes = [2, 32], strides = [1, 1]} : vector<2x128xf32> to vector<2x32xf32>
    %240 = vector.extract_strided_slice %237 {offsets = [0, 32], sizes = [2, 32], strides = [1, 1]} : vector<2x128xf32> to vector<2x32xf32>
    %241 = vector.extract_strided_slice %238 {offsets = [0, 64], sizes = [2, 32], strides = [1, 1]} : vector<2x128xf32> to vector<2x32xf32>
    %242 = vector.extract_strided_slice %237 {offsets = [0, 96], sizes = [2, 32], strides = [1, 1]} : vector<2x128xf32> to vector<2x32xf32>
    %243 = arith.mulf %240, %203 : vector<2x32xf32>
    %244 = arith.mulf %239, %241 : vector<2x32xf32>
    %245 = arith.addf %243, %244 : vector<2x32xf32>
    %246 = math.tanh %245 : vector<2x32xf32>
    %247 = arith.mulf %242, %246 : vector<2x32xf32>
    %248 = arith.negf %232 : vector<2x128xf32>
    %249 = math.exp %248 : vector<2x128xf32>
    %cst_64 = arith.constant 1.000000e+00 : f32
    %250 = vector.broadcast %cst_64 : f32 to vector<2x128xf32>
    %251 = arith.addf %250, %249 : vector<2x128xf32>
    %252 = arith.divf %250, %251 : vector<2x128xf32>
    %253 = math.tanh %232 : vector<2x128xf32>
    %254 = vector.extract_strided_slice %252 {offsets = [0, 0], sizes = [2, 32], strides = [1, 1]} : vector<2x128xf32> to vector<2x32xf32>
    %255 = vector.extract_strided_slice %252 {offsets = [0, 32], sizes = [2, 32], strides = [1, 1]} : vector<2x128xf32> to vector<2x32xf32>
    %256 = vector.extract_strided_slice %253 {offsets = [0, 64], sizes = [2, 32], strides = [1, 1]} : vector<2x128xf32> to vector<2x32xf32>
    %257 = vector.extract_strided_slice %252 {offsets = [0, 96], sizes = [2, 32], strides = [1, 1]} : vector<2x128xf32> to vector<2x32xf32>
    %258 = arith.mulf %255, %218 : vector<2x32xf32>
    %259 = arith.mulf %254, %256 : vector<2x32xf32>
    %260 = arith.addf %258, %259 : vector<2x32xf32>
    %261 = math.tanh %260 : vector<2x32xf32>
    %262 = arith.mulf %257, %261 : vector<2x32xf32>
    %c5_65 = arith.constant 5 : index
    %c0_66 = arith.constant 0 : index
    %c0_67 = arith.constant 0 : index
    %263 = vector.load %arg7[%c5_65, %c0_66, %c0_67] : memref<8x2x32xf32, #tpu.memory_space<vmem>>, vector<1x2x32xf32>
    %264 = vector.shape_cast %263 : vector<1x2x32xf32> to vector<2x32xf32>
    %265 = vector.shape_cast %247 : vector<2x32xf32> to vector<1x2x32xf32>
    tpu.vector_store %arg7[%c5_65, %c0_66, %c0_67], %265 {strides = array<i32>} : memref<8x2x32xf32, #tpu.memory_space<vmem>>, vector<1x2x32xf32>,
    %c2_68 = arith.constant 2 : index
    %c0_69 = arith.constant 0 : index
    %c0_70 = arith.constant 0 : index
    %266 = vector.load %arg8[%c2_68, %c0_69, %c0_70] : memref<8x2x32xf32, #tpu.memory_space<vmem>>, vector<1x2x32xf32>
    %267 = vector.shape_cast %266 : vector<1x2x32xf32> to vector<2x32xf32>
    %268 = vector.shape_cast %262 : vector<2x32xf32> to vector<1x2x32xf32>
    tpu.vector_store %arg8[%c2_68, %c0_69, %c0_70], %268 {strides = array<i32>} : memref<8x2x32xf32, #tpu.memory_space<vmem>>, vector<1x2x32xf32>,
    %269 = vector.extract_strided_slice %6 {offsets = [12, 0], sizes = [2, 128], strides = [1, 1]} : vector<16x128xf32> to vector<2x128xf32>
    %cst_71 = arith.constant dense<0.000000e+00> : vector<2x128xf32>
    %270 = tpu.matmul %247, %11, %cst_71 {dimension_numbers = #tpu.dot_dimension_numbers<[1], [0], [0], [1], [0, 0, 1, 1], [], []>} : vector<2x32xf32>, vector<32x128xf32>, vector<2x128xf32> -> vector<2x128xf32>
    %271 = arith.addf %269, %270 : vector<2x128xf32>
    %272 = vector.extract_strided_slice %10 {offsets = [2, 0], sizes = [2, 128], strides = [1, 1]} : vector<16x128xf32> to vector<2x128xf32>
    %cst_72 = arith.constant dense<0.000000e+00> : vector<2x128xf32>
    %273 = tpu.matmul %262, %12, %cst_72 {dimension_numbers = #tpu.dot_dimension_numbers<[1], [0], [0], [1], [0, 0, 1, 1], [], []>} : vector<2x32xf32>, vector<32x128xf32>, vector<2x128xf32> -> vector<2x128xf32>
    %274 = arith.addf %272, %273 : vector<2x128xf32>
    %275 = arith.negf %271 : vector<2x128xf32>
    %276 = math.exp %275 : vector<2x128xf32>
    %cst_73 = arith.constant 1.000000e+00 : f32
    %277 = vector.broadcast %cst_73 : f32 to vector<2x128xf32>
    %278 = arith.addf %277, %276 : vector<2x128xf32>
    %279 = arith.divf %277, %278 : vector<2x128xf32>
    %280 = math.tanh %271 : vector<2x128xf32>
    %281 = vector.extract_strided_slice %279 {offsets = [0, 0], sizes = [2, 32], strides = [1, 1]} : vector<2x128xf32> to vector<2x32xf32>
    %282 = vector.extract_strided_slice %279 {offsets = [0, 32], sizes = [2, 32], strides = [1, 1]} : vector<2x128xf32> to vector<2x32xf32>
    %283 = vector.extract_strided_slice %280 {offsets = [0, 64], sizes = [2, 32], strides = [1, 1]} : vector<2x128xf32> to vector<2x32xf32>
    %284 = vector.extract_strided_slice %279 {offsets = [0, 96], sizes = [2, 32], strides = [1, 1]} : vector<2x128xf32> to vector<2x32xf32>
    %285 = arith.mulf %282, %245 : vector<2x32xf32>
    %286 = arith.mulf %281, %283 : vector<2x32xf32>
    %287 = arith.addf %285, %286 : vector<2x32xf32>
    %288 = math.tanh %287 : vector<2x32xf32>
    %289 = arith.mulf %284, %288 : vector<2x32xf32>
    %290 = arith.negf %274 : vector<2x128xf32>
    %291 = math.exp %290 : vector<2x128xf32>
    %cst_74 = arith.constant 1.000000e+00 : f32
    %292 = vector.broadcast %cst_74 : f32 to vector<2x128xf32>
    %293 = arith.addf %292, %291 : vector<2x128xf32>
    %294 = arith.divf %292, %293 : vector<2x128xf32>
    %295 = math.tanh %274 : vector<2x128xf32>
    %296 = vector.extract_strided_slice %294 {offsets = [0, 0], sizes = [2, 32], strides = [1, 1]} : vector<2x128xf32> to vector<2x32xf32>
    %297 = vector.extract_strided_slice %294 {offsets = [0, 32], sizes = [2, 32], strides = [1, 1]} : vector<2x128xf32> to vector<2x32xf32>
    %298 = vector.extract_strided_slice %295 {offsets = [0, 64], sizes = [2, 32], strides = [1, 1]} : vector<2x128xf32> to vector<2x32xf32>
    %299 = vector.extract_strided_slice %294 {offsets = [0, 96], sizes = [2, 32], strides = [1, 1]} : vector<2x128xf32> to vector<2x32xf32>
    %300 = arith.mulf %297, %260 : vector<2x32xf32>
    %301 = arith.mulf %296, %298 : vector<2x32xf32>
    %302 = arith.addf %300, %301 : vector<2x32xf32>
    %303 = math.tanh %302 : vector<2x32xf32>
    %304 = arith.mulf %299, %303 : vector<2x32xf32>
    %c6_75 = arith.constant 6 : index
    %c0_76 = arith.constant 0 : index
    %c0_77 = arith.constant 0 : index
    %305 = vector.load %arg7[%c6_75, %c0_76, %c0_77] : memref<8x2x32xf32, #tpu.memory_space<vmem>>, vector<1x2x32xf32>
    %306 = vector.shape_cast %305 : vector<1x2x32xf32> to vector<2x32xf32>
    %307 = vector.shape_cast %289 : vector<2x32xf32> to vector<1x2x32xf32>
    tpu.vector_store %arg7[%c6_75, %c0_76, %c0_77], %307 {strides = array<i32>} : memref<8x2x32xf32, #tpu.memory_space<vmem>>, vector<1x2x32xf32>,
    %c1_78 = arith.constant 1 : index
    %c0_79 = arith.constant 0 : index
    %c0_80 = arith.constant 0 : index
    %308 = vector.load %arg8[%c1_78, %c0_79, %c0_80] : memref<8x2x32xf32, #tpu.memory_space<vmem>>, vector<1x2x32xf32>
    %309 = vector.shape_cast %308 : vector<1x2x32xf32> to vector<2x32xf32>
    %310 = vector.shape_cast %304 : vector<2x32xf32> to vector<1x2x32xf32>
    tpu.vector_store %arg8[%c1_78, %c0_79, %c0_80], %310 {strides = array<i32>} : memref<8x2x32xf32, #tpu.memory_space<vmem>>, vector<1x2x32xf32>,
    %311 = vector.extract_strided_slice %6 {offsets = [14, 0], sizes = [2, 128], strides = [1, 1]} : vector<16x128xf32> to vector<2x128xf32>
    %cst_81 = arith.constant dense<0.000000e+00> : vector<2x128xf32>
    %312 = tpu.matmul %289, %11, %cst_81 {dimension_numbers = #tpu.dot_dimension_numbers<[1], [0], [0], [1], [0, 0, 1, 1], [], []>} : vector<2x32xf32>, vector<32x128xf32>, vector<2x128xf32> -> vector<2x128xf32>
    %313 = arith.addf %311, %312 : vector<2x128xf32>
    %314 = vector.extract_strided_slice %10 {offsets = [0, 0], sizes = [2, 128], strides = [1, 1]} : vector<16x128xf32> to vector<2x128xf32>
    %cst_82 = arith.constant dense<0.000000e+00> : vector<2x128xf32>
    %315 = tpu.matmul %304, %12, %cst_82 {dimension_numbers = #tpu.dot_dimension_numbers<[1], [0], [0], [1], [0, 0, 1, 1], [], []>} : vector<2x32xf32>, vector<32x128xf32>, vector<2x128xf32> -> vector<2x128xf32>
    %316 = arith.addf %314, %315 : vector<2x128xf32>
    %317 = arith.negf %313 : vector<2x128xf32>
    %318 = math.exp %317 : vector<2x128xf32>
    %cst_83 = arith.constant 1.000000e+00 : f32
    %319 = vector.broadcast %cst_83 : f32 to vector<2x128xf32>
    %320 = arith.addf %319, %318 : vector<2x128xf32>
    %321 = arith.divf %319, %320 : vector<2x128xf32>
    %322 = math.tanh %313 : vector<2x128xf32>
    %323 = vector.extract_strided_slice %321 {offsets = [0, 0], sizes = [2, 32], strides = [1, 1]} : vector<2x128xf32> to vector<2x32xf32>
    %324 = vector.extract_strided_slice %321 {offsets = [0, 32], sizes = [2, 32], strides = [1, 1]} : vector<2x128xf32> to vector<2x32xf32>
    %325 = vector.extract_strided_slice %322 {offsets = [0, 64], sizes = [2, 32], strides = [1, 1]} : vector<2x128xf32> to vector<2x32xf32>
    %326 = vector.extract_strided_slice %321 {offsets = [0, 96], sizes = [2, 32], strides = [1, 1]} : vector<2x128xf32> to vector<2x32xf32>
    %327 = arith.mulf %324, %287 : vector<2x32xf32>
    %328 = arith.mulf %323, %325 : vector<2x32xf32>
    %329 = arith.addf %327, %328 : vector<2x32xf32>
    %330 = math.tanh %329 : vector<2x32xf32>
    %331 = arith.mulf %326, %330 : vector<2x32xf32>
    %332 = arith.negf %316 : vector<2x128xf32>
    %333 = math.exp %332 : vector<2x128xf32>
    %cst_84 = arith.constant 1.000000e+00 : f32
    %334 = vector.broadcast %cst_84 : f32 to vector<2x128xf32>
    %335 = arith.addf %334, %333 : vector<2x128xf32>
    %336 = arith.divf %334, %335 : vector<2x128xf32>
    %337 = math.tanh %316 : vector<2x128xf32>
    %338 = vector.extract_strided_slice %336 {offsets = [0, 0], sizes = [2, 32], strides = [1, 1]} : vector<2x128xf32> to vector<2x32xf32>
    %339 = vector.extract_strided_slice %336 {offsets = [0, 32], sizes = [2, 32], strides = [1, 1]} : vector<2x128xf32> to vector<2x32xf32>
    %340 = vector.extract_strided_slice %337 {offsets = [0, 64], sizes = [2, 32], strides = [1, 1]} : vector<2x128xf32> to vector<2x32xf32>
    %341 = vector.extract_strided_slice %336 {offsets = [0, 96], sizes = [2, 32], strides = [1, 1]} : vector<2x128xf32> to vector<2x32xf32>
    %342 = arith.mulf %339, %302 : vector<2x32xf32>
    %343 = arith.mulf %338, %340 : vector<2x32xf32>
    %344 = arith.addf %342, %343 : vector<2x32xf32>
    %345 = math.tanh %344 : vector<2x32xf32>
    %346 = arith.mulf %341, %345 : vector<2x32xf32>
    %c7_85 = arith.constant 7 : index
    %c0_86 = arith.constant 0 : index
    %c0_87 = arith.constant 0 : index
    %347 = vector.load %arg7[%c7_85, %c0_86, %c0_87] : memref<8x2x32xf32, #tpu.memory_space<vmem>>, vector<1x2x32xf32>
    %348 = vector.shape_cast %347 : vector<1x2x32xf32> to vector<2x32xf32>
    %349 = vector.shape_cast %331 : vector<2x32xf32> to vector<1x2x32xf32>
    tpu.vector_store %arg7[%c7_85, %c0_86, %c0_87], %349 {strides = array<i32>} : memref<8x2x32xf32, #tpu.memory_space<vmem>>, vector<1x2x32xf32>,
    %c0_88 = arith.constant 0 : index
    %c0_89 = arith.constant 0 : index
    %c0_90 = arith.constant 0 : index
    %350 = vector.load %arg8[%c0_88, %c0_89, %c0_90] : memref<8x2x32xf32, #tpu.memory_space<vmem>>, vector<1x2x32xf32>
    %351 = vector.shape_cast %350 : vector<1x2x32xf32> to vector<2x32xf32>
    %352 = vector.shape_cast %346 : vector<2x32xf32> to vector<1x2x32xf32>
    tpu.vector_store %arg8[%c0_88, %c0_89, %c0_90], %352 {strides = array<i32>} : memref<8x2x32xf32, #tpu.memory_space<vmem>>, vector<1x2x32xf32>,
    return
  }
}

</mosaic_0001>

<llo_original>
// kernel: birnn_forward.2
$region0: #{birnn_forward.2}
  #allocation0 [shape = 'u32[]', space=smem, size = 0x4, offset = 0x4, fixed_abs, tag = 'smem constant byte address 0x4 - core index']
  #allocation1 [shape = 'u32[144,128]{1,0:T(1,128)}', space=vmem, size = 0x12000, scoped, tag = 'internal scratch']
  %s0 = inlined_call_operand.vmem [shape: f32[16,32], index: 0, kind: input, shape index: {}]
  %s1 = inlined_call_operand.vmem [shape: f32[32,128], index: 1, kind: input, shape index: {}]
  %s2 = inlined_call_operand.vmem [shape: f32[32,128], index: 2, kind: input, shape index: {}]
  %s3 = inlined_call_operand.vmem [shape: f32[1,128], index: 3, kind: input, shape index: {}]
  %s4 = inlined_call_operand.vmem [shape: f32[32,128], index: 4, kind: input, shape index: {}]
  %s5 = inlined_call_operand.vmem [shape: f32[32,128], index: 5, kind: input, shape index: {}]
  %s6 = inlined_call_operand.vmem [shape: f32[1,128], index: 6, kind: input, shape index: {}]
  %s7 = inlined_call_operand.vmem [shape: f32[8,2,32], index: 7, kind: output, shape index: {0}]
  %s8 = inlined_call_operand.vmem [shape: f32[8,2,32], index: 8, kind: output, shape index: {1}]
  %9 = xla_tuple %s7, %s8
  %s10 = sld [smem:[#allocation0]]
  $region46: #{birnn_forward.2} parent=0
    _
  %s12 = ssub.s32 1, %s10
  %s13 = scalar_select 0, %s12, %s10
  // Predicated region
  $region2: #{birnn_forward.2} parent=0 // pred_check
    _
  $region3: #{birnn_forward.2} parent=0 // pred_check_branch
    %15 = sbr.rel (0) target = $region5
  $region4: #{birnn_forward.2} parent=0 // pred_region
    _
  $region5: #{birnn_forward.2} parent=0 // pred_fallthru
    _
  // Predicated region
  $region6: #{birnn_forward.2} parent=0 // pred_check
    _
  $region7: #{birnn_forward.2} parent=0 // pred_check_branch
    %17 = sbr.rel (0) target = $region9
  $region8: #{birnn_forward.2} parent=0 // pred_region
    _
  $region9: #{birnn_forward.2} parent=0 // pred_fallthru
    _
  // Predicated region
  $region10: #{birnn_forward.2} parent=0 // pred_check
    _
  $region11: #{birnn_forward.2} parent=0 // pred_check_branch
    %19 = sbr.rel (0) target = $region13
  $region12: #{birnn_forward.2} parent=0 // pred_region
    _
  $region13: #{birnn_forward.2} parent=0 // pred_fallthru
    _
  // Predicated region
  $region14: #{birnn_forward.2} parent=0 // pred_check
    _
  $region15: #{birnn_forward.2} parent=0 // pred_check_branch
    %21 = sbr.rel (0) target = $region17
  $region16: #{birnn_forward.2} parent=0 // pred_region
    _
  $region17: #{birnn_forward.2} parent=0 // pred_fallthru
    _
  // Predicated region
  $region18: #{birnn_forward.2} parent=0 // pred_check
    _
  $region19: #{birnn_forward.2} parent=0 // pred_check_branch
    %23 = sbr.rel (0) target = $region21
  $region20: #{birnn_forward.2} parent=0 // pred_region
    _
  $region21: #{birnn_forward.2} parent=0 // pred_fallthru
    _
  // Predicated region
  $region22: #{birnn_forward.2} parent=0 // pred_check
    _
  $region23: #{birnn_forward.2} parent=0 // pred_check_branch
    %25 = sbr.rel (0) target = $region25
  $region24: #{birnn_forward.2} parent=0 // pred_region
    _
  $region25: #{birnn_forward.2} parent=0 // pred_fallthru
    _
  // Predicated region
  $region26: #{birnn_forward.2} parent=0 // pred_check
    _
  $region27: #{birnn_forward.2} parent=0 // pred_check_branch
    %27 = sbr.rel (0) target = $region29
  $region28: #{birnn_forward.2} parent=0 // pred_region
    _
  $region29: #{birnn_forward.2} parent=0 // pred_fallthru
    _
  %v28 = vld [vmem:[%s3] sm:$0x1]
  %v29 = vld [vmem:[%s6] sm:$0x1]
  %v30 = vld [vmem:[%s0] sm:$0xff]
  %v31 = vld [vmem:[%s0 + $0x8] sm:$0xff]
  %v32 = vld [vmem:[%s1] sm:$0xff]
  %v33 = vld [vmem:[%s1 + $0x8] sm:$0xff]
  %v34 = vld [vmem:[%s1 + $0x10] sm:$0xff]
  %v35 = vld [vmem:[%s1 + $0x18] sm:$0xff]
  %vm36 = vcmask 261120
  %v38 = vsel %vm36, %v30, 0
  %v41 = vsel %vm36, %v31, 0
  %43 = vmatprep.subr.mxu0 0.0
  %44 = vmatpush1.msra.mxu0 %v32
  %45 = vmatprep.subr.mxu0 0.0
  %46 = vmatpush1.msra.mxu0 %v33
  %47 = vmatprep.subr.mxu0 0.0
  %48 = vmatpush1.msra.mxu0 %v34
  %49 = vmatprep.subr.mxu0 0.0
  %50 = vmatpush1.msra.mxu0 %v35
  %51 = vmatprep.subr.mxu0 0.0
  %52 = vmatpush1.msra.mxu0 0.0
  %53 = vmatprep.subr.mxu0 0.0
  %54 = vmatpush1.msra.mxu0 0.0
  %55 = vmatprep.subr.mxu0 0.0
  %56 = vmatpush1.msra.mxu0 0.0
  %57 = vmatprep.subr.mxu0 0.0
  %58 = vmatpush1.msra.mxu0 0.0
  %59 = vmatprep.subr.mxu0 0.0
  %60 = vmatpush1.msra.mxu0 0.0
  %61 = vmatprep.subr.mxu0 0.0
  %62 = vmatpush1.msra.mxu0 0.0
  %63 = vmatprep.subr.mxu0 0.0
  %64 = vmatpush1.msra.mxu0 0.0
  %65 = vmatprep.subr.mxu0 0.0
  %66 = vmatpush1.msra.mxu0 0.0
  %67 = vmatprep.subr.mxu0 0.0
  %68 = vmatpush1.msra.mxu0 0.0
  %69 = vmatprep.subr.mxu0 0.0
  %70 = vmatpush1.msra.mxu0 0.0
  %71 = vmatprep.subr.mxu0 0.0
  %72 = vmatpush1.msra.mxu0 0.0
  %73 = vmatprep.subr.mxu0 0.0
  %74 = vmatpush1.msra.mxu0 0.0
  %75 = vmatprep.subr.mxu0 0.0
  %76 = vmatpush1.msra.mxu0 0.0
  %77 = vmatprep.subr.mxu0 0.0
  %78 = vmatpush1.msra.mxu0 0.0
  %79 = vmatprep.subr.mxu0 0.0
  %80 = vmatpush1.msra.mxu0 0.0
  %81 = vmatprep.subr.mxu0 0.0
  %82 = vmatpush1.msra.mxu0 0.0
  %83 = vmatprep.subr.mxu0 0.0
  %84 = vmatpush1.msra.mxu0 0.0
  %85 = vmatprep.subr.mxu0 0.0
  %86 = vmatpush1.msra.mxu0 0.0
  %87 = vmatprep.subr.mxu0 0.0
  %88 = vmatpush1.msra.mxu0 0.0
  %89 = vmatprep.subr.mxu0 0.0
  %90 = vmatpush1.msra.mxu0 0.0
  %91 = vmatprep.subr.mxu0 0.0
  %92 = vmatpush1.msra.mxu0 0.0
  %93 = vmatprep.subr.mxu0 0.0
  %94 = vmatpush1.msra.mxu0 0.0
  %95 = vmatprep.subr.mxu0 0.0
  %96 = vmatpush1.msra.mxu0 0.0
  %97 = vmatprep.subr.mxu0 0.0
  %98 = vmatpush1.msra.mxu0 0.0
  %99 = vmatprep.subr.mxu0 0.0
  %100 = vmatpush1.msra.mxu0 0.0
  %101 = vmatprep.subr.mxu0 0.0
  %102 = vmatpush1.msra.mxu0 0.0
  %103 = vmatprep.subr.mxu0 0.0
  %104 = vmatpush1.msra.mxu0 0.0
  %105 = vmatprep.subr.mxu0 0.0
  %106 = vmatpush1.msra.mxu0 0.0
  %107 = vmatprep.mubr.f32.mxu0 0.0
  %108 = vmatmul.mubr.f32.gmra.mrb[0].mxu0 %v38
  %v109 = vpop.f32.mrb[0].mxu0
  %v110 = vadd.f32 0.0, %v109
  %v111 = vpop.f32.mrb[0].mxu0
  %112 = vmatprep.mubr.f32.mxu0 0.0
  %113 = vmatmul.mubr.f32.gmra.mrb[0].mxu0 %v41
  %v114 = vpop.f32.mrb[0].mxu0
  %v115 = vadd.f32 0.0, %v114
  %v116 = vpop.f32.mrb[0].mxu0
  %117 = vdwg.mxu0
  %v119 = vlaneseq
  %v120 = vshrl.u32 %v119, 7
  %v121 = vsub.s32 0, %v120
  %v122 = vrot.slane %v28, %v121
  %v124 = vadd.f32 %v122, %v110
  %v125 = vadd.f32 %v122, %v115
  %v126 = vld [vmem:[%s4] sm:$0xff]
  %v127 = vld [vmem:[%s4 + $0x8] sm:$0xff]
  %v128 = vld [vmem:[%s4 + $0x10] sm:$0xff]
  %v129 = vld [vmem:[%s4 + $0x18] sm:$0xff]
  %130 = vmatprep.subr.mxu0 0.0
  %131 = vmatpush1.msra.mxu0 %v126
  %132 = vmatprep.subr.mxu0 0.0
  %133 = vmatpush1.msra.mxu0 %v127
  %134 = vmatprep.subr.mxu0 0.0
  %135 = vmatpush1.msra.mxu0 %v128
  %136 = vmatprep.subr.mxu0 0.0
  %137 = vmatpush1.msra.mxu0 %v129
  %138 = vmatprep.subr.mxu0 0.0
  %139 = vmatpush1.msra.mxu0 0.0
  %140 = vmatprep.subr.mxu0 0.0
  %141 = vmatpush1.msra.mxu0 0.0
  %142 = vmatprep.subr.mxu0 0.0
  %143 = vmatpush1.msra.mxu0 0.0
  %144 = vmatprep.subr.mxu0 0.0
  %145 = vmatpush1.msra.mxu0 0.0
  %146 = vmatprep.subr.mxu0 0.0
  %147 = vmatpush1.msra.mxu0 0.0
  %148 = vmatprep.subr.mxu0 0.0
  %149 = vmatpush1.msra.mxu0 0.0
  %150 = vmatprep.subr.mxu0 0.0
  %151 = vmatpush1.msra.mxu0 0.0
  %152 = vmatprep.subr.mxu0 0.0
  %153 = vmatpush1.msra.mxu0 0.0
  %154 = vmatprep.subr.mxu0 0.0
  %155 = vmatpush1.msra.mxu0 0.0
  %156 = vmatprep.subr.mxu0 0.0
  %157 = vmatpush1.msra.mxu0 0.0
  %158 = vmatprep.subr.mxu0 0.0
  %159 = vmatpush1.msra.mxu0 0.0
  %160 = vmatprep.subr.mxu0 0.0
  %161 = vmatpush1.msra.mxu0 0.0
  %162 = vmatprep.subr.mxu0 0.0
  %163 = vmatpush1.msra.mxu0 0.0
  %164 = vmatprep.subr.mxu0 0.0
  %165 = vmatpush1.msra.mxu0 0.0
  %166 = vmatprep.subr.mxu0 0.0
  %167 = vmatpush1.msra.mxu0 0.0
  %168 = vmatprep.subr.mxu0 0.0
  %169 = vmatpush1.msra.mxu0 0.0
  %170 = vmatprep.subr.mxu0 0.0
  %171 = vmatpush1.msra.mxu0 0.0
  %172 = vmatprep.subr.mxu0 0.0
  %173 = vmatpush1.msra.mxu0 0.0
  %174 = vmatprep.subr.mxu0 0.0
  %175 = vmatpush1.msra.mxu0 0.0
  %176 = vmatprep.subr.mxu0 0.0
  %177 = vmatpush1.msra.mxu0 0.0
  %178 = vmatprep.subr.mxu0 0.0
  %179 = vmatpush1.msra.mxu0 0.0
  %180 = vmatprep.subr.mxu0 0.0
  %181 = vmatpush1.msra.mxu0 0.0
  %182 = vmatprep.subr.mxu0 0.0
  %183 = vmatpush1.msra.mxu0 0.0
  %184 = vmatprep.subr.mxu0 0.0
  %185 = vmatpush1.msra.mxu0 0.0
  %186 = vmatprep.subr.mxu0 0.0
  %187 = vmatpush1.msra.mxu0 0.0
  %188 = vmatprep.subr.mxu0 0.0
  %189 = vmatpush1.msra.mxu0 0.0
  %190 = vmatprep.subr.mxu0 0.0
  %191 = vmatpush1.msra.mxu0 0.0
  %192 = vmatprep.subr.mxu0 0.0
  %193 = vmatpush1.msra.mxu0 0.0
  %194 = vmatprep.mubr.f32.mxu0 0.0
  %195 = vmatmul.mubr.f32.gmra.mrb[0].mxu0 %v38
  %v196 = vpop.f32.mrb[0].mxu0
  %v197 = vadd.f32 0.0, %v196
  %v198 = vpop.f32.mrb[0].mxu0
  %199 = vmatprep.mubr.f32.mxu0 0.0
  %200 = vmatmul.mubr.f32.gmra.mrb[0].mxu0 %v41
  %v201 = vpop.f32.mrb[0].mxu0
  %v202 = vadd.f32 0.0, %v201
  %v203 = vpop.f32.mrb[0].mxu0
  %204 = vdwg.mxu0
  %v206 = vlaneseq
  %v207 = vshrl.u32 %v206, 7
  %v208 = vsub.s32 0, %v207
  %v209 = vrot.slane %v29, %v208
  %v211 = vadd.f32 %v209, %v197
  %v212 = vadd.f32 %v209, %v202
  %v213 = vld [vmem:[%s2] sm:$0xff]
  %v214 = vld [vmem:[%s2 + $0x8] sm:$0xff]
  %v215 = vld [vmem:[%s2 + $0x10] sm:$0xff]
  %v216 = vld [vmem:[%s2 + $0x18] sm:$0xff]
  %v217 = vld [vmem:[%s5] sm:$0xff]
  %v218 = vld [vmem:[%s5 + $0x8] sm:$0xff]
  %v219 = vld [vmem:[%s5 + $0x10] sm:$0xff]
  %v220 = vld [vmem:[%s5 + $0x18] sm:$0xff]
  %v222 = vsel %vm36, 0.0, 0
  %224 = vmatprep.subr.mxu0 0.0
  %225 = vmatpush1.msra.mxu0 %v213
  %226 = vmatprep.subr.mxu0 0.0
  %227 = vmatpush1.msra.mxu0 %v214
  %228 = vmatprep.subr.mxu0 0.0
  %229 = vmatpush1.msra.mxu0 %v215
  %230 = vmatprep.subr.mxu0 0.0
  %231 = vmatpush1.msra.mxu0 %v216
  %232 = vmatprep.subr.mxu0 0.0
  %233 = vmatpush1.msra.mxu0 0.0
  %234 = vmatprep.subr.mxu0 0.0
  %235 = vmatpush1.msra.mxu0 0.0
  %236 = vmatprep.subr.mxu0 0.0
  %237 = vmatpush1.msra.mxu0 0.0
  %238 = vmatprep.subr.mxu0 0.0
  %239 = vmatpush1.msra.mxu0 0.0
  %240 = vmatprep.subr.mxu0 0.0
  %241 = vmatpush1.msra.mxu0 0.0
  %242 = vmatprep.subr.mxu0 0.0
  %243 = vmatpush1.msra.mxu0 0.0
  %244 = vmatprep.subr.mxu0 0.0
  %245 = vmatpush1.msra.mxu0 0.0
  %246 = vmatprep.subr.mxu0 0.0
  %247 = vmatpush1.msra.mxu0 0.0
  %248 = vmatprep.subr.mxu0 0.0
  %249 = vmatpush1.msra.mxu0 0.0
  %250 = vmatprep.subr.mxu0 0.0
  %251 = vmatpush1.msra.mxu0 0.0
  %252 = vmatprep.subr.mxu0 0.0
  %253 = vmatpush1.msra.mxu0 0.0
  %254 = vmatprep.subr.mxu0 0.0
  %255 = vmatpush1.msra.mxu0 0.0
  %256 = vmatprep.subr.mxu0 0.0
  %257 = vmatpush1.msra.mxu0 0.0
  %258 = vmatprep.subr.mxu0 0.0
  %259 = vmatpush1.msra.mxu0 0.0
  %260 = vmatprep.subr.mxu0 0.0
  %261 = vmatpush1.msra.mxu0 0.0
  %262 = vmatprep.subr.mxu0 0.0
  %263 = vmatpush1.msra.mxu0 0.0
  %264 = vmatprep.subr.mxu0 0.0
  %265 = vmatpush1.msra.mxu0 0.0
  %266 = vmatprep.subr.mxu0 0.0
  %267 = vmatpush1.msra.mxu0 0.0
  %268 = vmatprep.subr.mxu0 0.0
  %269 = vmatpush1.msra.mxu0 0.0
  %270 = vmatprep.subr.mxu0 0.0
  %271 = vmatpush1.msra.mxu0 0.0
  %272 = vmatprep.subr.mxu0 0.0
  %273 = vmatpush1.msra.mxu0 0.0
  %274 = vmatprep.subr.mxu0 0.0
  %275 = vmatpush1.msra.mxu0 0.0
  %276 = vmatprep.subr.mxu0 0.0
  %277 = vmatpush1.msra.mxu0 0.0
  %278 = vmatprep.subr.mxu0 0.0
  %279 = vmatpush1.msra.mxu0 0.0
  %280 = vmatprep.subr.mxu0 0.0
  %281 = vmatpush1.msra.mxu0 0.0
  %282 = vmatprep.subr.mxu0 0.0
  %283 = vmatpush1.msra.mxu0 0.0
  %284 = vmatprep.subr.mxu0 0.0
  %285 = vmatpush1.msra.mxu0 0.0
  %286 = vmatprep.subr.mxu0 0.0
  %287 = vmatpush1.msra.mxu0 0.0
  %288 = vmatprep.mubr.f32.mxu0 0.0
  %289 = vmatmul.mubr.f32.gmra.mrb[0].mxu0 %v222
  %v290 = vpop.f32.mrb[0].mxu0
  %v291 = vadd.f32 0.0, %v290
  %v292 = vpop.f32.mrb[0].mxu0
  %293 = vdwg.mxu0
  %v294 = vadd.f32 %v124, %v291
  %295 = vmatprep.subr.mxu0 0.0
  %296 = vmatpush1.msra.mxu0 %v217
  %297 = vmatprep.subr.mxu0 0.0
  %298 = vmatpush1.msra.mxu0 %v218
  %299 = vmatprep.subr.mxu0 0.0
  %300 = vmatpush1.msra.mxu0 %v219
  %301 = vmatprep.subr.mxu0 0.0
  %302 = vmatpush1.msra.mxu0 %v220
  %303 = vmatprep.subr.mxu0 0.0
  %304 = vmatpush1.msra.mxu0 0.0
  %305 = vmatprep.subr.mxu0 0.0
  %306 = vmatpush1.msra.mxu0 0.0
  %307 = vmatprep.subr.mxu0 0.0
  %308 = vmatpush1.msra.mxu0 0.0
  %309 = vmatprep.subr.mxu0 0.0
  %310 = vmatpush1.msra.mxu0 0.0
  %311 = vmatprep.subr.mxu0 0.0
  %312 = vmatpush1.msra.mxu0 0.0
  %313 = vmatprep.subr.mxu0 0.0
  %314 = vmatpush1.msra.mxu0 0.0
  %315 = vmatprep.subr.mxu0 0.0
  %316 = vmatpush1.msra.mxu0 0.0
  %317 = vmatprep.subr.mxu0 0.0
  %318 = vmatpush1.msra.mxu0 0.0
  %319 = vmatprep.subr.mxu0 0.0
  %320 = vmatpush1.msra.mxu0 0.0
  %321 = vmatprep.subr.mxu0 0.0
  %322 = vmatpush1.msra.mxu0 0.0
  %323 = vmatprep.subr.mxu0 0.0
  %324 = vmatpush1.msra.mxu0 0.0
  %325 = vmatprep.subr.mxu0 0.0
  %326 = vmatpush1.msra.mxu0 0.0
  %327 = vmatprep.subr.mxu0 0.0
  %328 = vmatpush1.msra.mxu0 0.0
  %329 = vmatprep.subr.mxu0 0.0
  %330 = vmatpush1.msra.mxu0 0.0
  %331 = vmatprep.subr.mxu0 0.0
  %332 = vmatpush1.msra.mxu0 0.0
  %333 = vmatprep.subr.mxu0 0.0
  %334 = vmatpush1.msra.mxu0 0.0
  %335 = vmatprep.subr.mxu0 0.0
  %336 = vmatpush1.msra.mxu0 0.0
  %337 = vmatprep.subr.mxu0 0.0
  %338 = vmatpush1.msra.mxu0 0.0
  %339 = vmatprep.subr.mxu0 0.0
  %340 = vmatpush1.msra.mxu0 0.0
  %341 = vmatprep.subr.mxu0 0.0
  %342 = vmatpush1.msra.mxu0 0.0
  %343 = vmatprep.subr.mxu0 0.0
  %344 = vmatpush1.msra.mxu0 0.0
  %345 = vmatprep.subr.mxu0 0.0
  %346 = vmatpush1.msra.mxu0 0.0
  %347 = vmatprep.subr.mxu0 0.0
  %348 = vmatpush1.msra.mxu0 0.0
  %349 = vmatprep.subr.mxu0 0.0
  %350 = vmatpush1.msra.mxu0 0.0
  %351 = vmatprep.subr.mxu0 0.0
  %352 = vmatpush1.msra.mxu0 0.0
  %353 = vmatprep.subr.mxu0 0.0
  %354 = vmatpush1.msra.mxu0 0.0
  %355 = vmatprep.subr.mxu0 0.0
  %356 = vmatpush1.msra.mxu0 0.0
  %357 = vmatprep.subr.mxu0 0.0
  %358 = vmatpush1.msra.mxu0 0.0
  %359 = vmatprep.mubr.f32.mxu0 0.0
  %360 = vmatmul.mubr.f32.gmra.mrb[0].mxu0 %v222
  %v361 = vpop.f32.mrb[0].mxu0
  %v362 = vadd.f32 0.0, %v361
  %v363 = vpop.f32.mrb[0].mxu0
  %364 = vdwg.mxu0
  %v366 = vrot.slane %v362, 2
  %v368 = vadd.f32 %v212, %v366
  %v369 = vxor.u32 %v294, 2147483648
  %v370 = vmul.f32 %v369, 1.442695
  %v371 = vpow.pop %v370
  %v372 = vadd.f32 %v371, 1.0
  %v373 = vrcp.pop %v372
  %v374 = vmul.f32 1.0, %v373
  %v375 = vtanh.pop %v294
  %v376 = vmul.f32 %v374, 0.0
  %378 = vrot.lane.b32.xlu0 %v375, 64
  %v379 = vpop.permute.xlu0 %378
  %v381 = vmul.f32 %v374, %v379
  %383 = vrot.lane.b32.xlu0 %v381, 32
  %v384 = vpop.permute.xlu0 %383
  %v386 = vadd.f32 %v376, %v384
  %v387 = vtanh.pop %v386
  %389 = vrot.lane.b32.xlu0 %v387, 64
  %v390 = vpop.permute.xlu0 %389
  %v392 = vmul.f32 %v374, %v390
  %v393 = vxor.u32 %v368, 2147483648
  %v394 = vmul.f32 %v393, 1.442695
  %v395 = vpow.pop %v394
  %v396 = vadd.f32 %v395, 1.0
  %v397 = vrcp.pop %v396
  %v398 = vmul.f32 1.0, %v397
  %v399 = vtanh.pop %v368
  %v400 = vmul.f32 %v398, 0.0
  %402 = vrot.lane.b32.xlu0 %v399, 64
  %v403 = vpop.permute.xlu0 %402
  %v405 = vmul.f32 %v398, %v403
  %407 = vrot.lane.b32.xlu0 %v405, 32
  %v408 = vpop.permute.xlu0 %407
  %v410 = vadd.f32 %v400, %v408
  %v411 = vtanh.pop %v410
  %413 = vrot.lane.b32.xlu0 %v411, 64
  %v414 = vpop.permute.xlu0 %413
  %v416 = vmul.f32 %v398, %v414
  %418 = vrot.lane.b32.xlu0 %v392, 32
  %v419 = vpop.permute.xlu0 %418
  %vm421 = vcmask 254976
  %422 = vst.msk [vmem:[%s7] sm:$0x3] %vm421, %v419
  %424 = vrot.lane.b32.xlu0 %v416, 32
  %v425 = vpop.permute.xlu0 %424
  %s427 = scalar_lea.vmem %s8, 14
  %vm428 = vcmask 261126
  %429 = vst.msk [vmem:[%s427 - $0x6] sm:$0xc0] %vm428, %v425
  %v430 = vsel %vm36, %v419, 0
  %432 = vmatprep.subr.mxu0 0.0
  %433 = vmatpush1.msra.mxu0 %v213
  %434 = vmatprep.subr.mxu0 0.0
  %435 = vmatpush1.msra.mxu0 %v214
  %436 = vmatprep.subr.mxu0 0.0
  %437 = vmatpush1.msra.mxu0 %v215
  %438 = vmatprep.subr.mxu0 0.0
  %439 = vmatpush1.msra.mxu0 %v216
  %440 = vmatprep.subr.mxu0 0.0
  %441 = vmatpush1.msra.mxu0 0.0
  %442 = vmatprep.subr.mxu0 0.0
  %443 = vmatpush1.msra.mxu0 0.0
  %444 = vmatprep.subr.mxu0 0.0
  %445 = vmatpush1.msra.mxu0 0.0
  %446 = vmatprep.subr.mxu0 0.0
  %447 = vmatpush1.msra.mxu0 0.0
  %448 = vmatprep.subr.mxu0 0.0
  %449 = vmatpush1.msra.mxu0 0.0
  %450 = vmatprep.subr.mxu0 0.0
  %451 = vmatpush1.msra.mxu0 0.0
  %452 = vmatprep.subr.mxu0 0.0
  %453 = vmatpush1.msra.mxu0 0.0
  %454 = vmatprep.subr.mxu0 0.0
  %455 = vmatpush1.msra.mxu0 0.0
  %456 = vmatprep.subr.mxu0 0.0
  %457 = vmatpush1.msra.mxu0 0.0
  %458 = vmatprep.subr.mxu0 0.0
  %459 = vmatpush1.msra.mxu0 0.0
  %460 = vmatprep.subr.mxu0 0.0
  %461 = vmatpush1.msra.mxu0 0.0
  %462 = vmatprep.subr.mxu0 0.0
  %463 = vmatpush1.msra.mxu0 0.0
  %464 = vmatprep.subr.mxu0 0.0
  %465 = vmatpush1.msra.mxu0 0.0
  %466 = vmatprep.subr.mxu0 0.0
  %467 = vmatpush1.msra.mxu0 0.0
  %468 = vmatprep.subr.mxu0 0.0
  %469 = vmatpush1.msra.mxu0 0.0
  %470 = vmatprep.subr.mxu0 0.0
  %471 = vmatpush1.msra.mxu0 0.0
  %472 = vmatprep.subr.mxu0 0.0
  %473 = vmatpush1.msra.mxu0 0.0
  %474 = vmatprep.subr.mxu0 0.0
  %475 = vmatpush1.msra.mxu0 0.0
  %476 = vmatprep.subr.mxu0 0.0
  %477 = vmatpush1.msra.mxu0 0.0
  %478 = vmatprep.subr.mxu0 0.0
  %479 = vmatpush1.msra.mxu0 0.0
  %480 = vmatprep.subr.mxu0 0.0
  %481 = vmatpush1.msra.mxu0 0.0
  %482 = vmatprep.subr.mxu0 0.0
  %483 = vmatpush1.msra.mxu0 0.0
  %484 = vmatprep.subr.mxu0 0.0
  %485 = vmatpush1.msra.mxu0 0.0
  %486 = vmatprep.subr.mxu0 0.0
  %487 = vmatpush1.msra.mxu0 0.0
  %488 = vmatprep.subr.mxu0 0.0
  %489 = vmatpush1.msra.mxu0 0.0
  %490 = vmatprep.subr.mxu0 0.0
  %491 = vmatpush1.msra.mxu0 0.0
  %492 = vmatprep.subr.mxu0 0.0
  %493 = vmatpush1.msra.mxu0 0.0
  %494 = vmatprep.subr.mxu0 0.0
  %495 = vmatpush1.msra.mxu0 0.0
  %496 = vmatprep.mubr.f32.mxu0 0.0
  %497 = vmatmul.mubr.f32.gmra.mrb[0].mxu0 %v430
  %v498 = vpop.f32.mrb[0].mxu0
  %v499 = vadd.f32 0.0, %v498
  %v500 = vpop.f32.mrb[0].mxu0
  %501 = vdwg.mxu0
  %v503 = vrot.slane %v499, 6
  %v505 = vadd.f32 %v124, %v503
  %v506 = vrot.slane %v416, 6
  %507 = vrot.lane.b32.xlu0 %v506, 32
  %v508 = vpop.permute.xlu0 %507
  %v509 = vsel %vm36, %v508, 0
  %511 = vmatprep.subr.mxu0 0.0
  %512 = vmatpush1.msra.mxu0 %v217
  %513 = vmatprep.subr.mxu0 0.0
  %514 = vmatpush1.msra.mxu0 %v218
  %515 = vmatprep.subr.mxu0 0.0
  %516 = vmatpush1.msra.mxu0 %v219
  %517 = vmatprep.subr.mxu0 0.0
  %518 = vmatpush1.msra.mxu0 %v220
  %519 = vmatprep.subr.mxu0 0.0
  %520 = vmatpush1.msra.mxu0 0.0
  %521 = vmatprep.subr.mxu0 0.0
  %522 = vmatpush1.msra.mxu0 0.0
  %523 = vmatprep.subr.mxu0 0.0
  %524 = vmatpush1.msra.mxu0 0.0
  %525 = vmatprep.subr.mxu0 0.0
  %526 = vmatpush1.msra.mxu0 0.0
  %527 = vmatprep.subr.mxu0 0.0
  %528 = vmatpush1.msra.mxu0 0.0
  %529 = vmatprep.subr.mxu0 0.0
  %530 = vmatpush1.msra.mxu0 0.0
  %531 = vmatprep.subr.mxu0 0.0
  %532 = vmatpush1.msra.mxu0 0.0
  %533 = vmatprep.subr.mxu0 0.0
  %534 = vmatpush1.msra.mxu0 0.0
  %535 = vmatprep.subr.mxu0 0.0
  %536 = vmatpush1.msra.mxu0 0.0
  %537 = vmatprep.subr.mxu0 0.0
  %538 = vmatpush1.msra.mxu0 0.0
  %539 = vmatprep.subr.mxu0 0.0
  %540 = vmatpush1.msra.mxu0 0.0
  %541 = vmatprep.subr.mxu0 0.0
  %542 = vmatpush1.msra.mxu0 0.0
  %543 = vmatprep.subr.mxu0 0.0
  %544 = vmatpush1.msra.mxu0 0.0
  %545 = vmatprep.subr.mxu0 0.0
  %546 = vmatpush1.msra.mxu0 0.0
  %547 = vmatprep.subr.mxu0 0.0
  %548 = vmatpush1.msra.mxu0 0.0
  %549 = vmatprep.subr.mxu0 0.0
  %550 = vmatpush1.msra.mxu0 0.0
  %551 = vmatprep.subr.mxu0 0.0
  %552 = vmatpush1.msra.mxu0 0.0
  %553 = vmatprep.subr.mxu0 0.0
  %554 = vmatpush1.msra.mxu0 0.0
  %555 = vmatprep.subr.mxu0 0.0
  %556 = vmatpush1.msra.mxu0 0.0
  %557 = vmatprep.subr.mxu0 0.0
  %558 = vmatpush1.msra.mxu0 0.0
  %559 = vmatprep.subr.mxu0 0.0
  %560 = vmatpush1.msra.mxu0 0.0
  %561 = vmatprep.subr.mxu0 0.0
  %562 = vmatpush1.msra.mxu0 0.0
  %563 = vmatprep.subr.mxu0 0.0
  %564 = vmatpush1.msra.mxu0 0.0
  %565 = vmatprep.subr.mxu0 0.0
  %566 = vmatpush1.msra.mxu0 0.0
  %567 = vmatprep.subr.mxu0 0.0
  %568 = vmatpush1.msra.mxu0 0.0
  %569 = vmatprep.subr.mxu0 0.0
  %570 = vmatpush1.msra.mxu0 0.0
  %571 = vmatprep.subr.mxu0 0.0
  %572 = vmatpush1.msra.mxu0 0.0
  %573 = vmatprep.subr.mxu0 0.0
  %574 = vmatpush1.msra.mxu0 0.0
  %575 = vmatprep.mubr.f32.mxu0 0.0
  %576 = vmatmul.mubr.f32.gmra.mrb[0].mxu0 %v509
  %v577 = vpop.f32.mrb[0].mxu0
  %v578 = vadd.f32 0.0, %v577
  %v579 = vpop.f32.mrb[0].mxu0
  %580 = vdwg.mxu0
  %v582 = vrot.slane %v578, 4
  %v584 = vadd.f32 %v212, %v582
  %v585 = vxor.u32 %v505, 2147483648
  %v586 = vmul.f32 %v585, 1.442695
  %v587 = vpow.pop %v586
  %v588 = vadd.f32 %v587, 1.0
  %v589 = vrcp.pop %v588
  %v590 = vmul.f32 1.0, %v589
  %v591 = vtanh.pop %v505
  %v593 = vrot.slane %v386, 6
  %v595 = vmul.f32 %v590, %v593
  %597 = vrot.lane.b32.xlu0 %v591, 64
  %v598 = vpop.permute.xlu0 %597
  %v600 = vmul.f32 %v590, %v598
  %602 = vrot.lane.b32.xlu0 %v600, 32
  %v603 = vpop.permute.xlu0 %602
  %v605 = vadd.f32 %v595, %v603
  %v606 = vtanh.pop %v605
  %608 = vrot.lane.b32.xlu0 %v606, 64
  %v609 = vpop.permute.xlu0 %608
  %v611 = vmul.f32 %v590, %v609
  %v612 = vxor.u32 %v584, 2147483648
  %v613 = vmul.f32 %v612, 1.442695
  %v614 = vpow.pop %v613
  %v615 = vadd.f32 %v614, 1.0
  %v616 = vrcp.pop %v615
  %v617 = vmul.f32 1.0, %v616
  %v618 = vtanh.pop %v584
  %v620 = vrot.slane %v410, 2
  %v622 = vmul.f32 %v617, %v620
  %624 = vrot.lane.b32.xlu0 %v618, 64
  %v625 = vpop.permute.xlu0 %624
  %v627 = vmul.f32 %v617, %v625
  %629 = vrot.lane.b32.xlu0 %v627, 32
  %v630 = vpop.permute.xlu0 %629
  %v632 = vadd.f32 %v622, %v630
  %v633 = vtanh.pop %v632
  %635 = vrot.lane.b32.xlu0 %v633, 64
  %v636 = vpop.permute.xlu0 %635
  %v638 = vmul.f32 %v617, %v636
  %640 = vrot.lane.b32.xlu0 %v611, 32
  %v641 = vpop.permute.xlu0 %640
  %s643 = scalar_lea.vmem %s7, 2
  %vm644 = vcmask 257026
  %645 = vst.msk [vmem:[%s643 - $0x2] sm:$0xc] %vm644, %v641
  %647 = vrot.lane.b32.xlu0 %v638, 32
  %v648 = vpop.permute.xlu0 %647
  %s650 = scalar_lea.vmem %s8, 12
  %vm651 = vcmask 259076
  %652 = vst.msk [vmem:[%s650 - $0x4] sm:$0x30] %vm651, %v648
  %v653 = vrot.slane %v611, 2
  %654 = vrot.lane.b32.xlu0 %v653, 32
  %v655 = vpop.permute.xlu0 %654
  %v656 = vsel %vm36, %v655, 0
  %658 = vmatprep.subr.mxu0 0.0
  %659 = vmatpush1.msra.mxu0 %v213
  %660 = vmatprep.subr.mxu0 0.0
  %661 = vmatpush1.msra.mxu0 %v214
  %662 = vmatprep.subr.mxu0 0.0
  %663 = vmatpush1.msra.mxu0 %v215
  %664 = vmatprep.subr.mxu0 0.0
  %665 = vmatpush1.msra.mxu0 %v216
  %666 = vmatprep.subr.mxu0 0.0
  %667 = vmatpush1.msra.mxu0 0.0
  %668 = vmatprep.subr.mxu0 0.0
  %669 = vmatpush1.msra.mxu0 0.0
  %670 = vmatprep.subr.mxu0 0.0
  %671 = vmatpush1.msra.mxu0 0.0
  %672 = vmatprep.subr.mxu0 0.0
  %673 = vmatpush1.msra.mxu0 0.0
  %674 = vmatprep.subr.mxu0 0.0
  %675 = vmatpush1.msra.mxu0 0.0
  %676 = vmatprep.subr.mxu0 0.0
  %677 = vmatpush1.msra.mxu0 0.0
  %678 = vmatprep.subr.mxu0 0.0
  %679 = vmatpush1.msra.mxu0 0.0
  %680 = vmatprep.subr.mxu0 0.0
  %681 = vmatpush1.msra.mxu0 0.0
  %682 = vmatprep.subr.mxu0 0.0
  %683 = vmatpush1.msra.mxu0 0.0
  %684 = vmatprep.subr.mxu0 0.0
  %685 = vmatpush1.msra.mxu0 0.0
  %686 = vmatprep.subr.mxu0 0.0
  %687 = vmatpush1.msra.mxu0 0.0
  %688 = vmatprep.subr.mxu0 0.0
  %689 = vmatpush1.msra.mxu0 0.0
  %690 = vmatprep.subr.mxu0 0.0
  %691 = vmatpush1.msra.mxu0 0.0
  %692 = vmatprep.subr.mxu0 0.0
  %693 = vmatpush1.msra.mxu0 0.0
  %694 = vmatprep.subr.mxu0 0.0
  %695 = vmatpush1.msra.mxu0 0.0
  %696 = vmatprep.subr.mxu0 0.0
  %697 = vmatpush1.msra.mxu0 0.0
  %698 = vmatprep.subr.mxu0 0.0
  %699 = vmatpush1.msra.mxu0 0.0
  %700 = vmatprep.subr.mxu0 0.0
  %701 = vmatpush1.msra.mxu0 0.0
  %702 = vmatprep.subr.mxu0 0.0
  %703 = vmatpush1.msra.mxu0 0.0
  %704 = vmatprep.subr.mxu0 0.0
  %705 = vmatpush1.msra.mxu0 0.0
  %706 = vmatprep.subr.mxu0 0.0
  %707 = vmatpush1.msra.mxu0 0.0
  %708 = vmatprep.subr.mxu0 0.0
  %709 = vmatpush1.msra.mxu0 0.0
  %710 = vmatprep.subr.mxu0 0.0
  %711 = vmatpush1.msra.mxu0 0.0
  %712 = vmatprep.subr.mxu0 0.0
  %713 = vmatpush1.msra.mxu0 0.0
  %714 = vmatprep.subr.mxu0 0.0
  %715 = vmatpush1.msra.mxu0 0.0
  %716 = vmatprep.subr.mxu0 0.0
  %717 = vmatpush1.msra.mxu0 0.0
  %718 = vmatprep.subr.mxu0 0.0
  %719 = vmatpush1.msra.mxu0 0.0
  %720 = vmatprep.subr.mxu0 0.0
  %721 = vmatpush1.msra.mxu0 0.0
  %722 = vmatprep.mubr.f32.mxu0 0.0
  %723 = vmatmul.mubr.f32.gmra.mrb[0].mxu0 %v656
  %v724 = vpop.f32.mrb[0].mxu0
  %v725 = vadd.f32 0.0, %v724
  %v726 = vpop.f32.mrb[0].mxu0
  %727 = vdwg.mxu0
  %v729 = vrot.slane %v725, 4
  %v731 = vadd.f32 %v124, %v729
  %v732 = vrot.slane %v638, 4
  %733 = vrot.lane.b32.xlu0 %v732, 32
  %v734 = vpop.permute.xlu0 %733
  %v735 = vsel %vm36, %v734, 0
  %737 = vmatprep.subr.mxu0 0.0
  %738 = vmatpush1.msra.mxu0 %v217
  %739 = vmatprep.subr.mxu0 0.0
  %740 = vmatpush1.msra.mxu0 %v218
  %741 = vmatprep.subr.mxu0 0.0
  %742 = vmatpush1.msra.mxu0 %v219
  %743 = vmatprep.subr.mxu0 0.0
  %744 = vmatpush1.msra.mxu0 %v220
  %745 = vmatprep.subr.mxu0 0.0
  %746 = vmatpush1.msra.mxu0 0.0
  %747 = vmatprep.subr.mxu0 0.0
  %748 = vmatpush1.msra.mxu0 0.0
  %749 = vmatprep.subr.mxu0 0.0
  %750 = vmatpush1.msra.mxu0 0.0
  %751 = vmatprep.subr.mxu0 0.0
  %752 = vmatpush1.msra.mxu0 0.0
  %753 = vmatprep.subr.mxu0 0.0
  %754 = vmatpush1.msra.mxu0 0.0
  %755 = vmatprep.subr.mxu0 0.0
  %756 = vmatpush1.msra.mxu0 0.0
  %757 = vmatprep.subr.mxu0 0.0
  %758 = vmatpush1.msra.mxu0 0.0
  %759 = vmatprep.subr.mxu0 0.0
  %760 = vmatpush1.msra.mxu0 0.0
  %761 = vmatprep.subr.mxu0 0.0
  %762 = vmatpush1.msra.mxu0 0.0
  %763 = vmatprep.subr.mxu0 0.0
  %764 = vmatpush1.msra.mxu0 0.0
  %765 = vmatprep.subr.mxu0 0.0
  %766 = vmatpush1.msra.mxu0 0.0
  %767 = vmatprep.subr.mxu0 0.0
  %768 = vmatpush1.msra.mxu0 0.0
  %769 = vmatprep.subr.mxu0 0.0
  %770 = vmatpush1.msra.mxu0 0.0
  %771 = vmatprep.subr.mxu0 0.0
  %772 = vmatpush1.msra.mxu0 0.0
  %773 = vmatprep.subr.mxu0 0.0
  %774 = vmatpush1.msra.mxu0 0.0
  %775 = vmatprep.subr.mxu0 0.0
  %776 = vmatpush1.msra.mxu0 0.0
  %777 = vmatprep.subr.mxu0 0.0
  %778 = vmatpush1.msra.mxu0 0.0
  %779 = vmatprep.subr.mxu0 0.0
  %780 = vmatpush1.msra.mxu0 0.0
  %781 = vmatprep.subr.mxu0 0.0
  %782 = vmatpush1.msra.mxu0 0.0
  %783 = vmatprep.subr.mxu0 0.0
  %784 = vmatpush1.msra.mxu0 0.0
  %785 = vmatprep.subr.mxu0 0.0
  %786 = vmatpush1.msra.mxu0 0.0
  %787 = vmatprep.subr.mxu0 0.0
  %788 = vmatpush1.msra.mxu0 0.0
  %789 = vmatprep.subr.mxu0 0.0
  %790 = vmatpush1.msra.mxu0 0.0
  %791 = vmatprep.subr.mxu0 0.0
  %792 = vmatpush1.msra.mxu0 0.0
  %793 = vmatprep.subr.mxu0 0.0
  %794 = vmatpush1.msra.mxu0 0.0
  %795 = vmatprep.subr.mxu0 0.0
  %796 = vmatpush1.msra.mxu0 0.0
  %797 = vmatprep.subr.mxu0 0.0
  %798 = vmatpush1.msra.mxu0 0.0
  %799 = vmatprep.subr.mxu0 0.0
  %800 = vmatpush1.msra.mxu0 0.0
  %801 = vmatprep.mubr.f32.mxu0 0.0
  %802 = vmatmul.mubr.f32.gmra.mrb[0].mxu0 %v735
  %v803 = vpop.f32.mrb[0].mxu0
  %v804 = vadd.f32 0.0, %v803
  %v805 = vpop.f32.mrb[0].mxu0
  %806 = vdwg.mxu0
  %v808 = vrot.slane %v804, 6
  %v810 = vadd.f32 %v212, %v808
  %v811 = vxor.u32 %v731, 2147483648
  %v812 = vmul.f32 %v811, 1.442695
  %v813 = vpow.pop %v812
  %v814 = vadd.f32 %v813, 1.0
  %v815 = vrcp.pop %v814
  %v816 = vmul.f32 1.0, %v815
  %v817 = vtanh.pop %v731
  %v819 = vrot.slane %v605, 6
  %v821 = vmul.f32 %v816, %v819
  %823 = vrot.lane.b32.xlu0 %v817, 64
  %v824 = vpop.permute.xlu0 %823
  %v826 = vmul.f32 %v816, %v824
  %828 = vrot.lane.b32.xlu0 %v826, 32
  %v829 = vpop.permute.xlu0 %828
  %v831 = vadd.f32 %v821, %v829
  %v832 = vtanh.pop %v831
  %834 = vrot.lane.b32.xlu0 %v832, 64
  %v835 = vpop.permute.xlu0 %834
  %v837 = vmul.f32 %v816, %v835
  %v838 = vxor.u32 %v810, 2147483648
  %v839 = vmul.f32 %v838, 1.442695
  %v840 = vpow.pop %v839
  %v841 = vadd.f32 %v840, 1.0
  %v842 = vrcp.pop %v841
  %v843 = vmul.f32 1.0, %v842
  %v844 = vtanh.pop %v810
  %v846 = vrot.slane %v632, 2
  %v848 = vmul.f32 %v843, %v846
  %850 = vrot.lane.b32.xlu0 %v844, 64
  %v851 = vpop.permute.xlu0 %850
  %v853 = vmul.f32 %v843, %v851
  %855 = vrot.lane.b32.xlu0 %v853, 32
  %v856 = vpop.permute.xlu0 %855
  %v858 = vadd.f32 %v848, %v856
  %v859 = vtanh.pop %v858
  %861 = vrot.lane.b32.xlu0 %v859, 64
  %v862 = vpop.permute.xlu0 %861
  %v864 = vmul.f32 %v843, %v862
  %866 = vrot.lane.b32.xlu0 %v837, 32
  %v867 = vpop.permute.xlu0 %866
  %s869 = scalar_lea.vmem %s7, 4
  %870 = vst.msk [vmem:[%s869 - $0x4] sm:$0x30] %vm651, %v867
  %872 = vrot.lane.b32.xlu0 %v864, 32
  %v873 = vpop.permute.xlu0 %872
  %s875 = scalar_lea.vmem %s8, 10
  %876 = vst.msk [vmem:[%s875 - $0x2] sm:$0xc] %vm644, %v873
  %v877 = vrot.slane %v837, 4
  %878 = vrot.lane.b32.xlu0 %v877, 32
  %v879 = vpop.permute.xlu0 %878
  %v880 = vsel %vm36, %v879, 0
  %882 = vmatprep.subr.mxu0 0.0
  %883 = vmatpush1.msra.mxu0 %v213
  %884 = vmatprep.subr.mxu0 0.0
  %885 = vmatpush1.msra.mxu0 %v214
  %886 = vmatprep.subr.mxu0 0.0
  %887 = vmatpush1.msra.mxu0 %v215
  %888 = vmatprep.subr.mxu0 0.0
  %889 = vmatpush1.msra.mxu0 %v216
  %890 = vmatprep.subr.mxu0 0.0
  %891 = vmatpush1.msra.mxu0 0.0
  %892 = vmatprep.subr.mxu0 0.0
  %893 = vmatpush1.msra.mxu0 0.0
  %894 = vmatprep.subr.mxu0 0.0
  %895 = vmatpush1.msra.mxu0 0.0
  %896 = vmatprep.subr.mxu0 0.0
  %897 = vmatpush1.msra.mxu0 0.0
  %898 = vmatprep.subr.mxu0 0.0
  %899 = vmatpush1.msra.mxu0 0.0
  %900 = vmatprep.subr.mxu0 0.0
  %901 = vmatpush1.msra.mxu0 0.0
  %902 = vmatprep.subr.mxu0 0.0
  %903 = vmatpush1.msra.mxu0 0.0
  %904 = vmatprep.subr.mxu0 0.0
  %905 = vmatpush1.msra.mxu0 0.0
  %906 = vmatprep.subr.mxu0 0.0
  %907 = vmatpush1.msra.mxu0 0.0
  %908 = vmatprep.subr.mxu0 0.0
  %909 = vmatpush1.msra.mxu0 0.0
  %910 = vmatprep.subr.mxu0 0.0
  %911 = vmatpush1.msra.mxu0 0.0
  %912 = vmatprep.subr.mxu0 0.0
  %913 = vmatpush1.msra.mxu0 0.0
  %914 = vmatprep.subr.mxu0 0.0
  %915 = vmatpush1.msra.mxu0 0.0
  %916 = vmatprep.subr.mxu0 0.0
  %917 = vmatpush1.msra.mxu0 0.0
  %918 = vmatprep.subr.mxu0 0.0
  %919 = vmatpush1.msra.mxu0 0.0
  %920 = vmatprep.subr.mxu0 0.0
  %921 = vmatpush1.msra.mxu0 0.0
  %922 = vmatprep.subr.mxu0 0.0
  %923 = vmatpush1.msra.mxu0 0.0
  %924 = vmatprep.subr.mxu0 0.0
  %925 = vmatpush1.msra.mxu0 0.0
  %926 = vmatprep.subr.mxu0 0.0
  %927 = vmatpush1.msra.mxu0 0.0
  %928 = vmatprep.subr.mxu0 0.0
  %929 = vmatpush1.msra.mxu0 0.0
  %930 = vmatprep.subr.mxu0 0.0
  %931 = vmatpush1.msra.mxu0 0.0
  %932 = vmatprep.subr.mxu0 0.0
  %933 = vmatpush1.msra.mxu0 0.0
  %934 = vmatprep.subr.mxu0 0.0
  %935 = vmatpush1.msra.mxu0 0.0
  %936 = vmatprep.subr.mxu0 0.0
  %937 = vmatpush1.msra.mxu0 0.0
  %938 = vmatprep.subr.mxu0 0.0
  %939 = vmatpush1.msra.mxu0 0.0
  %940 = vmatprep.subr.mxu0 0.0
  %941 = vmatpush1.msra.mxu0 0.0
  %942 = vmatprep.subr.mxu0 0.0
  %943 = vmatpush1.msra.mxu0 0.0
  %944 = vmatprep.subr.mxu0 0.0
  %945 = vmatpush1.msra.mxu0 0.0
  %946 = vmatprep.mubr.f32.mxu0 0.0
  %947 = vmatmul.mubr.f32.gmra.mrb[0].mxu0 %v880
  %v948 = vpop.f32.mrb[0].mxu0
  %v949 = vadd.f32 0.0, %v948
  %v950 = vpop.f32.mrb[0].mxu0
  %951 = vdwg.mxu0
  %v953 = vrot.slane %v949, 2
  %v955 = vadd.f32 %v124, %v953
  %v956 = vrot.slane %v864, 2
  %957 = vrot.lane.b32.xlu0 %v956, 32
  %v958 = vpop.permute.xlu0 %957
  %v959 = vsel %vm36, %v958, 0
  %961 = vmatprep.subr.mxu0 0.0
  %962 = vmatpush1.msra.mxu0 %v217
  %963 = vmatprep.subr.mxu0 0.0
  %964 = vmatpush1.msra.mxu0 %v218
  %965 = vmatprep.subr.mxu0 0.0
  %966 = vmatpush1.msra.mxu0 %v219
  %967 = vmatprep.subr.mxu0 0.0
  %968 = vmatpush1.msra.mxu0 %v220
  %969 = vmatprep.subr.mxu0 0.0
  %970 = vmatpush1.msra.mxu0 0.0
  %971 = vmatprep.subr.mxu0 0.0
  %972 = vmatpush1.msra.mxu0 0.0
  %973 = vmatprep.subr.mxu0 0.0
  %974 = vmatpush1.msra.mxu0 0.0
  %975 = vmatprep.subr.mxu0 0.0
  %976 = vmatpush1.msra.mxu0 0.0
  %977 = vmatprep.subr.mxu0 0.0
  %978 = vmatpush1.msra.mxu0 0.0
  %979 = vmatprep.subr.mxu0 0.0
  %980 = vmatpush1.msra.mxu0 0.0
  %981 = vmatprep.subr.mxu0 0.0
  %982 = vmatpush1.msra.mxu0 0.0
  %983 = vmatprep.subr.mxu0 0.0
  %984 = vmatpush1.msra.mxu0 0.0
  %985 = vmatprep.subr.mxu0 0.0
  %986 = vmatpush1.msra.mxu0 0.0
  %987 = vmatprep.subr.mxu0 0.0
  %988 = vmatpush1.msra.mxu0 0.0
  %989 = vmatprep.subr.mxu0 0.0
  %990 = vmatpush1.msra.mxu0 0.0
  %991 = vmatprep.subr.mxu0 0.0
  %992 = vmatpush1.msra.mxu0 0.0
  %993 = vmatprep.subr.mxu0 0.0
  %994 = vmatpush1.msra.mxu0 0.0
  %995 = vmatprep.subr.mxu0 0.0
  %996 = vmatpush1.msra.mxu0 0.0
  %997 = vmatprep.subr.mxu0 0.0
  %998 = vmatpush1.msra.mxu0 0.0
  %999 = vmatprep.subr.mxu0 0.0
  %1000 = vmatpush1.msra.mxu0 0.0
  %1001 = vmatprep.subr.mxu0 0.0
  %1002 = vmatpush1.msra.mxu0 0.0
  %1003 = vmatprep.subr.mxu0 0.0
  %1004 = vmatpush1.msra.mxu0 0.0
  %1005 = vmatprep.subr.mxu0 0.0
  %1006 = vmatpush1.msra.mxu0 0.0
  %1007 = vmatprep.subr.mxu0 0.0
  %1008 = vmatpush1.msra.mxu0 0.0
  %1009 = vmatprep.subr.mxu0 0.0
  %1010 = vmatpush1.msra.mxu0 0.0
  %1011 = vmatprep.subr.mxu0 0.0
  %1012 = vmatpush1.msra.mxu0 0.0
  %1013 = vmatprep.subr.mxu0 0.0
  %1014 = vmatpush1.msra.mxu0 0.0
  %1015 = vmatprep.subr.mxu0 0.0
  %1016 = vmatpush1.msra.mxu0 0.0
  %1017 = vmatprep.subr.mxu0 0.0
  %1018 = vmatpush1.msra.mxu0 0.0
  %1019 = vmatprep.subr.mxu0 0.0
  %1020 = vmatpush1.msra.mxu0 0.0
  %1021 = vmatprep.subr.mxu0 0.0
  %1022 = vmatpush1.msra.mxu0 0.0
  %1023 = vmatprep.subr.mxu0 0.0
  %1024 = vmatpush1.msra.mxu0 0.0
  %1025 = vmatprep.mubr.f32.mxu0 0.0
  %1026 = vmatmul.mubr.f32.gmra.mrb[0].mxu0 %v959
  %v1027 = vpop.f32.mrb[0].mxu0
  %v1028 = vadd.f32 0.0, %v1027
  %v1029 = vpop.f32.mrb[0].mxu0
  %1030 = vdwg.mxu0
  %v1031 = vadd.f32 %v212, %v1028
  %v1032 = vxor.u32 %v955, 2147483648
  %v1033 = vmul.f32 %v1032, 1.442695
  %v1034 = vpow.pop %v1033
  %v1035 = vadd.f32 %v1034, 1.0
  %v1036 = vrcp.pop %v1035
  %v1037 = vmul.f32 1.0, %v1036
  %v1038 = vtanh.pop %v955
  %v1040 = vrot.slane %v831, 6
  %v1042 = vmul.f32 %v1037, %v1040
  %1044 = vrot.lane.b32.xlu0 %v1038, 64
  %v1045 = vpop.permute.xlu0 %1044
  %v1047 = vmul.f32 %v1037, %v1045
  %1049 = vrot.lane.b32.xlu0 %v1047, 32
  %v1050 = vpop.permute.xlu0 %1049
  %v1052 = vadd.f32 %v1042, %v1050
  %v1053 = vtanh.pop %v1052
  %1055 = vrot.lane.b32.xlu0 %v1053, 64
  %v1056 = vpop.permute.xlu0 %1055
  %v1058 = vmul.f32 %v1037, %v1056
  %v1059 = vxor.u32 %v1031, 2147483648
  %v1060 = vmul.f32 %v1059, 1.442695
  %v1061 = vpow.pop %v1060
  %v1062 = vadd.f32 %v1061, 1.0
  %v1063 = vrcp.pop %v1062
  %v1064 = vmul.f32 1.0, %v1063
  %v1065 = vtanh.pop %v1031
  %v1067 = vrot.slane %v858, 2
  %v1069 = vmul.f32 %v1064, %v1067
  %1071 = vrot.lane.b32.xlu0 %v1065, 64
  %v1072 = vpop.permute.xlu0 %1071
  %v1074 = vmul.f32 %v1064, %v1072
  %1076 = vrot.lane.b32.xlu0 %v1074, 32
  %v1077 = vpop.permute.xlu0 %1076
  %v1079 = vadd.f32 %v1069, %v1077
  %v1080 = vtanh.pop %v1079
  %1082 = vrot.lane.b32.xlu0 %v1080, 64
  %v1083 = vpop.permute.xlu0 %1082
  %v1085 = vmul.f32 %v1064, %v1083
  %1087 = vrot.lane.b32.xlu0 %v1058, 32
  %v1088 = vpop.permute.xlu0 %1087
  %s1090 = scalar_lea.vmem %s7, 6
  %1091 = vst.msk [vmem:[%s1090 - $0x6] sm:$0xc0] %vm428, %v1088
  %1093 = vrot.lane.b32.xlu0 %v1085, 32
  %v1094 = vpop.permute.xlu0 %1093
  %s1096 = scalar_lea.vmem %s8, 8
  %1097 = vst.msk [vmem:[%s1096] sm:$0x3] %vm421, %v1094
  %v1098 = vrot.slane %v1058, 6
  %1099 = vrot.lane.b32.xlu0 %v1098, 32
  %v1100 = vpop.permute.xlu0 %1099
  %v1101 = vsel %vm36, %v1100, 0
  %1103 = vmatprep.subr.mxu0 0.0
  %1104 = vmatpush1.msra.mxu0 %v213
  %1105 = vmatprep.subr.mxu0 0.0
  %1106 = vmatpush1.msra.mxu0 %v214
  %1107 = vmatprep.subr.mxu0 0.0
  %1108 = vmatpush1.msra.mxu0 %v215
  %1109 = vmatprep.subr.mxu0 0.0
  %1110 = vmatpush1.msra.mxu0 %v216
  %1111 = vmatprep.subr.mxu0 0.0
  %1112 = vmatpush1.msra.mxu0 0.0
  %1113 = vmatprep.subr.mxu0 0.0
  %1114 = vmatpush1.msra.mxu0 0.0
  %1115 = vmatprep.subr.mxu0 0.0
  %1116 = vmatpush1.msra.mxu0 0.0
  %1117 = vmatprep.subr.mxu0 0.0
  %1118 = vmatpush1.msra.mxu0 0.0
  %1119 = vmatprep.subr.mxu0 0.0
  %1120 = vmatpush1.msra.mxu0 0.0
  %1121 = vmatprep.subr.mxu0 0.0
  %1122 = vmatpush1.msra.mxu0 0.0
  %1123 = vmatprep.subr.mxu0 0.0
  %1124 = vmatpush1.msra.mxu0 0.0
  %1125 = vmatprep.subr.mxu0 0.0
  %1126 = vmatpush1.msra.mxu0 0.0
  %1127 = vmatprep.subr.mxu0 0.0
  %1128 = vmatpush1.msra.mxu0 0.0
  %1129 = vmatprep.subr.mxu0 0.0
  %1130 = vmatpush1.msra.mxu0 0.0
  %1131 = vmatprep.subr.mxu0 0.0
  %1132 = vmatpush1.msra.mxu0 0.0
  %1133 = vmatprep.subr.mxu0 0.0
  %1134 = vmatpush1.msra.mxu0 0.0
  %1135 = vmatprep.subr.mxu0 0.0
  %1136 = vmatpush1.msra.mxu0 0.0
  %1137 = vmatprep.subr.mxu0 0.0
  %1138 = vmatpush1.msra.mxu0 0.0
  %1139 = vmatprep.subr.mxu0 0.0
  %1140 = vmatpush1.msra.mxu0 0.0
  %1141 = vmatprep.subr.mxu0 0.0
  %1142 = vmatpush1.msra.mxu0 0.0
  %1143 = vmatprep.subr.mxu0 0.0
  %1144 = vmatpush1.msra.mxu0 0.0
  %1145 = vmatprep.subr.mxu0 0.0
  %1146 = vmatpush1.msra.mxu0 0.0
  %1147 = vmatprep.subr.mxu0 0.0
  %1148 = vmatpush1.msra.mxu0 0.0
  %1149 = vmatprep.subr.mxu0 0.0
  %1150 = vmatpush1.msra.mxu0 0.0
  %1151 = vmatprep.subr.mxu0 0.0
  %1152 = vmatpush1.msra.mxu0 0.0
  %1153 = vmatprep.subr.mxu0 0.0
  %1154 = vmatpush1.msra.mxu0 0.0
  %1155 = vmatprep.subr.mxu0 0.0
  %1156 = vmatpush1.msra.mxu0 0.0
  %1157 = vmatprep.subr.mxu0 0.0
  %1158 = vmatpush1.msra.mxu0 0.0
  %1159 = vmatprep.subr.mxu0 0.0
  %1160 = vmatpush1.msra.mxu0 0.0
  %1161 = vmatprep.subr.mxu0 0.0
  %1162 = vmatpush1.msra.mxu0 0.0
  %1163 = vmatprep.subr.mxu0 0.0
  %1164 = vmatpush1.msra.mxu0 0.0
  %1165 = vmatprep.subr.mxu0 0.0
  %1166 = vmatpush1.msra.mxu0 0.0
  %1167 = vmatprep.mubr.f32.mxu0 0.0
  %1168 = vmatmul.mubr.f32.gmra.mrb[0].mxu0 %v1101
  %v1169 = vpop.f32.mrb[0].mxu0
  %v1170 = vadd.f32 0.0, %v1169
  %v1171 = vpop.f32.mrb[0].mxu0
  %1172 = vdwg.mxu0
  %v1173 = vadd.f32 %v125, %v1170
  %v1174 = vsel %vm36, %v1094, 0
  %1176 = vmatprep.subr.mxu0 0.0
  %1177 = vmatpush1.msra.mxu0 %v217
  %1178 = vmatprep.subr.mxu0 0.0
  %1179 = vmatpush1.msra.mxu0 %v218
  %1180 = vmatprep.subr.mxu0 0.0
  %1181 = vmatpush1.msra.mxu0 %v219
  %1182 = vmatprep.subr.mxu0 0.0
  %1183 = vmatpush1.msra.mxu0 %v220
  %1184 = vmatprep.subr.mxu0 0.0
  %1185 = vmatpush1.msra.mxu0 0.0
  %1186 = vmatprep.subr.mxu0 0.0
  %1187 = vmatpush1.msra.mxu0 0.0
  %1188 = vmatprep.subr.mxu0 0.0
  %1189 = vmatpush1.msra.mxu0 0.0
  %1190 = vmatprep.subr.mxu0 0.0
  %1191 = vmatpush1.msra.mxu0 0.0
  %1192 = vmatprep.subr.mxu0 0.0
  %1193 = vmatpush1.msra.mxu0 0.0
  %1194 = vmatprep.subr.mxu0 0.0
  %1195 = vmatpush1.msra.mxu0 0.0
  %1196 = vmatprep.subr.mxu0 0.0
  %1197 = vmatpush1.msra.mxu0 0.0
  %1198 = vmatprep.subr.mxu0 0.0
  %1199 = vmatpush1.msra.mxu0 0.0
  %1200 = vmatprep.subr.mxu0 0.0
  %1201 = vmatpush1.msra.mxu0 0.0
  %1202 = vmatprep.subr.mxu0 0.0
  %1203 = vmatpush1.msra.mxu0 0.0
  %1204 = vmatprep.subr.mxu0 0.0
  %1205 = vmatpush1.msra.mxu0 0.0
  %1206 = vmatprep.subr.mxu0 0.0
  %1207 = vmatpush1.msra.mxu0 0.0
  %1208 = vmatprep.subr.mxu0 0.0
  %1209 = vmatpush1.msra.mxu0 0.0
  %1210 = vmatprep.subr.mxu0 0.0
  %1211 = vmatpush1.msra.mxu0 0.0
  %1212 = vmatprep.subr.mxu0 0.0
  %1213 = vmatpush1.msra.mxu0 0.0
  %1214 = vmatprep.subr.mxu0 0.0
  %1215 = vmatpush1.msra.mxu0 0.0
  %1216 = vmatprep.subr.mxu0 0.0
  %1217 = vmatpush1.msra.mxu0 0.0
  %1218 = vmatprep.subr.mxu0 0.0
  %1219 = vmatpush1.msra.mxu0 0.0
  %1220 = vmatprep.subr.mxu0 0.0
  %1221 = vmatpush1.msra.mxu0 0.0
  %1222 = vmatprep.subr.mxu0 0.0
  %1223 = vmatpush1.msra.mxu0 0.0
  %1224 = vmatprep.subr.mxu0 0.0
  %1225 = vmatpush1.msra.mxu0 0.0
  %1226 = vmatprep.subr.mxu0 0.0
  %1227 = vmatpush1.msra.mxu0 0.0
  %1228 = vmatprep.subr.mxu0 0.0
  %1229 = vmatpush1.msra.mxu0 0.0
  %1230 = vmatprep.subr.mxu0 0.0
  %1231 = vmatpush1.msra.mxu0 0.0
  %1232 = vmatprep.subr.mxu0 0.0
  %1233 = vmatpush1.msra.mxu0 0.0
  %1234 = vmatprep.subr.mxu0 0.0
  %1235 = vmatpush1.msra.mxu0 0.0
  %1236 = vmatprep.subr.mxu0 0.0
  %1237 = vmatpush1.msra.mxu0 0.0
  %1238 = vmatprep.subr.mxu0 0.0
  %1239 = vmatpush1.msra.mxu0 0.0
  %1240 = vmatprep.mubr.f32.mxu0 0.0
  %1241 = vmatmul.mubr.f32.gmra.mrb[0].mxu0 %v1174
  %v1242 = vpop.f32.mrb[0].mxu0
  %v1243 = vadd.f32 0.0, %v1242
  %v1244 = vpop.f32.mrb[0].mxu0
  %1245 = vdwg.mxu0
  %v1247 = vrot.slane %v1243, 2
  %v1249 = vadd.f32 %v211, %v1247
  %v1250 = vxor.u32 %v1173, 2147483648
  %v1251 = vmul.f32 %v1250, 1.442695
  %v1252 = vpow.pop %v1251
  %v1253 = vadd.f32 %v1252, 1.0
  %v1254 = vrcp.pop %v1253
  %v1255 = vmul.f32 1.0, %v1254
  %v1256 = vtanh.pop %v1173
  %v1258 = vrot.slane %v1052, 6
  %v1260 = vmul.f32 %v1255, %v1258
  %1262 = vrot.lane.b32.xlu0 %v1256, 64
  %v1263 = vpop.permute.xlu0 %1262
  %v1265 = vmul.f32 %v1255, %v1263
  %1267 = vrot.lane.b32.xlu0 %v1265, 32
  %v1268 = vpop.permute.xlu0 %1267
  %v1270 = vadd.f32 %v1260, %v1268
  %v1271 = vtanh.pop %v1270
  %1273 = vrot.lane.b32.xlu0 %v1271, 64
  %v1274 = vpop.permute.xlu0 %1273
  %v1276 = vmul.f32 %v1255, %v1274
  %v1277 = vxor.u32 %v1249, 2147483648
  %v1278 = vmul.f32 %v1277, 1.442695
  %v1279 = vpow.pop %v1278
  %v1280 = vadd.f32 %v1279, 1.0
  %v1281 = vrcp.pop %v1280
  %v1282 = vmul.f32 1.0, %v1281
  %v1283 = vtanh.pop %v1249
  %v1285 = vrot.slane %v1079, 2
  %v1287 = vmul.f32 %v1282, %v1285
  %1289 = vrot.lane.b32.xlu0 %v1283, 64
  %v1290 = vpop.permute.xlu0 %1289
  %v1292 = vmul.f32 %v1282, %v1290
  %1294 = vrot.lane.b32.xlu0 %v1292, 32
  %v1295 = vpop.permute.xlu0 %1294
  %v1297 = vadd.f32 %v1287, %v1295
  %v1298 = vtanh.pop %v1297
  %1300 = vrot.lane.b32.xlu0 %v1298, 64
  %v1301 = vpop.permute.xlu0 %1300
  %v1303 = vmul.f32 %v1282, %v1301
  %1305 = vrot.lane.b32.xlu0 %v1276, 32
  %v1306 = vpop.permute.xlu0 %1305
  %s1308 = scalar_lea.vmem %s7, 8
  %1309 = vst.msk [vmem:[%s1308] sm:$0x3] %vm421, %v1306
  %1311 = vrot.lane.b32.xlu0 %v1303, 32
  %v1312 = vpop.permute.xlu0 %1311
  %s1314 = scalar_lea.vmem %s8, 6
  %1315 = vst.msk [vmem:[%s1314 - $0x6] sm:$0xc0] %vm428, %v1312
  %v1316 = vsel %vm36, %v1306, 0
  %1318 = vmatprep.subr.mxu0 0.0
  %1319 = vmatpush1.msra.mxu0 %v213
  %1320 = vmatprep.subr.mxu0 0.0
  %1321 = vmatpush1.msra.mxu0 %v214
  %1322 = vmatprep.subr.mxu0 0.0
  %1323 = vmatpush1.msra.mxu0 %v215
  %1324 = vmatprep.subr.mxu0 0.0
  %1325 = vmatpush1.msra.mxu0 %v216
  %1326 = vmatprep.subr.mxu0 0.0
  %1327 = vmatpush1.msra.mxu0 0.0
  %1328 = vmatprep.subr.mxu0 0.0
  %1329 = vmatpush1.msra.mxu0 0.0
  %1330 = vmatprep.subr.mxu0 0.0
  %1331 = vmatpush1.msra.mxu0 0.0
  %1332 = vmatprep.subr.mxu0 0.0
  %1333 = vmatpush1.msra.mxu0 0.0
  %1334 = vmatprep.subr.mxu0 0.0
  %1335 = vmatpush1.msra.mxu0 0.0
  %1336 = vmatprep.subr.mxu0 0.0
  %1337 = vmatpush1.msra.mxu0 0.0
  %1338 = vmatprep.subr.mxu0 0.0
  %1339 = vmatpush1.msra.mxu0 0.0
  %1340 = vmatprep.subr.mxu0 0.0
  %1341 = vmatpush1.msra.mxu0 0.0
  %1342 = vmatprep.subr.mxu0 0.0
  %1343 = vmatpush1.msra.mxu0 0.0
  %1344 = vmatprep.subr.mxu0 0.0
  %1345 = vmatpush1.msra.mxu0 0.0
  %1346 = vmatprep.subr.mxu0 0.0
  %1347 = vmatpush1.msra.mxu0 0.0
  %1348 = vmatprep.subr.mxu0 0.0
  %1349 = vmatpush1.msra.mxu0 0.0
  %1350 = vmatprep.subr.mxu0 0.0
  %1351 = vmatpush1.msra.mxu0 0.0
  %1352 = vmatprep.subr.mxu0 0.0
  %1353 = vmatpush1.msra.mxu0 0.0
  %1354 = vmatprep.subr.mxu0 0.0
  %1355 = vmatpush1.msra.mxu0 0.0
  %1356 = vmatprep.subr.mxu0 0.0
  %1357 = vmatpush1.msra.mxu0 0.0
  %1358 = vmatprep.subr.mxu0 0.0
  %1359 = vmatpush1.msra.mxu0 0.0
  %1360 = vmatprep.subr.mxu0 0.0
  %1361 = vmatpush1.msra.mxu0 0.0
  %1362 = vmatprep.subr.mxu0 0.0
  %1363 = vmatpush1.msra.mxu0 0.0
  %1364 = vmatprep.subr.mxu0 0.0
  %1365 = vmatpush1.msra.mxu0 0.0
  %1366 = vmatprep.subr.mxu0 0.0
  %1367 = vmatpush1.msra.mxu0 0.0
  %1368 = vmatprep.subr.mxu0 0.0
  %1369 = vmatpush1.msra.mxu0 0.0
  %1370 = vmatprep.subr.mxu0 0.0
  %1371 = vmatpush1.msra.mxu0 0.0
  %1372 = vmatprep.subr.mxu0 0.0
  %1373 = vmatpush1.msra.mxu0 0.0
  %1374 = vmatprep.subr.mxu0 0.0
  %1375 = vmatpush1.msra.mxu0 0.0
  %1376 = vmatprep.subr.mxu0 0.0
  %1377 = vmatpush1.msra.mxu0 0.0
  %1378 = vmatprep.subr.mxu0 0.0
  %1379 = vmatpush1.msra.mxu0 0.0
  %1380 = vmatprep.subr.mxu0 0.0
  %1381 = vmatpush1.msra.mxu0 0.0
  %1382 = vmatprep.mubr.f32.mxu0 0.0
  %1383 = vmatmul.mubr.f32.gmra.mrb[0].mxu0 %v1316
  %v1384 = vpop.f32.mrb[0].mxu0
  %v1385 = vadd.f32 0.0, %v1384
  %v1386 = vpop.f32.mrb[0].mxu0
  %1387 = vdwg.mxu0
  %v1389 = vrot.slane %v1385, 6
  %v1391 = vadd.f32 %v125, %v1389
  %v1392 = vrot.slane %v1303, 6
  %1393 = vrot.lane.b32.xlu0 %v1392, 32
  %v1394 = vpop.permute.xlu0 %1393
  %v1395 = vsel %vm36, %v1394, 0
  %1397 = vmatprep.subr.mxu0 0.0
  %1398 = vmatpush1.msra.mxu0 %v217
  %1399 = vmatprep.subr.mxu0 0.0
  %1400 = vmatpush1.msra.mxu0 %v218
  %1401 = vmatprep.subr.mxu0 0.0
  %1402 = vmatpush1.msra.mxu0 %v219
  %1403 = vmatprep.subr.mxu0 0.0
  %1404 = vmatpush1.msra.mxu0 %v220
  %1405 = vmatprep.subr.mxu0 0.0
  %1406 = vmatpush1.msra.mxu0 0.0
  %1407 = vmatprep.subr.mxu0 0.0
  %1408 = vmatpush1.msra.mxu0 0.0
  %1409 = vmatprep.subr.mxu0 0.0
  %1410 = vmatpush1.msra.mxu0 0.0
  %1411 = vmatprep.subr.mxu0 0.0
  %1412 = vmatpush1.msra.mxu0 0.0
  %1413 = vmatprep.subr.mxu0 0.0
  %1414 = vmatpush1.msra.mxu0 0.0
  %1415 = vmatprep.subr.mxu0 0.0
  %1416 = vmatpush1.msra.mxu0 0.0
  %1417 = vmatprep.subr.mxu0 0.0
  %1418 = vmatpush1.msra.mxu0 0.0
  %1419 = vmatprep.subr.mxu0 0.0
  %1420 = vmatpush1.msra.mxu0 0.0
  %1421 = vmatprep.subr.mxu0 0.0
  %1422 = vmatpush1.msra.mxu0 0.0
  %1423 = vmatprep.subr.mxu0 0.0
  %1424 = vmatpush1.msra.mxu0 0.0
  %1425 = vmatprep.subr.mxu0 0.0
  %1426 = vmatpush1.msra.mxu0 0.0
  %1427 = vmatprep.subr.mxu0 0.0
  %1428 = vmatpush1.msra.mxu0 0.0
  %1429 = vmatprep.subr.mxu0 0.0
  %1430 = vmatpush1.msra.mxu0 0.0
  %1431 = vmatprep.subr.mxu0 0.0
  %1432 = vmatpush1.msra.mxu0 0.0
  %1433 = vmatprep.subr.mxu0 0.0
  %1434 = vmatpush1.msra.mxu0 0.0
  %1435 = vmatprep.subr.mxu0 0.0
  %1436 = vmatpush1.msra.mxu0 0.0
  %1437 = vmatprep.subr.mxu0 0.0
  %1438 = vmatpush1.msra.mxu0 0.0
  %1439 = vmatprep.subr.mxu0 0.0
  %1440 = vmatpush1.msra.mxu0 0.0
  %1441 = vmatprep.subr.mxu0 0.0
  %1442 = vmatpush1.msra.mxu0 0.0
  %1443 = vmatprep.subr.mxu0 0.0
  %1444 = vmatpush1.msra.mxu0 0.0
  %1445 = vmatprep.subr.mxu0 0.0
  %1446 = vmatpush1.msra.mxu0 0.0
  %1447 = vmatprep.subr.mxu0 0.0
  %1448 = vmatpush1.msra.mxu0 0.0
  %1449 = vmatprep.subr.mxu0 0.0
  %1450 = vmatpush1.msra.mxu0 0.0
  %1451 = vmatprep.subr.mxu0 0.0
  %1452 = vmatpush1.msra.mxu0 0.0
  %1453 = vmatprep.subr.mxu0 0.0
  %1454 = vmatpush1.msra.mxu0 0.0
  %1455 = vmatprep.subr.mxu0 0.0
  %1456 = vmatpush1.msra.mxu0 0.0
  %1457 = vmatprep.subr.mxu0 0.0
  %1458 = vmatpush1.msra.mxu0 0.0
  %1459 = vmatprep.subr.mxu0 0.0
  %1460 = vmatpush1.msra.mxu0 0.0
  %1461 = vmatprep.mubr.f32.mxu0 0.0
  %1462 = vmatmul.mubr.f32.gmra.mrb[0].mxu0 %v1395
  %v1463 = vpop.f32.mrb[0].mxu0
  %v1464 = vadd.f32 0.0, %v1463
  %v1465 = vpop.f32.mrb[0].mxu0
  %1466 = vdwg.mxu0
  %v1468 = vrot.slane %v1464, 4
  %v1470 = vadd.f32 %v211, %v1468
  %v1471 = vxor.u32 %v1391, 2147483648
  %v1472 = vmul.f32 %v1471, 1.442695
  %v1473 = vpow.pop %v1472
  %v1474 = vadd.f32 %v1473, 1.0
  %v1475 = vrcp.pop %v1474
  %v1476 = vmul.f32 1.0, %v1475
  %v1477 = vtanh.pop %v1391
  %v1479 = vrot.slane %v1270, 6
  %v1481 = vmul.f32 %v1476, %v1479
  %1483 = vrot.lane.b32.xlu0 %v1477, 64
  %v1484 = vpop.permute.xlu0 %1483
  %v1486 = vmul.f32 %v1476, %v1484
  %1488 = vrot.lane.b32.xlu0 %v1486, 32
  %v1489 = vpop.permute.xlu0 %1488
  %v1491 = vadd.f32 %v1481, %v1489
  %v1492 = vtanh.pop %v1491
  %1494 = vrot.lane.b32.xlu0 %v1492, 64
  %v1495 = vpop.permute.xlu0 %1494
  %v1497 = vmul.f32 %v1476, %v1495
  %v1498 = vxor.u32 %v1470, 2147483648
  %v1499 = vmul.f32 %v1498, 1.442695
  %v1500 = vpow.pop %v1499
  %v1501 = vadd.f32 %v1500, 1.0
  %v1502 = vrcp.pop %v1501
  %v1503 = vmul.f32 1.0, %v1502
  %v1504 = vtanh.pop %v1470
  %v1506 = vrot.slane %v1297, 2
  %v1508 = vmul.f32 %v1503, %v1506
  %1510 = vrot.lane.b32.xlu0 %v1504, 64
  %v1511 = vpop.permute.xlu0 %1510
  %v1513 = vmul.f32 %v1503, %v1511
  %1515 = vrot.lane.b32.xlu0 %v1513, 32
  %v1516 = vpop.permute.xlu0 %1515
  %v1518 = vadd.f32 %v1508, %v1516
  %v1519 = vtanh.pop %v1518
  %1521 = vrot.lane.b32.xlu0 %v1519, 64
  %v1522 = vpop.permute.xlu0 %1521
  %v1524 = vmul.f32 %v1503, %v1522
  %1526 = vrot.lane.b32.xlu0 %v1497, 32
  %v1527 = vpop.permute.xlu0 %1526
  %s1529 = scalar_lea.vmem %s7, 10
  %1530 = vst.msk [vmem:[%s1529 - $0x2] sm:$0xc] %vm644, %v1527
  %1532 = vrot.lane.b32.xlu0 %v1524, 32
  %v1533 = vpop.permute.xlu0 %1532
  %s1535 = scalar_lea.vmem %s8, 4
  %1536 = vst.msk [vmem:[%s1535 - $0x4] sm:$0x30] %vm651, %v1533
  %v1537 = vrot.slane %v1497, 2
  %1538 = vrot.lane.b32.xlu0 %v1537, 32
  %v1539 = vpop.permute.xlu0 %1538
  %v1540 = vsel %vm36, %v1539, 0
  %1542 = vmatprep.subr.mxu0 0.0
  %1543 = vmatpush1.msra.mxu0 %v213
  %1544 = vmatprep.subr.mxu0 0.0
  %1545 = vmatpush1.msra.mxu0 %v214
  %1546 = vmatprep.subr.mxu0 0.0
  %1547 = vmatpush1.msra.mxu0 %v215
  %1548 = vmatprep.subr.mxu0 0.0
  %1549 = vmatpush1.msra.mxu0 %v216
  %1550 = vmatprep.subr.mxu0 0.0
  %1551 = vmatpush1.msra.mxu0 0.0
  %1552 = vmatprep.subr.mxu0 0.0
  %1553 = vmatpush1.msra.mxu0 0.0
  %1554 = vmatprep.subr.mxu0 0.0
  %1555 = vmatpush1.msra.mxu0 0.0
  %1556 = vmatprep.subr.mxu0 0.0
  %1557 = vmatpush1.msra.mxu0 0.0
  %1558 = vmatprep.subr.mxu0 0.0
  %1559 = vmatpush1.msra.mxu0 0.0
  %1560 = vmatprep.subr.mxu0 0.0
  %1561 = vmatpush1.msra.mxu0 0.0
  %1562 = vmatprep.subr.mxu0 0.0
  %1563 = vmatpush1.msra.mxu0 0.0
  %1564 = vmatprep.subr.mxu0 0.0
  %1565 = vmatpush1.msra.mxu0 0.0
  %1566 = vmatprep.subr.mxu0 0.0
  %1567 = vmatpush1.msra.mxu0 0.0
  %1568 = vmatprep.subr.mxu0 0.0
  %1569 = vmatpush1.msra.mxu0 0.0
  %1570 = vmatprep.subr.mxu0 0.0
  %1571 = vmatpush1.msra.mxu0 0.0
  %1572 = vmatprep.subr.mxu0 0.0
  %1573 = vmatpush1.msra.mxu0 0.0
  %1574 = vmatprep.subr.mxu0 0.0
  %1575 = vmatpush1.msra.mxu0 0.0
  %1576 = vmatprep.subr.mxu0 0.0
  %1577 = vmatpush1.msra.mxu0 0.0
  %1578 = vmatprep.subr.mxu0 0.0
  %1579 = vmatpush1.msra.mxu0 0.0
  %1580 = vmatprep.subr.mxu0 0.0
  %1581 = vmatpush1.msra.mxu0 0.0
  %1582 = vmatprep.subr.mxu0 0.0
  %1583 = vmatpush1.msra.mxu0 0.0
  %1584 = vmatprep.subr.mxu0 0.0
  %1585 = vmatpush1.msra.mxu0 0.0
  %1586 = vmatprep.subr.mxu0 0.0
  %1587 = vmatpush1.msra.mxu0 0.0
  %1588 = vmatprep.subr.mxu0 0.0
  %1589 = vmatpush1.msra.mxu0 0.0
  %1590 = vmatprep.subr.mxu0 0.0
  %1591 = vmatpush1.msra.mxu0 0.0
  %1592 = vmatprep.subr.mxu0 0.0
  %1593 = vmatpush1.msra.mxu0 0.0
  %1594 = vmatprep.subr.mxu0 0.0
  %1595 = vmatpush1.msra.mxu0 0.0
  %1596 = vmatprep.subr.mxu0 0.0
  %1597 = vmatpush1.msra.mxu0 0.0
  %1598 = vmatprep.subr.mxu0 0.0
  %1599 = vmatpush1.msra.mxu0 0.0
  %1600 = vmatprep.subr.mxu0 0.0
  %1601 = vmatpush1.msra.mxu0 0.0
  %1602 = vmatprep.subr.mxu0 0.0
  %1603 = vmatpush1.msra.mxu0 0.0
  %1604 = vmatprep.subr.mxu0 0.0
  %1605 = vmatpush1.msra.mxu0 0.0
  %1606 = vmatprep.mubr.f32.mxu0 0.0
  %1607 = vmatmul.mubr.f32.gmra.mrb[0].mxu0 %v1540
  %v1608 = vpop.f32.mrb[0].mxu0
  %v1609 = vadd.f32 0.0, %v1608
  %v1610 = vpop.f32.mrb[0].mxu0
  %1611 = vdwg.mxu0
  %v1613 = vrot.slane %v1609, 4
  %v1615 = vadd.f32 %v125, %v1613
  %v1616 = vrot.slane %v1524, 4
  %1617 = vrot.lane.b32.xlu0 %v1616, 32
  %v1618 = vpop.permute.xlu0 %1617
  %v1619 = vsel %vm36, %v1618, 0
  %1621 = vmatprep.subr.mxu0 0.0
  %1622 = vmatpush1.msra.mxu0 %v217
  %1623 = vmatprep.subr.mxu0 0.0
  %1624 = vmatpush1.msra.mxu0 %v218
  %1625 = vmatprep.subr.mxu0 0.0
  %1626 = vmatpush1.msra.mxu0 %v219
  %1627 = vmatprep.subr.mxu0 0.0
  %1628 = vmatpush1.msra.mxu0 %v220
  %1629 = vmatprep.subr.mxu0 0.0
  %1630 = vmatpush1.msra.mxu0 0.0
  %1631 = vmatprep.subr.mxu0 0.0
  %1632 = vmatpush1.msra.mxu0 0.0
  %1633 = vmatprep.subr.mxu0 0.0
  %1634 = vmatpush1.msra.mxu0 0.0
  %1635 = vmatprep.subr.mxu0 0.0
  %1636 = vmatpush1.msra.mxu0 0.0
  %1637 = vmatprep.subr.mxu0 0.0
  %1638 = vmatpush1.msra.mxu0 0.0
  %1639 = vmatprep.subr.mxu0 0.0
  %1640 = vmatpush1.msra.mxu0 0.0
  %1641 = vmatprep.subr.mxu0 0.0
  %1642 = vmatpush1.msra.mxu0 0.0
  %1643 = vmatprep.subr.mxu0 0.0
  %1644 = vmatpush1.msra.mxu0 0.0
  %1645 = vmatprep.subr.mxu0 0.0
  %1646 = vmatpush1.msra.mxu0 0.0
  %1647 = vmatprep.subr.mxu0 0.0
  %1648 = vmatpush1.msra.mxu0 0.0
  %1649 = vmatprep.subr.mxu0 0.0
  %1650 = vmatpush1.msra.mxu0 0.0
  %1651 = vmatprep.subr.mxu0 0.0
  %1652 = vmatpush1.msra.mxu0 0.0
  %1653 = vmatprep.subr.mxu0 0.0
  %1654 = vmatpush1.msra.mxu0 0.0
  %1655 = vmatprep.subr.mxu0 0.0
  %1656 = vmatpush1.msra.mxu0 0.0
  %1657 = vmatprep.subr.mxu0 0.0
  %1658 = vmatpush1.msra.mxu0 0.0
  %1659 = vmatprep.subr.mxu0 0.0
  %1660 = vmatpush1.msra.mxu0 0.0
  %1661 = vmatprep.subr.mxu0 0.0
  %1662 = vmatpush1.msra.mxu0 0.0
  %1663 = vmatprep.subr.mxu0 0.0
  %1664 = vmatpush1.msra.mxu0 0.0
  %1665 = vmatprep.subr.mxu0 0.0
  %1666 = vmatpush1.msra.mxu0 0.0
  %1667 = vmatprep.subr.mxu0 0.0
  %1668 = vmatpush1.msra.mxu0 0.0
  %1669 = vmatprep.subr.mxu0 0.0
  %1670 = vmatpush1.msra.mxu0 0.0
  %1671 = vmatprep.subr.mxu0 0.0
  %1672 = vmatpush1.msra.mxu0 0.0
  %1673 = vmatprep.subr.mxu0 0.0
  %1674 = vmatpush1.msra.mxu0 0.0
  %1675 = vmatprep.subr.mxu0 0.0
  %1676 = vmatpush1.msra.mxu0 0.0
  %1677 = vmatprep.subr.mxu0 0.0
  %1678 = vmatpush1.msra.mxu0 0.0
  %1679 = vmatprep.subr.mxu0 0.0
  %1680 = vmatpush1.msra.mxu0 0.0
  %1681 = vmatprep.subr.mxu0 0.0
  %1682 = vmatpush1.msra.mxu0 0.0
  %1683 = vmatprep.subr.mxu0 0.0
  %1684 = vmatpush1.msra.mxu0 0.0
  %1685 = vmatprep.mubr.f32.mxu0 0.0
  %1686 = vmatmul.mubr.f32.gmra.mrb[0].mxu0 %v1619
  %v1687 = vpop.f32.mrb[0].mxu0
  %v1688 = vadd.f32 0.0, %v1687
  %v1689 = vpop.f32.mrb[0].mxu0
  %1690 = vdwg.mxu0
  %v1692 = vrot.slane %v1688, 6
  %v1694 = vadd.f32 %v211, %v1692
  %v1695 = vxor.u32 %v1615, 2147483648
  %v1696 = vmul.f32 %v1695, 1.442695
  %v1697 = vpow.pop %v1696
  %v1698 = vadd.f32 %v1697, 1.0
  %v1699 = vrcp.pop %v1698
  %v1700 = vmul.f32 1.0, %v1699
  %v1701 = vtanh.pop %v1615
  %v1703 = vrot.slane %v1491, 6
  %v1705 = vmul.f32 %v1700, %v1703
  %1707 = vrot.lane.b32.xlu0 %v1701, 64
  %v1708 = vpop.permute.xlu0 %1707
  %v1710 = vmul.f32 %v1700, %v1708
  %1712 = vrot.lane.b32.xlu0 %v1710, 32
  %v1713 = vpop.permute.xlu0 %1712
  %v1715 = vadd.f32 %v1705, %v1713
  %v1716 = vtanh.pop %v1715
  %1718 = vrot.lane.b32.xlu0 %v1716, 64
  %v1719 = vpop.permute.xlu0 %1718
  %v1721 = vmul.f32 %v1700, %v1719
  %v1722 = vxor.u32 %v1694, 2147483648
  %v1723 = vmul.f32 %v1722, 1.442695
  %v1724 = vpow.pop %v1723
  %v1725 = vadd.f32 %v1724, 1.0
  %v1726 = vrcp.pop %v1725
  %v1727 = vmul.f32 1.0, %v1726
  %v1728 = vtanh.pop %v1694
  %v1730 = vrot.slane %v1518, 2
  %v1732 = vmul.f32 %v1727, %v1730
  %1734 = vrot.lane.b32.xlu0 %v1728, 64
  %v1735 = vpop.permute.xlu0 %1734
  %v1737 = vmul.f32 %v1727, %v1735
  %1739 = vrot.lane.b32.xlu0 %v1737, 32
  %v1740 = vpop.permute.xlu0 %1739
  %v1742 = vadd.f32 %v1732, %v1740
  %v1743 = vtanh.pop %v1742
  %1745 = vrot.lane.b32.xlu0 %v1743, 64
  %v1746 = vpop.permute.xlu0 %1745
  %v1748 = vmul.f32 %v1727, %v1746
  %1750 = vrot.lane.b32.xlu0 %v1721, 32
  %v1751 = vpop.permute.xlu0 %1750
  %s1753 = scalar_lea.vmem %s7, 12
  %1754 = vst.msk [vmem:[%s1753 - $0x4] sm:$0x30] %vm651, %v1751
  %1756 = vrot.lane.b32.xlu0 %v1748, 32
  %v1757 = vpop.permute.xlu0 %1756
  %s1759 = scalar_lea.vmem %s8, 2
  %1760 = vst.msk [vmem:[%s1759 - $0x2] sm:$0xc] %vm644, %v1757
  %v1761 = vrot.slane %v1721, 4
  %1762 = vrot.lane.b32.xlu0 %v1761, 32
  %v1763 = vpop.permute.xlu0 %1762
  %v1764 = vsel %vm36, %v1763, 0
  %1766 = vmatprep.subr.mxu0 0.0
  %1767 = vmatpush1.msra.mxu0 %v213
  %1768 = vmatprep.subr.mxu0 0.0
  %1769 = vmatpush1.msra.mxu0 %v214
  %1770 = vmatprep.subr.mxu0 0.0
  %1771 = vmatpush1.msra.mxu0 %v215
  %1772 = vmatprep.subr.mxu0 0.0
  %1773 = vmatpush1.msra.mxu0 %v216
  %1774 = vmatprep.subr.mxu0 0.0
  %1775 = vmatpush1.msra.mxu0 0.0
  %1776 = vmatprep.subr.mxu0 0.0
  %1777 = vmatpush1.msra.mxu0 0.0
  %1778 = vmatprep.subr.mxu0 0.0
  %1779 = vmatpush1.msra.mxu0 0.0
  %1780 = vmatprep.subr.mxu0 0.0
  %1781 = vmatpush1.msra.mxu0 0.0
  %1782 = vmatprep.subr.mxu0 0.0
  %1783 = vmatpush1.msra.mxu0 0.0
  %1784 = vmatprep.subr.mxu0 0.0
  %1785 = vmatpush1.msra.mxu0 0.0
  %1786 = vmatprep.subr.mxu0 0.0
  %1787 = vmatpush1.msra.mxu0 0.0
  %1788 = vmatprep.subr.mxu0 0.0
  %1789 = vmatpush1.msra.mxu0 0.0
  %1790 = vmatprep.subr.mxu0 0.0
  %1791 = vmatpush1.msra.mxu0 0.0
  %1792 = vmatprep.subr.mxu0 0.0
  %1793 = vmatpush1.msra.mxu0 0.0
  %1794 = vmatprep.subr.mxu0 0.0
  %1795 = vmatpush1.msra.mxu0 0.0
  %1796 = vmatprep.subr.mxu0 0.0
  %1797 = vmatpush1.msra.mxu0 0.0
  %1798 = vmatprep.subr.mxu0 0.0
  %1799 = vmatpush1.msra.mxu0 0.0
  %1800 = vmatprep.subr.mxu0 0.0
  %1801 = vmatpush1.msra.mxu0 0.0
  %1802 = vmatprep.subr.mxu0 0.0
  %1803 = vmatpush1.msra.mxu0 0.0
  %1804 = vmatprep.subr.mxu0 0.0
  %1805 = vmatpush1.msra.mxu0 0.0
  %1806 = vmatprep.subr.mxu0 0.0
  %1807 = vmatpush1.msra.mxu0 0.0
  %1808 = vmatprep.subr.mxu0 0.0
  %1809 = vmatpush1.msra.mxu0 0.0
  %1810 = vmatprep.subr.mxu0 0.0
  %1811 = vmatpush1.msra.mxu0 0.0
  %1812 = vmatprep.subr.mxu0 0.0
  %1813 = vmatpush1.msra.mxu0 0.0
  %1814 = vmatprep.subr.mxu0 0.0
  %1815 = vmatpush1.msra.mxu0 0.0
  %1816 = vmatprep.subr.mxu0 0.0
  %1817 = vmatpush1.msra.mxu0 0.0
  %1818 = vmatprep.subr.mxu0 0.0
  %1819 = vmatpush1.msra.mxu0 0.0
  %1820 = vmatprep.subr.mxu0 0.0
  %1821 = vmatpush1.msra.mxu0 0.0
  %1822 = vmatprep.subr.mxu0 0.0
  %1823 = vmatpush1.msra.mxu0 0.0
  %1824 = vmatprep.subr.mxu0 0.0
  %1825 = vmatpush1.msra.mxu0 0.0
  %1826 = vmatprep.subr.mxu0 0.0
  %1827 = vmatpush1.msra.mxu0 0.0
  %1828 = vmatprep.subr.mxu0 0.0
  %1829 = vmatpush1.msra.mxu0 0.0
  %1830 = vmatprep.mubr.f32.mxu0 0.0
  %1831 = vmatmul.mubr.f32.gmra.mrb[0].mxu0 %v1764
  %v1832 = vpop.f32.mrb[0].mxu0
  %v1833 = vadd.f32 0.0, %v1832
  %v1834 = vpop.f32.mrb[0].mxu0
  %1835 = vdwg.mxu0
  %v1837 = vrot.slane %v1833, 2
  %v1839 = vadd.f32 %v125, %v1837
  %v1840 = vrot.slane %v1748, 2
  %1841 = vrot.lane.b32.xlu0 %v1840, 32
  %v1842 = vpop.permute.xlu0 %1841
  %v1843 = vsel %vm36, %v1842, 0
  %1845 = vmatprep.subr.mxu0 0.0
  %1846 = vmatpush1.msra.mxu0 %v217
  %1847 = vmatprep.subr.mxu0 0.0
  %1848 = vmatpush1.msra.mxu0 %v218
  %1849 = vmatprep.subr.mxu0 0.0
  %1850 = vmatpush1.msra.mxu0 %v219
  %1851 = vmatprep.subr.mxu0 0.0
  %1852 = vmatpush1.msra.mxu0 %v220
  %1853 = vmatprep.subr.mxu0 0.0
  %1854 = vmatpush1.msra.mxu0 0.0
  %1855 = vmatprep.subr.mxu0 0.0
  %1856 = vmatpush1.msra.mxu0 0.0
  %1857 = vmatprep.subr.mxu0 0.0
  %1858 = vmatpush1.msra.mxu0 0.0
  %1859 = vmatprep.subr.mxu0 0.0
  %1860 = vmatpush1.msra.mxu0 0.0
  %1861 = vmatprep.subr.mxu0 0.0
  %1862 = vmatpush1.msra.mxu0 0.0
  %1863 = vmatprep.subr.mxu0 0.0
  %1864 = vmatpush1.msra.mxu0 0.0
  %1865 = vmatprep.subr.mxu0 0.0
  %1866 = vmatpush1.msra.mxu0 0.0
  %1867 = vmatprep.subr.mxu0 0.0
  %1868 = vmatpush1.msra.mxu0 0.0
  %1869 = vmatprep.subr.mxu0 0.0
  %1870 = vmatpush1.msra.mxu0 0.0
  %1871 = vmatprep.subr.mxu0 0.0
  %1872 = vmatpush1.msra.mxu0 0.0
  %1873 = vmatprep.subr.mxu0 0.0
  %1874 = vmatpush1.msra.mxu0 0.0
  %1875 = vmatprep.subr.mxu0 0.0
  %1876 = vmatpush1.msra.mxu0 0.0
  %1877 = vmatprep.subr.mxu0 0.0
  %1878 = vmatpush1.msra.mxu0 0.0
  %1879 = vmatprep.subr.mxu0 0.0
  %1880 = vmatpush1.msra.mxu0 0.0
  %1881 = vmatprep.subr.mxu0 0.0
  %1882 = vmatpush1.msra.mxu0 0.0
  %1883 = vmatprep.subr.mxu0 0.0
  %1884 = vmatpush1.msra.mxu0 0.0
  %1885 = vmatprep.subr.mxu0 0.0
  %1886 = vmatpush1.msra.mxu0 0.0
  %1887 = vmatprep.subr.mxu0 0.0
  %1888 = vmatpush1.msra.mxu0 0.0
  %1889 = vmatprep.subr.mxu0 0.0
  %1890 = vmatpush1.msra.mxu0 0.0
  %1891 = vmatprep.subr.mxu0 0.0
  %1892 = vmatpush1.msra.mxu0 0.0
  %1893 = vmatprep.subr.mxu0 0.0
  %1894 = vmatpush1.msra.mxu0 0.0
  %1895 = vmatprep.subr.mxu0 0.0
  %1896 = vmatpush1.msra.mxu0 0.0
  %1897 = vmatprep.subr.mxu0 0.0
  %1898 = vmatpush1.msra.mxu0 0.0
  %1899 = vmatprep.subr.mxu0 0.0
  %1900 = vmatpush1.msra.mxu0 0.0
  %1901 = vmatprep.subr.mxu0 0.0
  %1902 = vmatpush1.msra.mxu0 0.0
  %1903 = vmatprep.subr.mxu0 0.0
  %1904 = vmatpush1.msra.mxu0 0.0
  %1905 = vmatprep.subr.mxu0 0.0
  %1906 = vmatpush1.msra.mxu0 0.0
  %1907 = vmatprep.subr.mxu0 0.0
  %1908 = vmatpush1.msra.mxu0 0.0
  %1909 = vmatprep.mubr.f32.mxu0 0.0
  %1910 = vmatmul.mubr.f32.gmra.mrb[0].mxu0 %v1843
  %v1911 = vpop.f32.mrb[0].mxu0
  %v1912 = vadd.f32 0.0, %v1911
  %v1913 = vpop.f32.mrb[0].mxu0
  %1914 = vdwg.mxu0
  %v1915 = vadd.f32 %v211, %v1912
  %v1916 = vxor.u32 %v1839, 2147483648
  %v1917 = vmul.f32 %v1916, 1.442695
  %v1918 = vpow.pop %v1917
  %v1919 = vadd.f32 %v1918, 1.0
  %v1920 = vrcp.pop %v1919
  %v1921 = vmul.f32 1.0, %v1920
  %v1922 = vtanh.pop %v1839
  %v1924 = vrot.slane %v1715, 6
  %v1926 = vmul.f32 %v1921, %v1924
  %1928 = vrot.lane.b32.xlu0 %v1922, 64
  %v1929 = vpop.permute.xlu0 %1928
  %v1931 = vmul.f32 %v1921, %v1929
  %1933 = vrot.lane.b32.xlu0 %v1931, 32
  %v1934 = vpop.permute.xlu0 %1933
  %v1936 = vadd.f32 %v1926, %v1934
  %v1937 = vtanh.pop %v1936
  %1939 = vrot.lane.b32.xlu0 %v1937, 64
  %v1940 = vpop.permute.xlu0 %1939
  %v1942 = vmul.f32 %v1921, %v1940
  %v1943 = vxor.u32 %v1915, 2147483648
  %v1944 = vmul.f32 %v1943, 1.442695
  %v1945 = vpow.pop %v1944
  %v1946 = vadd.f32 %v1945, 1.0
  %v1947 = vrcp.pop %v1946
  %v1948 = vmul.f32 1.0, %v1947
  %v1949 = vtanh.pop %v1915
  %v1951 = vrot.slane %v1742, 2
  %v1953 = vmul.f32 %v1948, %v1951
  %1955 = vrot.lane.b32.xlu0 %v1949, 64
  %v1956 = vpop.permute.xlu0 %1955
  %v1958 = vmul.f32 %v1948, %v1956
  %1960 = vrot.lane.b32.xlu0 %v1958, 32
  %v1961 = vpop.permute.xlu0 %1960
  %v1963 = vadd.f32 %v1953, %v1961
  %v1964 = vtanh.pop %v1963
  %1966 = vrot.lane.b32.xlu0 %v1964, 64
  %v1967 = vpop.permute.xlu0 %1966
  %v1969 = vmul.f32 %v1948, %v1967
  %1971 = vrot.lane.b32.xlu0 %v1942, 32
  %v1972 = vpop.permute.xlu0 %1971
  %s1974 = scalar_lea.vmem %s7, 14
  %1975 = vst.msk [vmem:[%s1974 - $0x6] sm:$0xc0] %vm428, %v1972
  %1977 = vrot.lane.b32.xlu0 %v1969, 32
  %v1978 = vpop.permute.xlu0 %1977
  %1980 = vst.msk [vmem:[%s8] sm:$0x3] %vm421, %v1978
  // Predicated region
  $region30: #{birnn_forward.2} parent=0 // pred_check
    _
  $region31: #{birnn_forward.2} parent=0 // pred_check_branch
    %1982 = sbr.rel (0) target = $region33
  $region32: #{birnn_forward.2} parent=0 // pred_region
    _
  $region33: #{birnn_forward.2} parent=0 // pred_fallthru
    _
  // Predicated region
  $region34: #{birnn_forward.2} parent=0 // pred_check
    _
  $region35: #{birnn_forward.2} parent=0 // pred_check_branch
    %1984 = sbr.rel (0) target = $region37
  $region36: #{birnn_forward.2} parent=0 // pred_region
    _
  $region37: #{birnn_forward.2} parent=0 // pred_fallthru
    _
  // Predicated region
  $region38: #{birnn_forward.2} parent=0 // pred_check
    _
  $region39: #{birnn_forward.2} parent=0 // pred_check_branch
    %1986 = sbr.rel (0) target = $region41
  $region40: #{birnn_forward.2} parent=0 // pred_region
    _
  $region41: #{birnn_forward.2} parent=0 // pred_fallthru
    _
  // Predicated region
  $region42: #{birnn_forward.2} parent=0 // pred_check
    _
  $region43: #{birnn_forward.2} parent=0 // pred_check_branch
    %1988 = sbr.rel (0) target = $region45
  $region44: #{birnn_forward.2} parent=0 // pred_region
    _
  $region45: #{birnn_forward.2} parent=0 // pred_fallthru
    _

// kernel: birnn_forward.3
$region0: #{birnn_forward.3}
  #allocation0 [shape = 'u32[]', space=smem, size = 0x4, offset = 0x4, fixed_abs, tag = 'smem constant byte address 0x4 - core index']
  #allocation1 [shape = 'u32[144,128]{1,0:T(1,128)}', space=vmem, size = 0x12000, scoped, tag = 'internal scratch']
  %s0 = inlined_call_operand.vmem [shape: f32[16,32], index: 0, kind: input, shape index: {}]
  %s1 = inlined_call_operand.vmem [shape: f32[16,32], index: 1, kind: input, shape index: {}]
  %s2 = inlined_call_operand.vmem [shape: f32[32,128], index: 2, kind: input, shape index: {}]
  %s3 = inlined_call_operand.vmem [shape: f32[32,128], index: 3, kind: input, shape index: {}]
  %s4 = inlined_call_operand.vmem [shape: f32[32,128], index: 4, kind: input, shape index: {}]
  %s5 = inlined_call_operand.vmem [shape: f32[1,128], index: 5, kind: input, shape index: {}]
  %s6 = inlined_call_operand.vmem [shape: f32[32,128], index: 6, kind: input, shape index: {}]
  %s7 = inlined_call_operand.vmem [shape: f32[32,128], index: 7, kind: input, shape index: {}]
  %s8 = inlined_call_operand.vmem [shape: f32[32,128], index: 8, kind: input, shape index: {}]
  %s9 = inlined_call_operand.vmem [shape: f32[1,128], index: 9, kind: input, shape index: {}]
  %s10 = inlined_call_operand.vmem [shape: f32[128,2], index: 10, kind: input, shape index: {}]
  %s11 = inlined_call_operand.vmem [shape: f32[1,2], index: 11, kind: input, shape index: {}]
  %s12 = inlined_call_operand.hbm [shape: f32[2,2], index: 12, kind: output, shape index: {}]
  %s13 = sld [smem:[#allocation0]]
  $region58: #{birnn_forward.3} parent=0
    _
  %s15 = ssub.s32 1, %s13
  %s16 = scalar_select 0, %s15, %s13
  $region1: #{birnn_forward.3} parent=0
    #allocation2 [shape = 'u8[1024]{0}', space=vmem, size = 0x400, scoped, tag = 'output window, operand 0, single buffered']
    #allocation3 [shape = 's32[1]{0}', space=sflag, size = 0x4, scoped, tag = 'scoped memory for birnn_forward.3']
    %17 = vsyncpa [#allocation3], 0
    // Predicated region
    $region2: #{birnn_forward.3} parent=1 // pred_check
      _
    $region3: #{birnn_forward.3} parent=1 // pred_check_branch
      %19 = sbr.rel (0) target = $region5
    $region4: #{birnn_forward.3} parent=1 // pred_region
      _
    $region5: #{birnn_forward.3} parent=1 // pred_fallthru
      _
    // Predicated region
    $region6: #{birnn_forward.3} parent=1 // pred_check
      _
    $region7: #{birnn_forward.3} parent=1 // pred_check_branch
      %21 = sbr.rel (0) target = $region9
    $region8: #{birnn_forward.3} parent=1 // pred_region
      _
    $region9: #{birnn_forward.3} parent=1 // pred_fallthru
      _
    // Predicated region
    $region10: #{birnn_forward.3} parent=1 // pred_check
      _
    $region11: #{birnn_forward.3} parent=1 // pred_check_branch
      %23 = sbr.rel (0) target = $region13
    $region12: #{birnn_forward.3} parent=1 // pred_region
      _
    $region13: #{birnn_forward.3} parent=1 // pred_fallthru
      _
    // Predicated region
    $region14: #{birnn_forward.3} parent=1 // pred_check
      _
    $region15: #{birnn_forward.3} parent=1 // pred_check_branch
      %25 = sbr.rel (0) target = $region17
    $region16: #{birnn_forward.3} parent=1 // pred_region
      _
    $region17: #{birnn_forward.3} parent=1 // pred_fallthru
      _
    // Predicated region
    $region18: #{birnn_forward.3} parent=1 // pred_check
      _
    $region19: #{birnn_forward.3} parent=1 // pred_check_branch
      %27 = sbr.rel (0) target = $region21
    $region20: #{birnn_forward.3} parent=1 // pred_region
      _
    $region21: #{birnn_forward.3} parent=1 // pred_fallthru
      _
    // Predicated region
    $region22: #{birnn_forward.3} parent=1 // pred_check
      _
    $region23: #{birnn_forward.3} parent=1 // pred_check_branch
      %29 = sbr.rel (0) target = $region25
    $region24: #{birnn_forward.3} parent=1 // pred_region
      _
    $region25: #{birnn_forward.3} parent=1 // pred_fallthru
      _
    // Predicated region
    $region26: #{birnn_forward.3} parent=1 // pred_check
      _
    $region27: #{birnn_forward.3} parent=1 // pred_check_branch
      %31 = sbr.rel (0) target = $region29
    $region28: #{birnn_forward.3} parent=1 // pred_region
      _
    $region29: #{birnn_forward.3} parent=1 // pred_fallthru
      _
    // Predicated region
    $region30: #{birnn_forward.3} parent=1 // pred_check
      _
    $region31: #{birnn_forward.3} parent=1 // pred_check_branch
      %33 = sbr.rel (0) target = $region33
    $region32: #{birnn_forward.3} parent=1 // pred_region
      _
    $region33: #{birnn_forward.3} parent=1 // pred_fallthru
      _
    // Predicated region
    $region34: #{birnn_forward.3} parent=1 // pred_check
      _
    $region35: #{birnn_forward.3} parent=1 // pred_check_branch
      %35 = sbr.rel (0) target = $region37
    $region36: #{birnn_forward.3} parent=1 // pred_region
      _
    $region37: #{birnn_forward.3} parent=1 // pred_fallthru
      _
    // Predicated region
    $region38: #{birnn_forward.3} parent=1 // pred_check
      _
    $region39: #{birnn_forward.3} parent=1 // pred_check_branch
      %37 = sbr.rel (0) target = $region41
    $region40: #{birnn_forward.3} parent=1 // pred_region
      _
    $region41: #{birnn_forward.3} parent=1 // pred_fallthru
      _
    // Predicated region
    $region42: #{birnn_forward.3} parent=1 // pred_check
      _
    $region43: #{birnn_forward.3} parent=1 // pred_check_branch
      %39 = sbr.rel (0) target = $region45
    $region44: #{birnn_forward.3} parent=1 // pred_region
      _
    $region45: #{birnn_forward.3} parent=1 // pred_fallthru
      _
    // Predicated region
    $region46: #{birnn_forward.3} parent=1 // pred_check
      _
    $region47: #{birnn_forward.3} parent=1 // pred_check_branch
      %41 = sbr.rel (0) target = $region49
    $region48: #{birnn_forward.3} parent=1 // pred_region
      _
    $region49: #{birnn_forward.3} parent=1 // pred_fallthru
      _
    %v42 = vld [vmem:[%s5] sm:$0x1]
    %v43 = vld [vmem:[%s9] sm:$0x1]
    %v44 = vld [vmem:[%s0] sm:$0xff]
    %v45 = vld [vmem:[%s0 + $0x8] sm:$0xff]
    %v46 = vld [vmem:[%s2] sm:$0xff]
    %v47 = vld [vmem:[%s2 + $0x8] sm:$0xff]
    %v48 = vld [vmem:[%s2 + $0x10] sm:$0xff]
    %v49 = vld [vmem:[%s2 + $0x18] sm:$0xff]
    %vm50 = vcmask 261120
    %v52 = vsel %vm50, %v44, 0
    %v55 = vsel %vm50, %v45, 0
    %57 = vmatprep.subr.mxu0 0.0
    %58 = vmatpush1.msra.mxu0 %v46
    %59 = vmatprep.subr.mxu0 0.0
    %60 = vmatpush1.msra.mxu0 %v47
    %61 = vmatprep.subr.mxu0 0.0
    %62 = vmatpush1.msra.mxu0 %v48
    %63 = vmatprep.subr.mxu0 0.0
    %64 = vmatpush1.msra.mxu0 %v49
    %65 = vmatprep.subr.mxu0 0.0
    %66 = vmatpush1.msra.mxu0 0.0
    %67 = vmatprep.subr.mxu0 0.0
    %68 = vmatpush1.msra.mxu0 0.0
    %69 = vmatprep.subr.mxu0 0.0
    %70 = vmatpush1.msra.mxu0 0.0
    %71 = vmatprep.subr.mxu0 0.0
    %72 = vmatpush1.msra.mxu0 0.0
    %73 = vmatprep.subr.mxu0 0.0
    %74 = vmatpush1.msra.mxu0 0.0
    %75 = vmatprep.subr.mxu0 0.0
    %76 = vmatpush1.msra.mxu0 0.0
    %77 = vmatprep.subr.mxu0 0.0
    %78 = vmatpush1.msra.mxu0 0.0
    %79 = vmatprep.subr.mxu0 0.0
    %80 = vmatpush1.msra.mxu0 0.0
    %81 = vmatprep.subr.mxu0 0.0
    %82 = vmatpush1.msra.mxu0 0.0
    %83 = vmatprep.subr.mxu0 0.0
    %84 = vmatpush1.msra.mxu0 0.0
    %85 = vmatprep.subr.mxu0 0.0
    %86 = vmatpush1.msra.mxu0 0.0
    %87 = vmatprep.subr.mxu0 0.0
    %88 = vmatpush1.msra.mxu0 0.0
    %89 = vmatprep.subr.mxu0 0.0
    %90 = vmatpush1.msra.mxu0 0.0
    %91 = vmatprep.subr.mxu0 0.0
    %92 = vmatpush1.msra.mxu0 0.0
    %93 = vmatprep.subr.mxu0 0.0
    %94 = vmatpush1.msra.mxu0 0.0
    %95 = vmatprep.subr.mxu0 0.0
    %96 = vmatpush1.msra.mxu0 0.0
    %97 = vmatprep.subr.mxu0 0.0
    %98 = vmatpush1.msra.mxu0 0.0
    %99 = vmatprep.subr.mxu0 0.0
    %100 = vmatpush1.msra.mxu0 0.0
    %101 = vmatprep.subr.mxu0 0.0
    %102 = vmatpush1.msra.mxu0 0.0
    %103 = vmatprep.subr.mxu0 0.0
    %104 = vmatpush1.msra.mxu0 0.0
    %105 = vmatprep.subr.mxu0 0.0
    %106 = vmatpush1.msra.mxu0 0.0
    %107 = vmatprep.subr.mxu0 0.0
    %108 = vmatpush1.msra.mxu0 0.0
    %109 = vmatprep.subr.mxu0 0.0
    %110 = vmatpush1.msra.mxu0 0.0
    %111 = vmatprep.subr.mxu0 0.0
    %112 = vmatpush1.msra.mxu0 0.0
    %113 = vmatprep.subr.mxu0 0.0
    %114 = vmatpush1.msra.mxu0 0.0
    %115 = vmatprep.subr.mxu0 0.0
    %116 = vmatpush1.msra.mxu0 0.0
    %117 = vmatprep.subr.mxu0 0.0
    %118 = vmatpush1.msra.mxu0 0.0
    %119 = vmatprep.subr.mxu0 0.0
    %120 = vmatpush1.msra.mxu0 0.0
    %121 = vmatprep.mubr.f32.mxu0 0.0
    %122 = vmatmul.mubr.f32.gmra.mrb[0].mxu0 %v52
    %v123 = vpop.f32.mrb[0].mxu0
    %v124 = vadd.f32 0.0, %v123
    %v125 = vpop.f32.mrb[0].mxu0
    %126 = vmatprep.mubr.f32.mxu0 0.0
    %127 = vmatmul.mubr.f32.gmra.mrb[0].mxu0 %v55
    %v128 = vpop.f32.mrb[0].mxu0
    %v129 = vadd.f32 0.0, %v128
    %v130 = vpop.f32.mrb[0].mxu0
    %131 = vdwg.mxu0
    %v133 = vlaneseq
    %v134 = vshrl.u32 %v133, 7
    %v135 = vsub.s32 0, %v134
    %v136 = vrot.slane %v42, %v135
    %v138 = vadd.f32 %v136, %v124
    %v139 = vadd.f32 %v136, %v129
    %v140 = vld [vmem:[%s6] sm:$0xff]
    %v141 = vld [vmem:[%s6 + $0x8] sm:$0xff]
    %v142 = vld [vmem:[%s6 + $0x10] sm:$0xff]
    %v143 = vld [vmem:[%s6 + $0x18] sm:$0xff]
    %144 = vmatprep.subr.mxu0 0.0
    %145 = vmatpush1.msra.mxu0 %v140
    %146 = vmatprep.subr.mxu0 0.0
    %147 = vmatpush1.msra.mxu0 %v141
    %148 = vmatprep.subr.mxu0 0.0
    %149 = vmatpush1.msra.mxu0 %v142
    %150 = vmatprep.subr.mxu0 0.0
    %151 = vmatpush1.msra.mxu0 %v143
    %152 = vmatprep.subr.mxu0 0.0
    %153 = vmatpush1.msra.mxu0 0.0
    %154 = vmatprep.subr.mxu0 0.0
    %155 = vmatpush1.msra.mxu0 0.0
    %156 = vmatprep.subr.mxu0 0.0
    %157 = vmatpush1.msra.mxu0 0.0
    %158 = vmatprep.subr.mxu0 0.0
    %159 = vmatpush1.msra.mxu0 0.0
    %160 = vmatprep.subr.mxu0 0.0
    %161 = vmatpush1.msra.mxu0 0.0
    %162 = vmatprep.subr.mxu0 0.0
    %163 = vmatpush1.msra.mxu0 0.0
    %164 = vmatprep.subr.mxu0 0.0
    %165 = vmatpush1.msra.mxu0 0.0
    %166 = vmatprep.subr.mxu0 0.0
    %167 = vmatpush1.msra.mxu0 0.0
    %168 = vmatprep.subr.mxu0 0.0
    %169 = vmatpush1.msra.mxu0 0.0
    %170 = vmatprep.subr.mxu0 0.0
    %171 = vmatpush1.msra.mxu0 0.0
    %172 = vmatprep.subr.mxu0 0.0
    %173 = vmatpush1.msra.mxu0 0.0
    %174 = vmatprep.subr.mxu0 0.0
    %175 = vmatpush1.msra.mxu0 0.0
    %176 = vmatprep.subr.mxu0 0.0
    %177 = vmatpush1.msra.mxu0 0.0
    %178 = vmatprep.subr.mxu0 0.0
    %179 = vmatpush1.msra.mxu0 0.0
    %180 = vmatprep.subr.mxu0 0.0
    %181 = vmatpush1.msra.mxu0 0.0
    %182 = vmatprep.subr.mxu0 0.0
    %183 = vmatpush1.msra.mxu0 0.0
    %184 = vmatprep.subr.mxu0 0.0
    %185 = vmatpush1.msra.mxu0 0.0
    %186 = vmatprep.subr.mxu0 0.0
    %187 = vmatpush1.msra.mxu0 0.0
    %188 = vmatprep.subr.mxu0 0.0
    %189 = vmatpush1.msra.mxu0 0.0
    %190 = vmatprep.subr.mxu0 0.0
    %191 = vmatpush1.msra.mxu0 0.0
    %192 = vmatprep.subr.mxu0 0.0
    %193 = vmatpush1.msra.mxu0 0.0
    %194 = vmatprep.subr.mxu0 0.0
    %195 = vmatpush1.msra.mxu0 0.0
    %196 = vmatprep.subr.mxu0 0.0
    %197 = vmatpush1.msra.mxu0 0.0
    %198 = vmatprep.subr.mxu0 0.0
    %199 = vmatpush1.msra.mxu0 0.0
    %200 = vmatprep.subr.mxu0 0.0
    %201 = vmatpush1.msra.mxu0 0.0
    %202 = vmatprep.subr.mxu0 0.0
    %203 = vmatpush1.msra.mxu0 0.0
    %204 = vmatprep.subr.mxu0 0.0
    %205 = vmatpush1.msra.mxu0 0.0
    %206 = vmatprep.subr.mxu0 0.0
    %207 = vmatpush1.msra.mxu0 0.0
    %208 = vmatprep.mubr.f32.mxu0 0.0
    %209 = vmatmul.mubr.f32.gmra.mrb[0].mxu0 %v52
    %v210 = vpop.f32.mrb[0].mxu0
    %v211 = vadd.f32 0.0, %v210
    %v212 = vpop.f32.mrb[0].mxu0
    %213 = vmatprep.mubr.f32.mxu0 0.0
    %214 = vmatmul.mubr.f32.gmra.mrb[0].mxu0 %v55
    %v215 = vpop.f32.mrb[0].mxu0
    %v216 = vadd.f32 0.0, %v215
    %v217 = vpop.f32.mrb[0].mxu0
    %218 = vdwg.mxu0
    %v220 = vlaneseq
    %v221 = vshrl.u32 %v220, 7
    %v222 = vsub.s32 0, %v221
    %v223 = vrot.slane %v43, %v222
    %v225 = vadd.f32 %v223, %v211
    %v226 = vadd.f32 %v223, %v216
    %v227 = vld [vmem:[%s1] sm:$0xff]
    %v228 = vld [vmem:[%s1 + $0x8] sm:$0xff]
    %v229 = vld [vmem:[%s3] sm:$0xff]
    %v230 = vld [vmem:[%s3 + $0x8] sm:$0xff]
    %v231 = vld [vmem:[%s3 + $0x10] sm:$0xff]
    %v232 = vld [vmem:[%s3 + $0x18] sm:$0xff]
    %v234 = vsel %vm50, %v227, 0
    %v237 = vsel %vm50, %v228, 0
    %239 = vmatprep.subr.mxu0 0.0
    %240 = vmatpush1.msra.mxu0 %v229
    %241 = vmatprep.subr.mxu0 0.0
    %242 = vmatpush1.msra.mxu0 %v230
    %243 = vmatprep.subr.mxu0 0.0
    %244 = vmatpush1.msra.mxu0 %v231
    %245 = vmatprep.subr.mxu0 0.0
    %246 = vmatpush1.msra.mxu0 %v232
    %247 = vmatprep.subr.mxu0 0.0
    %248 = vmatpush1.msra.mxu0 0.0
    %249 = vmatprep.subr.mxu0 0.0
    %250 = vmatpush1.msra.mxu0 0.0
    %251 = vmatprep.subr.mxu0 0.0
    %252 = vmatpush1.msra.mxu0 0.0
    %253 = vmatprep.subr.mxu0 0.0
    %254 = vmatpush1.msra.mxu0 0.0
    %255 = vmatprep.subr.mxu0 0.0
    %256 = vmatpush1.msra.mxu0 0.0
    %257 = vmatprep.subr.mxu0 0.0
    %258 = vmatpush1.msra.mxu0 0.0
    %259 = vmatprep.subr.mxu0 0.0
    %260 = vmatpush1.msra.mxu0 0.0
    %261 = vmatprep.subr.mxu0 0.0
    %262 = vmatpush1.msra.mxu0 0.0
    %263 = vmatprep.subr.mxu0 0.0
    %264 = vmatpush1.msra.mxu0 0.0
    %265 = vmatprep.subr.mxu0 0.0
    %266 = vmatpush1.msra.mxu0 0.0
    %267 = vmatprep.subr.mxu0 0.0
    %268 = vmatpush1.msra.mxu0 0.0
    %269 = vmatprep.subr.mxu0 0.0
    %270 = vmatpush1.msra.mxu0 0.0
    %271 = vmatprep.subr.mxu0 0.0
    %272 = vmatpush1.msra.mxu0 0.0
    %273 = vmatprep.subr.mxu0 0.0
    %274 = vmatpush1.msra.mxu0 0.0
    %275 = vmatprep.subr.mxu0 0.0
    %276 = vmatpush1.msra.mxu0 0.0
    %277 = vmatprep.subr.mxu0 0.0
    %278 = vmatpush1.msra.mxu0 0.0
    %279 = vmatprep.subr.mxu0 0.0
    %280 = vmatpush1.msra.mxu0 0.0
    %281 = vmatprep.subr.mxu0 0.0
    %282 = vmatpush1.msra.mxu0 0.0
    %283 = vmatprep.subr.mxu0 0.0
    %284 = vmatpush1.msra.mxu0 0.0
    %285 = vmatprep.subr.mxu0 0.0
    %286 = vmatpush1.msra.mxu0 0.0
    %287 = vmatprep.subr.mxu0 0.0
    %288 = vmatpush1.msra.mxu0 0.0
    %289 = vmatprep.subr.mxu0 0.0
    %290 = vmatpush1.msra.mxu0 0.0
    %291 = vmatprep.subr.mxu0 0.0
    %292 = vmatpush1.msra.mxu0 0.0
    %293 = vmatprep.subr.mxu0 0.0
    %294 = vmatpush1.msra.mxu0 0.0
    %295 = vmatprep.subr.mxu0 0.0
    %296 = vmatpush1.msra.mxu0 0.0
    %297 = vmatprep.subr.mxu0 0.0
    %298 = vmatpush1.msra.mxu0 0.0
    %299 = vmatprep.subr.mxu0 0.0
    %300 = vmatpush1.msra.mxu0 0.0
    %301 = vmatprep.subr.mxu0 0.0
    %302 = vmatpush1.msra.mxu0 0.0
    %303 = vmatprep.mubr.f32.mxu0 0.0
    %304 = vmatmul.mubr.f32.gmra.mrb[0].mxu0 %v234
    %v305 = vpop.f32.mrb[0].mxu0
    %v306 = vadd.f32 0.0, %v305
    %v307 = vpop.f32.mrb[0].mxu0
    %308 = vmatprep.mubr.f32.mxu0 0.0
    %309 = vmatmul.mubr.f32.gmra.mrb[0].mxu0 %v237
    %v310 = vpop.f32.mrb[0].mxu0
    %v311 = vadd.f32 0.0, %v310
    %v312 = vpop.f32.mrb[0].mxu0
    %313 = vdwg.mxu0
    %v314 = vadd.f32 %v138, %v306
    %v315 = vadd.f32 %v139, %v311
    %v316 = vld [vmem:[%s7] sm:$0xff]
    %v317 = vld [vmem:[%s7 + $0x8] sm:$0xff]
    %v318 = vld [vmem:[%s7 + $0x10] sm:$0xff]
    %v319 = vld [vmem:[%s7 + $0x18] sm:$0xff]
    %320 = vmatprep.subr.mxu0 0.0
    %321 = vmatpush1.msra.mxu0 %v316
    %322 = vmatprep.subr.mxu0 0.0
    %323 = vmatpush1.msra.mxu0 %v317
    %324 = vmatprep.subr.mxu0 0.0
    %325 = vmatpush1.msra.mxu0 %v318
    %326 = vmatprep.subr.mxu0 0.0
    %327 = vmatpush1.msra.mxu0 %v319
    %328 = vmatprep.subr.mxu0 0.0
    %329 = vmatpush1.msra.mxu0 0.0
    %330 = vmatprep.subr.mxu0 0.0
    %331 = vmatpush1.msra.mxu0 0.0
    %332 = vmatprep.subr.mxu0 0.0
    %333 = vmatpush1.msra.mxu0 0.0
    %334 = vmatprep.subr.mxu0 0.0
    %335 = vmatpush1.msra.mxu0 0.0
    %336 = vmatprep.subr.mxu0 0.0
    %337 = vmatpush1.msra.mxu0 0.0
    %338 = vmatprep.subr.mxu0 0.0
    %339 = vmatpush1.msra.mxu0 0.0
    %340 = vmatprep.subr.mxu0 0.0
    %341 = vmatpush1.msra.mxu0 0.0
    %342 = vmatprep.subr.mxu0 0.0
    %343 = vmatpush1.msra.mxu0 0.0
    %344 = vmatprep.subr.mxu0 0.0
    %345 = vmatpush1.msra.mxu0 0.0
    %346 = vmatprep.subr.mxu0 0.0
    %347 = vmatpush1.msra.mxu0 0.0
    %348 = vmatprep.subr.mxu0 0.0
    %349 = vmatpush1.msra.mxu0 0.0
    %350 = vmatprep.subr.mxu0 0.0
    %351 = vmatpush1.msra.mxu0 0.0
    %352 = vmatprep.subr.mxu0 0.0
    %353 = vmatpush1.msra.mxu0 0.0
    %354 = vmatprep.subr.mxu0 0.0
    %355 = vmatpush1.msra.mxu0 0.0
    %356 = vmatprep.subr.mxu0 0.0
    %357 = vmatpush1.msra.mxu0 0.0
    %358 = vmatprep.subr.mxu0 0.0
    %359 = vmatpush1.msra.mxu0 0.0
    %360 = vmatprep.subr.mxu0 0.0
    %361 = vmatpush1.msra.mxu0 0.0
    %362 = vmatprep.subr.mxu0 0.0
    %363 = vmatpush1.msra.mxu0 0.0
    %364 = vmatprep.subr.mxu0 0.0
    %365 = vmatpush1.msra.mxu0 0.0
    %366 = vmatprep.subr.mxu0 0.0
    %367 = vmatpush1.msra.mxu0 0.0
    %368 = vmatprep.subr.mxu0 0.0
    %369 = vmatpush1.msra.mxu0 0.0
    %370 = vmatprep.subr.mxu0 0.0
    %371 = vmatpush1.msra.mxu0 0.0
    %372 = vmatprep.subr.mxu0 0.0
    %373 = vmatpush1.msra.mxu0 0.0
    %374 = vmatprep.subr.mxu0 0.0
    %375 = vmatpush1.msra.mxu0 0.0
    %376 = vmatprep.subr.mxu0 0.0
    %377 = vmatpush1.msra.mxu0 0.0
    %378 = vmatprep.subr.mxu0 0.0
    %379 = vmatpush1.msra.mxu0 0.0
    %380 = vmatprep.subr.mxu0 0.0
    %381 = vmatpush1.msra.mxu0 0.0
    %382 = vmatprep.subr.mxu0 0.0
    %383 = vmatpush1.msra.mxu0 0.0
    %384 = vmatprep.mubr.f32.mxu0 0.0
    %385 = vmatmul.mubr.f32.gmra.mrb[0].mxu0 %v234
    %v386 = vpop.f32.mrb[0].mxu0
    %v387 = vadd.f32 0.0, %v386
    %v388 = vpop.f32.mrb[0].mxu0
    %389 = vmatprep.mubr.f32.mxu0 0.0
    %390 = vmatmul.mubr.f32.gmra.mrb[0].mxu0 %v237
    %v391 = vpop.f32.mrb[0].mxu0
    %v392 = vadd.f32 0.0, %v391
    %v393 = vpop.f32.mrb[0].mxu0
    %394 = vdwg.mxu0
    %v395 = vadd.f32 %v225, %v387
    %v396 = vadd.f32 %v226, %v392
    %v397 = vld [vmem:[%s4] sm:$0xff]
    %v398 = vld [vmem:[%s4 + $0x8] sm:$0xff]
    %v399 = vld [vmem:[%s4 + $0x10] sm:$0xff]
    %v400 = vld [vmem:[%s4 + $0x18] sm:$0xff]
    %v401 = vld [vmem:[%s8] sm:$0xff]
    %v402 = vld [vmem:[%s8 + $0x8] sm:$0xff]
    %v403 = vld [vmem:[%s8 + $0x10] sm:$0xff]
    %v404 = vld [vmem:[%s8 + $0x18] sm:$0xff]
    %v406 = vsel %vm50, 0.0, 0
    %408 = vmatprep.subr.mxu0 0.0
    %409 = vmatpush1.msra.mxu0 %v397
    %410 = vmatprep.subr.mxu0 0.0
    %411 = vmatpush1.msra.mxu0 %v398
    %412 = vmatprep.subr.mxu0 0.0
    %413 = vmatpush1.msra.mxu0 %v399
    %414 = vmatprep.subr.mxu0 0.0
    %415 = vmatpush1.msra.mxu0 %v400
    %416 = vmatprep.subr.mxu0 0.0
    %417 = vmatpush1.msra.mxu0 0.0
    %418 = vmatprep.subr.mxu0 0.0
    %419 = vmatpush1.msra.mxu0 0.0
    %420 = vmatprep.subr.mxu0 0.0
    %421 = vmatpush1.msra.mxu0 0.0
    %422 = vmatprep.subr.mxu0 0.0
    %423 = vmatpush1.msra.mxu0 0.0
    %424 = vmatprep.subr.mxu0 0.0
    %425 = vmatpush1.msra.mxu0 0.0
    %426 = vmatprep.subr.mxu0 0.0
    %427 = vmatpush1.msra.mxu0 0.0
    %428 = vmatprep.subr.mxu0 0.0
    %429 = vmatpush1.msra.mxu0 0.0
    %430 = vmatprep.subr.mxu0 0.0
    %431 = vmatpush1.msra.mxu0 0.0
    %432 = vmatprep.subr.mxu0 0.0
    %433 = vmatpush1.msra.mxu0 0.0
    %434 = vmatprep.subr.mxu0 0.0
    %435 = vmatpush1.msra.mxu0 0.0
    %436 = vmatprep.subr.mxu0 0.0
    %437 = vmatpush1.msra.mxu0 0.0
    %438 = vmatprep.subr.mxu0 0.0
    %439 = vmatpush1.msra.mxu0 0.0
    %440 = vmatprep.subr.mxu0 0.0
    %441 = vmatpush1.msra.mxu0 0.0
    %442 = vmatprep.subr.mxu0 0.0
    %443 = vmatpush1.msra.mxu0 0.0
    %444 = vmatprep.subr.mxu0 0.0
    %445 = vmatpush1.msra.mxu0 0.0
    %446 = vmatprep.subr.mxu0 0.0
    %447 = vmatpush1.msra.mxu0 0.0
    %448 = vmatprep.subr.mxu0 0.0
    %449 = vmatpush1.msra.mxu0 0.0
    %450 = vmatprep.subr.mxu0 0.0
    %451 = vmatpush1.msra.mxu0 0.0
    %452 = vmatprep.subr.mxu0 0.0
    %453 = vmatpush1.msra.mxu0 0.0
    %454 = vmatprep.subr.mxu0 0.0
    %455 = vmatpush1.msra.mxu0 0.0
    %456 = vmatprep.subr.mxu0 0.0
    %457 = vmatpush1.msra.mxu0 0.0
    %458 = vmatprep.subr.mxu0 0.0
    %459 = vmatpush1.msra.mxu0 0.0
    %460 = vmatprep.subr.mxu0 0.0
    %461 = vmatpush1.msra.mxu0 0.0
    %462 = vmatprep.subr.mxu0 0.0
    %463 = vmatpush1.msra.mxu0 0.0
    %464 = vmatprep.subr.mxu0 0.0
    %465 = vmatpush1.msra.mxu0 0.0
    %466 = vmatprep.subr.mxu0 0.0
    %467 = vmatpush1.msra.mxu0 0.0
    %468 = vmatprep.subr.mxu0 0.0
    %469 = vmatpush1.msra.mxu0 0.0
    %470 = vmatprep.subr.mxu0 0.0
    %471 = vmatpush1.msra.mxu0 0.0
    %472 = vmatprep.mubr.f32.mxu0 0.0
    %473 = vmatmul.mubr.f32.gmra.mrb[0].mxu0 %v406
    %v474 = vpop.f32.mrb[0].mxu0
    %v475 = vadd.f32 0.0, %v474
    %v476 = vpop.f32.mrb[0].mxu0
    %477 = vdwg.mxu0
    %v478 = vadd.f32 %v314, %v475
    %479 = vmatprep.subr.mxu0 0.0
    %480 = vmatpush1.msra.mxu0 %v401
    %481 = vmatprep.subr.mxu0 0.0
    %482 = vmatpush1.msra.mxu0 %v402
    %483 = vmatprep.subr.mxu0 0.0
    %484 = vmatpush1.msra.mxu0 %v403
    %485 = vmatprep.subr.mxu0 0.0
    %486 = vmatpush1.msra.mxu0 %v404
    %487 = vmatprep.subr.mxu0 0.0
    %488 = vmatpush1.msra.mxu0 0.0
    %489 = vmatprep.subr.mxu0 0.0
    %490 = vmatpush1.msra.mxu0 0.0
    %491 = vmatprep.subr.mxu0 0.0
    %492 = vmatpush1.msra.mxu0 0.0
    %493 = vmatprep.subr.mxu0 0.0
    %494 = vmatpush1.msra.mxu0 0.0
    %495 = vmatprep.subr.mxu0 0.0
    %496 = vmatpush1.msra.mxu0 0.0
    %497 = vmatprep.subr.mxu0 0.0
    %498 = vmatpush1.msra.mxu0 0.0
    %499 = vmatprep.subr.mxu0 0.0
    %500 = vmatpush1.msra.mxu0 0.0
    %501 = vmatprep.subr.mxu0 0.0
    %502 = vmatpush1.msra.mxu0 0.0
    %503 = vmatprep.subr.mxu0 0.0
    %504 = vmatpush1.msra.mxu0 0.0
    %505 = vmatprep.subr.mxu0 0.0
    %506 = vmatpush1.msra.mxu0 0.0
    %507 = vmatprep.subr.mxu0 0.0
    %508 = vmatpush1.msra.mxu0 0.0
    %509 = vmatprep.subr.mxu0 0.0
    %510 = vmatpush1.msra.mxu0 0.0
    %511 = vmatprep.subr.mxu0 0.0
    %512 = vmatpush1.msra.mxu0 0.0
    %513 = vmatprep.subr.mxu0 0.0
    %514 = vmatpush1.msra.mxu0 0.0
    %515 = vmatprep.subr.mxu0 0.0
    %516 = vmatpush1.msra.mxu0 0.0
    %517 = vmatprep.subr.mxu0 0.0
    %518 = vmatpush1.msra.mxu0 0.0
    %519 = vmatprep.subr.mxu0 0.0
    %520 = vmatpush1.msra.mxu0 0.0
    %521 = vmatprep.subr.mxu0 0.0
    %522 = vmatpush1.msra.mxu0 0.0
    %523 = vmatprep.subr.mxu0 0.0
    %524 = vmatpush1.msra.mxu0 0.0
    %525 = vmatprep.subr.mxu0 0.0
    %526 = vmatpush1.msra.mxu0 0.0
    %527 = vmatprep.subr.mxu0 0.0
    %528 = vmatpush1.msra.mxu0 0.0
    %529 = vmatprep.subr.mxu0 0.0
    %530 = vmatpush1.msra.mxu0 0.0
    %531 = vmatprep.subr.mxu0 0.0
    %532 = vmatpush1.msra.mxu0 0.0
    %533 = vmatprep.subr.mxu0 0.0
    %534 = vmatpush1.msra.mxu0 0.0
    %535 = vmatprep.subr.mxu0 0.0
    %536 = vmatpush1.msra.mxu0 0.0
    %537 = vmatprep.subr.mxu0 0.0
    %538 = vmatpush1.msra.mxu0 0.0
    %539 = vmatprep.subr.mxu0 0.0
    %540 = vmatpush1.msra.mxu0 0.0
    %541 = vmatprep.subr.mxu0 0.0
    %542 = vmatpush1.msra.mxu0 0.0
    %543 = vmatprep.mubr.f32.mxu0 0.0
    %544 = vmatmul.mubr.f32.gmra.mrb[0].mxu0 %v406
    %v545 = vpop.f32.mrb[0].mxu0
    %v546 = vadd.f32 0.0, %v545
    %v547 = vpop.f32.mrb[0].mxu0
    %548 = vdwg.mxu0
    %v550 = vrot.slane %v546, 2
    %v552 = vadd.f32 %v396, %v550
    %v553 = vxor.u32 %v478, 2147483648
    %v554 = vmul.f32 %v553, 1.442695
    %v555 = vpow.pop %v554
    %v556 = vadd.f32 %v555, 1.0
    %v557 = vrcp.pop %v556
    %v558 = vmul.f32 1.0, %v557
    %v559 = vtanh.pop %v478
    %v560 = vmul.f32 %v558, 0.0
    %562 = vrot.lane.b32.xlu0 %v559, 64
    %v563 = vpop.permute.xlu0 %562
    %v565 = vmul.f32 %v558, %v563
    %567 = vrot.lane.b32.xlu0 %v565, 32
    %v568 = vpop.permute.xlu0 %567
    %v570 = vadd.f32 %v560, %v568
    %v571 = vtanh.pop %v570
    %573 = vrot.lane.b32.xlu0 %v571, 64
    %v574 = vpop.permute.xlu0 %573
    %v576 = vmul.f32 %v558, %v574
    %v577 = vxor.u32 %v552, 2147483648
    %v578 = vmul.f32 %v577, 1.442695
    %v579 = vpow.pop %v578
    %v580 = vadd.f32 %v579, 1.0
    %v581 = vrcp.pop %v580
    %v582 = vmul.f32 1.0, %v581
    %v583 = vtanh.pop %v552
    %v584 = vmul.f32 %v582, 0.0
    %586 = vrot.lane.b32.xlu0 %v583, 64
    %v587 = vpop.permute.xlu0 %586
    %v589 = vmul.f32 %v582, %v587
    %591 = vrot.lane.b32.xlu0 %v589, 32
    %v592 = vpop.permute.xlu0 %591
    %v594 = vadd.f32 %v584, %v592
    %v595 = vtanh.pop %v594
    %597 = vrot.lane.b32.xlu0 %v595, 64
    %v598 = vpop.permute.xlu0 %597
    %v600 = vmul.f32 %v582, %v598
    %602 = vrot.lane.b32.xlu0 %v576, 32
    %v603 = vpop.permute.xlu0 %602
    %v604 = vsel %vm50, %v603, 0
    %606 = vmatprep.subr.mxu0 0.0
    %607 = vmatpush1.msra.mxu0 %v397
    %608 = vmatprep.subr.mxu0 0.0
    %609 = vmatpush1.msra.mxu0 %v398
    %610 = vmatprep.subr.mxu0 0.0
    %611 = vmatpush1.msra.mxu0 %v399
    %612 = vmatprep.subr.mxu0 0.0
    %613 = vmatpush1.msra.mxu0 %v400
    %614 = vmatprep.subr.mxu0 0.0
    %615 = vmatpush1.msra.mxu0 0.0
    %616 = vmatprep.subr.mxu0 0.0
    %617 = vmatpush1.msra.mxu0 0.0
    %618 = vmatprep.subr.mxu0 0.0
    %619 = vmatpush1.msra.mxu0 0.0
    %620 = vmatprep.subr.mxu0 0.0
    %621 = vmatpush1.msra.mxu0 0.0
    %622 = vmatprep.subr.mxu0 0.0
    %623 = vmatpush1.msra.mxu0 0.0
    %624 = vmatprep.subr.mxu0 0.0
    %625 = vmatpush1.msra.mxu0 0.0
    %626 = vmatprep.subr.mxu0 0.0
    %627 = vmatpush1.msra.mxu0 0.0
    %628 = vmatprep.subr.mxu0 0.0
    %629 = vmatpush1.msra.mxu0 0.0
    %630 = vmatprep.subr.mxu0 0.0
    %631 = vmatpush1.msra.mxu0 0.0
    %632 = vmatprep.subr.mxu0 0.0
    %633 = vmatpush1.msra.mxu0 0.0
    %634 = vmatprep.subr.mxu0 0.0
    %635 = vmatpush1.msra.mxu0 0.0
    %636 = vmatprep.subr.mxu0 0.0
    %637 = vmatpush1.msra.mxu0 0.0
    %638 = vmatprep.subr.mxu0 0.0
    %639 = vmatpush1.msra.mxu0 0.0
    %640 = vmatprep.subr.mxu0 0.0
    %641 = vmatpush1.msra.mxu0 0.0
    %642 = vmatprep.subr.mxu0 0.0
    %643 = vmatpush1.msra.mxu0 0.0
    %644 = vmatprep.subr.mxu0 0.0
    %645 = vmatpush1.msra.mxu0 0.0
    %646 = vmatprep.subr.mxu0 0.0
    %647 = vmatpush1.msra.mxu0 0.0
    %648 = vmatprep.subr.mxu0 0.0
    %649 = vmatpush1.msra.mxu0 0.0
    %650 = vmatprep.subr.mxu0 0.0
    %651 = vmatpush1.msra.mxu0 0.0
    %652 = vmatprep.subr.mxu0 0.0
    %653 = vmatpush1.msra.mxu0 0.0
    %654 = vmatprep.subr.mxu0 0.0
    %655 = vmatpush1.msra.mxu0 0.0
    %656 = vmatprep.subr.mxu0 0.0
    %657 = vmatpush1.msra.mxu0 0.0
    %658 = vmatprep.subr.mxu0 0.0
    %659 = vmatpush1.msra.mxu0 0.0
    %660 = vmatprep.subr.mxu0 0.0
    %661 = vmatpush1.msra.mxu0 0.0
    %662 = vmatprep.subr.mxu0 0.0
    %663 = vmatpush1.msra.mxu0 0.0
    %664 = vmatprep.subr.mxu0 0.0
    %665 = vmatpush1.msra.mxu0 0.0
    %666 = vmatprep.subr.mxu0 0.0
    %667 = vmatpush1.msra.mxu0 0.0
    %668 = vmatprep.subr.mxu0 0.0
    %669 = vmatpush1.msra.mxu0 0.0
    %670 = vmatprep.mubr.f32.mxu0 0.0
    %671 = vmatmul.mubr.f32.gmra.mrb[0].mxu0 %v604
    %v672 = vpop.f32.mrb[0].mxu0
    %v673 = vadd.f32 0.0, %v672
    %v674 = vpop.f32.mrb[0].mxu0
    %675 = vdwg.mxu0
    %v677 = vrot.slane %v673, 6
    %v679 = vadd.f32 %v314, %v677
    %v681 = vrot.slane %v600, 6
    %682 = vrot.lane.b32.xlu0 %v681, 32
    %v683 = vpop.permute.xlu0 %682
    %v684 = vsel %vm50, %v683, 0
    %686 = vmatprep.subr.mxu0 0.0
    %687 = vmatpush1.msra.mxu0 %v401
    %688 = vmatprep.subr.mxu0 0.0
    %689 = vmatpush1.msra.mxu0 %v402
    %690 = vmatprep.subr.mxu0 0.0
    %691 = vmatpush1.msra.mxu0 %v403
    %692 = vmatprep.subr.mxu0 0.0
    %693 = vmatpush1.msra.mxu0 %v404
    %694 = vmatprep.subr.mxu0 0.0
    %695 = vmatpush1.msra.mxu0 0.0
    %696 = vmatprep.subr.mxu0 0.0
    %697 = vmatpush1.msra.mxu0 0.0
    %698 = vmatprep.subr.mxu0 0.0
    %699 = vmatpush1.msra.mxu0 0.0
    %700 = vmatprep.subr.mxu0 0.0
    %701 = vmatpush1.msra.mxu0 0.0
    %702 = vmatprep.subr.mxu0 0.0
    %703 = vmatpush1.msra.mxu0 0.0
    %704 = vmatprep.subr.mxu0 0.0
    %705 = vmatpush1.msra.mxu0 0.0
    %706 = vmatprep.subr.mxu0 0.0
    %707 = vmatpush1.msra.mxu0 0.0
    %708 = vmatprep.subr.mxu0 0.0
    %709 = vmatpush1.msra.mxu0 0.0
    %710 = vmatprep.subr.mxu0 0.0
    %711 = vmatpush1.msra.mxu0 0.0
    %712 = vmatprep.subr.mxu0 0.0
    %713 = vmatpush1.msra.mxu0 0.0
    %714 = vmatprep.subr.mxu0 0.0
    %715 = vmatpush1.msra.mxu0 0.0
    %716 = vmatprep.subr.mxu0 0.0
    %717 = vmatpush1.msra.mxu0 0.0
    %718 = vmatprep.subr.mxu0 0.0
    %719 = vmatpush1.msra.mxu0 0.0
    %720 = vmatprep.subr.mxu0 0.0
    %721 = vmatpush1.msra.mxu0 0.0
    %722 = vmatprep.subr.mxu0 0.0
    %723 = vmatpush1.msra.mxu0 0.0
    %724 = vmatprep.subr.mxu0 0.0
    %725 = vmatpush1.msra.mxu0 0.0
    %726 = vmatprep.subr.mxu0 0.0
    %727 = vmatpush1.msra.mxu0 0.0
    %728 = vmatprep.subr.mxu0 0.0
    %729 = vmatpush1.msra.mxu0 0.0
    %730 = vmatprep.subr.mxu0 0.0
    %731 = vmatpush1.msra.mxu0 0.0
    %732 = vmatprep.subr.mxu0 0.0
    %733 = vmatpush1.msra.mxu0 0.0
    %734 = vmatprep.subr.mxu0 0.0
    %735 = vmatpush1.msra.mxu0 0.0
    %736 = vmatprep.subr.mxu0 0.0
    %737 = vmatpush1.msra.mxu0 0.0
    %738 = vmatprep.subr.mxu0 0.0
    %739 = vmatpush1.msra.mxu0 0.0
    %740 = vmatprep.subr.mxu0 0.0
    %741 = vmatpush1.msra.mxu0 0.0
    %742 = vmatprep.subr.mxu0 0.0
    %743 = vmatpush1.msra.mxu0 0.0
    %744 = vmatprep.subr.mxu0 0.0
    %745 = vmatpush1.msra.mxu0 0.0
    %746 = vmatprep.subr.mxu0 0.0
    %747 = vmatpush1.msra.mxu0 0.0
    %748 = vmatprep.subr.mxu0 0.0
    %749 = vmatpush1.msra.mxu0 0.0
    %750 = vmatprep.mubr.f32.mxu0 0.0
    %751 = vmatmul.mubr.f32.gmra.mrb[0].mxu0 %v684
    %v752 = vpop.f32.mrb[0].mxu0
    %v753 = vadd.f32 0.0, %v752
    %v754 = vpop.f32.mrb[0].mxu0
    %755 = vdwg.mxu0
    %v757 = vrot.slane %v753, 4
    %v759 = vadd.f32 %v396, %v757
    %v760 = vxor.u32 %v679, 2147483648
    %v761 = vmul.f32 %v760, 1.442695
    %v762 = vpow.pop %v761
    %v763 = vadd.f32 %v762, 1.0
    %v764 = vrcp.pop %v763
    %v765 = vmul.f32 1.0, %v764
    %v766 = vtanh.pop %v679
    %v768 = vrot.slane %v570, 6
    %v770 = vmul.f32 %v765, %v768
    %772 = vrot.lane.b32.xlu0 %v766, 64
    %v773 = vpop.permute.xlu0 %772
    %v775 = vmul.f32 %v765, %v773
    %777 = vrot.lane.b32.xlu0 %v775, 32
    %v778 = vpop.permute.xlu0 %777
    %v780 = vadd.f32 %v770, %v778
    %v781 = vtanh.pop %v780
    %783 = vrot.lane.b32.xlu0 %v781, 64
    %v784 = vpop.permute.xlu0 %783
    %v786 = vmul.f32 %v765, %v784
    %v787 = vxor.u32 %v759, 2147483648
    %v788 = vmul.f32 %v787, 1.442695
    %v789 = vpow.pop %v788
    %v790 = vadd.f32 %v789, 1.0
    %v791 = vrcp.pop %v790
    %v792 = vmul.f32 1.0, %v791
    %v793 = vtanh.pop %v759
    %v795 = vrot.slane %v594, 2
    %v797 = vmul.f32 %v792, %v795
    %799 = vrot.lane.b32.xlu0 %v793, 64
    %v800 = vpop.permute.xlu0 %799
    %v802 = vmul.f32 %v792, %v800
    %804 = vrot.lane.b32.xlu0 %v802, 32
    %v805 = vpop.permute.xlu0 %804
    %v807 = vadd.f32 %v797, %v805
    %v808 = vtanh.pop %v807
    %810 = vrot.lane.b32.xlu0 %v808, 64
    %v811 = vpop.permute.xlu0 %810
    %v813 = vmul.f32 %v792, %v811
    %v815 = vrot.slane %v786, 2
    %816 = vrot.lane.b32.xlu0 %v815, 32
    %v817 = vpop.permute.xlu0 %816
    %v818 = vsel %vm50, %v817, 0
    %820 = vmatprep.subr.mxu0 0.0
    %821 = vmatpush1.msra.mxu0 %v397
    %822 = vmatprep.subr.mxu0 0.0
    %823 = vmatpush1.msra.mxu0 %v398
    %824 = vmatprep.subr.mxu0 0.0
    %825 = vmatpush1.msra.mxu0 %v399
    %826 = vmatprep.subr.mxu0 0.0
    %827 = vmatpush1.msra.mxu0 %v400
    %828 = vmatprep.subr.mxu0 0.0
    %829 = vmatpush1.msra.mxu0 0.0
    %830 = vmatprep.subr.mxu0 0.0
    %831 = vmatpush1.msra.mxu0 0.0
    %832 = vmatprep.subr.mxu0 0.0
    %833 = vmatpush1.msra.mxu0 0.0
    %834 = vmatprep.subr.mxu0 0.0
    %835 = vmatpush1.msra.mxu0 0.0
    %836 = vmatprep.subr.mxu0 0.0
    %837 = vmatpush1.msra.mxu0 0.0
    %838 = vmatprep.subr.mxu0 0.0
    %839 = vmatpush1.msra.mxu0 0.0
    %840 = vmatprep.subr.mxu0 0.0
    %841 = vmatpush1.msra.mxu0 0.0
    %842 = vmatprep.subr.mxu0 0.0
    %843 = vmatpush1.msra.mxu0 0.0
    %844 = vmatprep.subr.mxu0 0.0
    %845 = vmatpush1.msra.mxu0 0.0
    %846 = vmatprep.subr.mxu0 0.0
    %847 = vmatpush1.msra.mxu0 0.0
    %848 = vmatprep.subr.mxu0 0.0
    %849 = vmatpush1.msra.mxu0 0.0
    %850 = vmatprep.subr.mxu0 0.0
    %851 = vmatpush1.msra.mxu0 0.0
    %852 = vmatprep.subr.mxu0 0.0
    %853 = vmatpush1.msra.mxu0 0.0
    %854 = vmatprep.subr.mxu0 0.0
    %855 = vmatpush1.msra.mxu0 0.0
    %856 = vmatprep.subr.mxu0 0.0
    %857 = vmatpush1.msra.mxu0 0.0
    %858 = vmatprep.subr.mxu0 0.0
    %859 = vmatpush1.msra.mxu0 0.0
    %860 = vmatprep.subr.mxu0 0.0
    %861 = vmatpush1.msra.mxu0 0.0
    %862 = vmatprep.subr.mxu0 0.0
    %863 = vmatpush1.msra.mxu0 0.0
    %864 = vmatprep.subr.mxu0 0.0
    %865 = vmatpush1.msra.mxu0 0.0
    %866 = vmatprep.subr.mxu0 0.0
    %867 = vmatpush1.msra.mxu0 0.0
    %868 = vmatprep.subr.mxu0 0.0
    %869 = vmatpush1.msra.mxu0 0.0
    %870 = vmatprep.subr.mxu0 0.0
    %871 = vmatpush1.msra.mxu0 0.0
    %872 = vmatprep.subr.mxu0 0.0
    %873 = vmatpush1.msra.mxu0 0.0
    %874 = vmatprep.subr.mxu0 0.0
    %875 = vmatpush1.msra.mxu0 0.0
    %876 = vmatprep.subr.mxu0 0.0
    %877 = vmatpush1.msra.mxu0 0.0
    %878 = vmatprep.subr.mxu0 0.0
    %879 = vmatpush1.msra.mxu0 0.0
    %880 = vmatprep.subr.mxu0 0.0
    %881 = vmatpush1.msra.mxu0 0.0
    %882 = vmatprep.subr.mxu0 0.0
    %883 = vmatpush1.msra.mxu0 0.0
    %884 = vmatprep.mubr.f32.mxu0 0.0
    %885 = vmatmul.mubr.f32.gmra.mrb[0].mxu0 %v818
    %v886 = vpop.f32.mrb[0].mxu0
    %v887 = vadd.f32 0.0, %v886
    %v888 = vpop.f32.mrb[0].mxu0
    %889 = vdwg.mxu0
    %v891 = vrot.slane %v887, 4
    %v893 = vadd.f32 %v314, %v891
    %v895 = vrot.slane %v813, 4
    %896 = vrot.lane.b32.xlu0 %v895, 32
    %v897 = vpop.permute.xlu0 %896
    %v898 = vsel %vm50, %v897, 0
    %900 = vmatprep.subr.mxu0 0.0
    %901 = vmatpush1.msra.mxu0 %v401
    %902 = vmatprep.subr.mxu0 0.0
    %903 = vmatpush1.msra.mxu0 %v402
    %904 = vmatprep.subr.mxu0 0.0
    %905 = vmatpush1.msra.mxu0 %v403
    %906 = vmatprep.subr.mxu0 0.0
    %907 = vmatpush1.msra.mxu0 %v404
    %908 = vmatprep.subr.mxu0 0.0
    %909 = vmatpush1.msra.mxu0 0.0
    %910 = vmatprep.subr.mxu0 0.0
    %911 = vmatpush1.msra.mxu0 0.0
    %912 = vmatprep.subr.mxu0 0.0
    %913 = vmatpush1.msra.mxu0 0.0
    %914 = vmatprep.subr.mxu0 0.0
    %915 = vmatpush1.msra.mxu0 0.0
    %916 = vmatprep.subr.mxu0 0.0
    %917 = vmatpush1.msra.mxu0 0.0
    %918 = vmatprep.subr.mxu0 0.0
    %919 = vmatpush1.msra.mxu0 0.0
    %920 = vmatprep.subr.mxu0 0.0
    %921 = vmatpush1.msra.mxu0 0.0
    %922 = vmatprep.subr.mxu0 0.0
    %923 = vmatpush1.msra.mxu0 0.0
    %924 = vmatprep.subr.mxu0 0.0
    %925 = vmatpush1.msra.mxu0 0.0
    %926 = vmatprep.subr.mxu0 0.0
    %927 = vmatpush1.msra.mxu0 0.0
    %928 = vmatprep.subr.mxu0 0.0
    %929 = vmatpush1.msra.mxu0 0.0
    %930 = vmatprep.subr.mxu0 0.0
    %931 = vmatpush1.msra.mxu0 0.0
    %932 = vmatprep.subr.mxu0 0.0
    %933 = vmatpush1.msra.mxu0 0.0
    %934 = vmatprep.subr.mxu0 0.0
    %935 = vmatpush1.msra.mxu0 0.0
    %936 = vmatprep.subr.mxu0 0.0
    %937 = vmatpush1.msra.mxu0 0.0
    %938 = vmatprep.subr.mxu0 0.0
    %939 = vmatpush1.msra.mxu0 0.0
    %940 = vmatprep.subr.mxu0 0.0
    %941 = vmatpush1.msra.mxu0 0.0
    %942 = vmatprep.subr.mxu0 0.0
    %943 = vmatpush1.msra.mxu0 0.0
    %944 = vmatprep.subr.mxu0 0.0
    %945 = vmatpush1.msra.mxu0 0.0
    %946 = vmatprep.subr.mxu0 0.0
    %947 = vmatpush1.msra.mxu0 0.0
    %948 = vmatprep.subr.mxu0 0.0
    %949 = vmatpush1.msra.mxu0 0.0
    %950 = vmatprep.subr.mxu0 0.0
    %951 = vmatpush1.msra.mxu0 0.0
    %952 = vmatprep.subr.mxu0 0.0
    %953 = vmatpush1.msra.mxu0 0.0
    %954 = vmatprep.subr.mxu0 0.0
    %955 = vmatpush1.msra.mxu0 0.0
    %956 = vmatprep.subr.mxu0 0.0
    %957 = vmatpush1.msra.mxu0 0.0
    %958 = vmatprep.subr.mxu0 0.0
    %959 = vmatpush1.msra.mxu0 0.0
    %960 = vmatprep.subr.mxu0 0.0
    %961 = vmatpush1.msra.mxu0 0.0
    %962 = vmatprep.subr.mxu0 0.0
    %963 = vmatpush1.msra.mxu0 0.0
    %964 = vmatprep.mubr.f32.mxu0 0.0
    %965 = vmatmul.mubr.f32.gmra.mrb[0].mxu0 %v898
    %v966 = vpop.f32.mrb[0].mxu0
    %v967 = vadd.f32 0.0, %v966
    %v968 = vpop.f32.mrb[0].mxu0
    %969 = vdwg.mxu0
    %v971 = vrot.slane %v967, 6
    %v973 = vadd.f32 %v396, %v971
    %v974 = vxor.u32 %v893, 2147483648
    %v975 = vmul.f32 %v974, 1.442695
    %v976 = vpow.pop %v975
    %v977 = vadd.f32 %v976, 1.0
    %v978 = vrcp.pop %v977
    %v979 = vmul.f32 1.0, %v978
    %v980 = vtanh.pop %v893
    %v982 = vrot.slane %v780, 6
    %v984 = vmul.f32 %v979, %v982
    %986 = vrot.lane.b32.xlu0 %v980, 64
    %v987 = vpop.permute.xlu0 %986
    %v989 = vmul.f32 %v979, %v987
    %991 = vrot.lane.b32.xlu0 %v989, 32
    %v992 = vpop.permute.xlu0 %991
    %v994 = vadd.f32 %v984, %v992
    %v995 = vtanh.pop %v994
    %997 = vrot.lane.b32.xlu0 %v995, 64
    %v998 = vpop.permute.xlu0 %997
    %v1000 = vmul.f32 %v979, %v998
    %v1001 = vxor.u32 %v973, 2147483648
    %v1002 = vmul.f32 %v1001, 1.442695
    %v1003 = vpow.pop %v1002
    %v1004 = vadd.f32 %v1003, 1.0
    %v1005 = vrcp.pop %v1004
    %v1006 = vmul.f32 1.0, %v1005
    %v1007 = vtanh.pop %v973
    %v1009 = vrot.slane %v807, 2
    %v1011 = vmul.f32 %v1006, %v1009
    %1013 = vrot.lane.b32.xlu0 %v1007, 64
    %v1014 = vpop.permute.xlu0 %1013
    %v1016 = vmul.f32 %v1006, %v1014
    %1018 = vrot.lane.b32.xlu0 %v1016, 32
    %v1019 = vpop.permute.xlu0 %1018
    %v1021 = vadd.f32 %v1011, %v1019
    %v1022 = vtanh.pop %v1021
    %1024 = vrot.lane.b32.xlu0 %v1022, 64
    %v1025 = vpop.permute.xlu0 %1024
    %v1027 = vmul.f32 %v1006, %v1025
    %v1029 = vrot.slane %v1000, 4
    %1030 = vrot.lane.b32.xlu0 %v1029, 32
    %v1031 = vpop.permute.xlu0 %1030
    %v1032 = vsel %vm50, %v1031, 0
    %1034 = vmatprep.subr.mxu0 0.0
    %1035 = vmatpush1.msra.mxu0 %v397
    %1036 = vmatprep.subr.mxu0 0.0
    %1037 = vmatpush1.msra.mxu0 %v398
    %1038 = vmatprep.subr.mxu0 0.0
    %1039 = vmatpush1.msra.mxu0 %v399
    %1040 = vmatprep.subr.mxu0 0.0
    %1041 = vmatpush1.msra.mxu0 %v400
    %1042 = vmatprep.subr.mxu0 0.0
    %1043 = vmatpush1.msra.mxu0 0.0
    %1044 = vmatprep.subr.mxu0 0.0
    %1045 = vmatpush1.msra.mxu0 0.0
    %1046 = vmatprep.subr.mxu0 0.0
    %1047 = vmatpush1.msra.mxu0 0.0
    %1048 = vmatprep.subr.mxu0 0.0
    %1049 = vmatpush1.msra.mxu0 0.0
    %1050 = vmatprep.subr.mxu0 0.0
    %1051 = vmatpush1.msra.mxu0 0.0
    %1052 = vmatprep.subr.mxu0 0.0
    %1053 = vmatpush1.msra.mxu0 0.0
    %1054 = vmatprep.subr.mxu0 0.0
    %1055 = vmatpush1.msra.mxu0 0.0
    %1056 = vmatprep.subr.mxu0 0.0
    %1057 = vmatpush1.msra.mxu0 0.0
    %1058 = vmatprep.subr.mxu0 0.0
    %1059 = vmatpush1.msra.mxu0 0.0
    %1060 = vmatprep.subr.mxu0 0.0
    %1061 = vmatpush1.msra.mxu0 0.0
    %1062 = vmatprep.subr.mxu0 0.0
    %1063 = vmatpush1.msra.mxu0 0.0
    %1064 = vmatprep.subr.mxu0 0.0
    %1065 = vmatpush1.msra.mxu0 0.0
    %1066 = vmatprep.subr.mxu0 0.0
    %1067 = vmatpush1.msra.mxu0 0.0
    %1068 = vmatprep.subr.mxu0 0.0
    %1069 = vmatpush1.msra.mxu0 0.0
    %1070 = vmatprep.subr.mxu0 0.0
    %1071 = vmatpush1.msra.mxu0 0.0
    %1072 = vmatprep.subr.mxu0 0.0
    %1073 = vmatpush1.msra.mxu0 0.0
    %1074 = vmatprep.subr.mxu0 0.0
    %1075 = vmatpush1.msra.mxu0 0.0
    %1076 = vmatprep.subr.mxu0 0.0
    %1077 = vmatpush1.msra.mxu0 0.0
    %1078 = vmatprep.subr.mxu0 0.0
    %1079 = vmatpush1.msra.mxu0 0.0
    %1080 = vmatprep.subr.mxu0 0.0
    %1081 = vmatpush1.msra.mxu0 0.0
    %1082 = vmatprep.subr.mxu0 0.0
    %1083 = vmatpush1.msra.mxu0 0.0
    %1084 = vmatprep.subr.mxu0 0.0
    %1085 = vmatpush1.msra.mxu0 0.0
    %1086 = vmatprep.subr.mxu0 0.0
    %1087 = vmatpush1.msra.mxu0 0.0
    %1088 = vmatprep.subr.mxu0 0.0
    %1089 = vmatpush1.msra.mxu0 0.0
    %1090 = vmatprep.subr.mxu0 0.0
    %1091 = vmatpush1.msra.mxu0 0.0
    %1092 = vmatprep.subr.mxu0 0.0
    %1093 = vmatpush1.msra.mxu0 0.0
    %1094 = vmatprep.subr.mxu0 0.0
    %1095 = vmatpush1.msra.mxu0 0.0
    %1096 = vmatprep.subr.mxu0 0.0
    %1097 = vmatpush1.msra.mxu0 0.0
    %1098 = vmatprep.mubr.f32.mxu0 0.0
    %1099 = vmatmul.mubr.f32.gmra.mrb[0].mxu0 %v1032
    %v1100 = vpop.f32.mrb[0].mxu0
    %v1101 = vadd.f32 0.0, %v1100
    %v1102 = vpop.f32.mrb[0].mxu0
    %1103 = vdwg.mxu0
    %v1105 = vrot.slane %v1101, 2
    %v1107 = vadd.f32 %v314, %v1105
    %v1109 = vrot.slane %v1027, 2
    %1110 = vrot.lane.b32.xlu0 %v1109, 32
    %v1111 = vpop.permute.xlu0 %1110
    %v1112 = vsel %vm50, %v1111, 0
    %1114 = vmatprep.subr.mxu0 0.0
    %1115 = vmatpush1.msra.mxu0 %v401
    %1116 = vmatprep.subr.mxu0 0.0
    %1117 = vmatpush1.msra.mxu0 %v402
    %1118 = vmatprep.subr.mxu0 0.0
    %1119 = vmatpush1.msra.mxu0 %v403
    %1120 = vmatprep.subr.mxu0 0.0
    %1121 = vmatpush1.msra.mxu0 %v404
    %1122 = vmatprep.subr.mxu0 0.0
    %1123 = vmatpush1.msra.mxu0 0.0
    %1124 = vmatprep.subr.mxu0 0.0
    %1125 = vmatpush1.msra.mxu0 0.0
    %1126 = vmatprep.subr.mxu0 0.0
    %1127 = vmatpush1.msra.mxu0 0.0
    %1128 = vmatprep.subr.mxu0 0.0
    %1129 = vmatpush1.msra.mxu0 0.0
    %1130 = vmatprep.subr.mxu0 0.0
    %1131 = vmatpush1.msra.mxu0 0.0
    %1132 = vmatprep.subr.mxu0 0.0
    %1133 = vmatpush1.msra.mxu0 0.0
    %1134 = vmatprep.subr.mxu0 0.0
    %1135 = vmatpush1.msra.mxu0 0.0
    %1136 = vmatprep.subr.mxu0 0.0
    %1137 = vmatpush1.msra.mxu0 0.0
    %1138 = vmatprep.subr.mxu0 0.0
    %1139 = vmatpush1.msra.mxu0 0.0
    %1140 = vmatprep.subr.mxu0 0.0
    %1141 = vmatpush1.msra.mxu0 0.0
    %1142 = vmatprep.subr.mxu0 0.0
    %1143 = vmatpush1.msra.mxu0 0.0
    %1144 = vmatprep.subr.mxu0 0.0
    %1145 = vmatpush1.msra.mxu0 0.0
    %1146 = vmatprep.subr.mxu0 0.0
    %1147 = vmatpush1.msra.mxu0 0.0
    %1148 = vmatprep.subr.mxu0 0.0
    %1149 = vmatpush1.msra.mxu0 0.0
    %1150 = vmatprep.subr.mxu0 0.0
    %1151 = vmatpush1.msra.mxu0 0.0
    %1152 = vmatprep.subr.mxu0 0.0
    %1153 = vmatpush1.msra.mxu0 0.0
    %1154 = vmatprep.subr.mxu0 0.0
    %1155 = vmatpush1.msra.mxu0 0.0
    %1156 = vmatprep.subr.mxu0 0.0
    %1157 = vmatpush1.msra.mxu0 0.0
    %1158 = vmatprep.subr.mxu0 0.0
    %1159 = vmatpush1.msra.mxu0 0.0
    %1160 = vmatprep.subr.mxu0 0.0
    %1161 = vmatpush1.msra.mxu0 0.0
    %1162 = vmatprep.subr.mxu0 0.0
    %1163 = vmatpush1.msra.mxu0 0.0
    %1164 = vmatprep.subr.mxu0 0.0
    %1165 = vmatpush1.msra.mxu0 0.0
    %1166 = vmatprep.subr.mxu0 0.0
    %1167 = vmatpush1.msra.mxu0 0.0
    %1168 = vmatprep.subr.mxu0 0.0
    %1169 = vmatpush1.msra.mxu0 0.0
    %1170 = vmatprep.subr.mxu0 0.0
    %1171 = vmatpush1.msra.mxu0 0.0
    %1172 = vmatprep.subr.mxu0 0.0
    %1173 = vmatpush1.msra.mxu0 0.0
    %1174 = vmatprep.subr.mxu0 0.0
    %1175 = vmatpush1.msra.mxu0 0.0
    %1176 = vmatprep.subr.mxu0 0.0
    %1177 = vmatpush1.msra.mxu0 0.0
    %1178 = vmatprep.mubr.f32.mxu0 0.0
    %1179 = vmatmul.mubr.f32.gmra.mrb[0].mxu0 %v1112
    %v1180 = vpop.f32.mrb[0].mxu0
    %v1181 = vadd.f32 0.0, %v1180
    %v1182 = vpop.f32.mrb[0].mxu0
    %1183 = vdwg.mxu0
    %v1184 = vadd.f32 %v396, %v1181
    %v1185 = vxor.u32 %v1107, 2147483648
    %v1186 = vmul.f32 %v1185, 1.442695
    %v1187 = vpow.pop %v1186
    %v1188 = vadd.f32 %v1187, 1.0
    %v1189 = vrcp.pop %v1188
    %v1190 = vmul.f32 1.0, %v1189
    %v1191 = vtanh.pop %v1107
    %v1193 = vrot.slane %v994, 6
    %v1195 = vmul.f32 %v1190, %v1193
    %1197 = vrot.lane.b32.xlu0 %v1191, 64
    %v1198 = vpop.permute.xlu0 %1197
    %v1200 = vmul.f32 %v1190, %v1198
    %1202 = vrot.lane.b32.xlu0 %v1200, 32
    %v1203 = vpop.permute.xlu0 %1202
    %v1205 = vadd.f32 %v1195, %v1203
    %v1206 = vtanh.pop %v1205
    %1208 = vrot.lane.b32.xlu0 %v1206, 64
    %v1209 = vpop.permute.xlu0 %1208
    %v1211 = vmul.f32 %v1190, %v1209
    %v1212 = vxor.u32 %v1184, 2147483648
    %v1213 = vmul.f32 %v1212, 1.442695
    %v1214 = vpow.pop %v1213
    %v1215 = vadd.f32 %v1214, 1.0
    %v1216 = vrcp.pop %v1215
    %v1217 = vmul.f32 1.0, %v1216
    %v1218 = vtanh.pop %v1184
    %v1220 = vrot.slane %v1021, 2
    %v1222 = vmul.f32 %v1217, %v1220
    %1224 = vrot.lane.b32.xlu0 %v1218, 64
    %v1225 = vpop.permute.xlu0 %1224
    %v1227 = vmul.f32 %v1217, %v1225
    %1229 = vrot.lane.b32.xlu0 %v1227, 32
    %v1230 = vpop.permute.xlu0 %1229
    %v1232 = vadd.f32 %v1222, %v1230
    %v1233 = vtanh.pop %v1232
    %1235 = vrot.lane.b32.xlu0 %v1233, 64
    %v1236 = vpop.permute.xlu0 %1235
    %v1238 = vmul.f32 %v1217, %v1236
    %v1240 = vrot.slane %v1211, 6
    %1241 = vrot.lane.b32.xlu0 %v1240, 32
    %v1242 = vpop.permute.xlu0 %1241
    %v1243 = vsel %vm50, %v1242, 0
    %1245 = vmatprep.subr.mxu0 0.0
    %1246 = vmatpush1.msra.mxu0 %v397
    %1247 = vmatprep.subr.mxu0 0.0
    %1248 = vmatpush1.msra.mxu0 %v398
    %1249 = vmatprep.subr.mxu0 0.0
    %1250 = vmatpush1.msra.mxu0 %v399
    %1251 = vmatprep.subr.mxu0 0.0
    %1252 = vmatpush1.msra.mxu0 %v400
    %1253 = vmatprep.subr.mxu0 0.0
    %1254 = vmatpush1.msra.mxu0 0.0
    %1255 = vmatprep.subr.mxu0 0.0
    %1256 = vmatpush1.msra.mxu0 0.0
    %1257 = vmatprep.subr.mxu0 0.0
    %1258 = vmatpush1.msra.mxu0 0.0
    %1259 = vmatprep.subr.mxu0 0.0
    %1260 = vmatpush1.msra.mxu0 0.0
    %1261 = vmatprep.subr.mxu0 0.0
    %1262 = vmatpush1.msra.mxu0 0.0
    %1263 = vmatprep.subr.mxu0 0.0
    %1264 = vmatpush1.msra.mxu0 0.0
    %1265 = vmatprep.subr.mxu0 0.0
    %1266 = vmatpush1.msra.mxu0 0.0
    %1267 = vmatprep.subr.mxu0 0.0
    %1268 = vmatpush1.msra.mxu0 0.0
    %1269 = vmatprep.subr.mxu0 0.0
    %1270 = vmatpush1.msra.mxu0 0.0
    %1271 = vmatprep.subr.mxu0 0.0
    %1272 = vmatpush1.msra.mxu0 0.0
    %1273 = vmatprep.subr.mxu0 0.0
    %1274 = vmatpush1.msra.mxu0 0.0
    %1275 = vmatprep.subr.mxu0 0.0
    %1276 = vmatpush1.msra.mxu0 0.0
    %1277 = vmatprep.subr.mxu0 0.0
    %1278 = vmatpush1.msra.mxu0 0.0
    %1279 = vmatprep.subr.mxu0 0.0
    %1280 = vmatpush1.msra.mxu0 0.0
    %1281 = vmatprep.subr.mxu0 0.0
    %1282 = vmatpush1.msra.mxu0 0.0
    %1283 = vmatprep.subr.mxu0 0.0
    %1284 = vmatpush1.msra.mxu0 0.0
    %1285 = vmatprep.subr.mxu0 0.0
    %1286 = vmatpush1.msra.mxu0 0.0
    %1287 = vmatprep.subr.mxu0 0.0
    %1288 = vmatpush1.msra.mxu0 0.0
    %1289 = vmatprep.subr.mxu0 0.0
    %1290 = vmatpush1.msra.mxu0 0.0
    %1291 = vmatprep.subr.mxu0 0.0
    %1292 = vmatpush1.msra.mxu0 0.0
    %1293 = vmatprep.subr.mxu0 0.0
    %1294 = vmatpush1.msra.mxu0 0.0
    %1295 = vmatprep.subr.mxu0 0.0
    %1296 = vmatpush1.msra.mxu0 0.0
    %1297 = vmatprep.subr.mxu0 0.0
    %1298 = vmatpush1.msra.mxu0 0.0
    %1299 = vmatprep.subr.mxu0 0.0
    %1300 = vmatpush1.msra.mxu0 0.0
    %1301 = vmatprep.subr.mxu0 0.0
    %1302 = vmatpush1.msra.mxu0 0.0
    %1303 = vmatprep.subr.mxu0 0.0
    %1304 = vmatpush1.msra.mxu0 0.0
    %1305 = vmatprep.subr.mxu0 0.0
    %1306 = vmatpush1.msra.mxu0 0.0
    %1307 = vmatprep.subr.mxu0 0.0
    %1308 = vmatpush1.msra.mxu0 0.0
    %1309 = vmatprep.mubr.f32.mxu0 0.0
    %1310 = vmatmul.mubr.f32.gmra.mrb[0].mxu0 %v1243
    %v1311 = vpop.f32.mrb[0].mxu0
    %v1312 = vadd.f32 0.0, %v1311
    %v1313 = vpop.f32.mrb[0].mxu0
    %1314 = vdwg.mxu0
    %v1315 = vadd.f32 %v315, %v1312
    %1317 = vrot.lane.b32.xlu0 %v1238, 32
    %v1318 = vpop.permute.xlu0 %1317
    %v1319 = vsel %vm50, %v1318, 0
    %1321 = vmatprep.subr.mxu0 0.0
    %1322 = vmatpush1.msra.mxu0 %v401
    %1323 = vmatprep.subr.mxu0 0.0
    %1324 = vmatpush1.msra.mxu0 %v402
    %1325 = vmatprep.subr.mxu0 0.0
    %1326 = vmatpush1.msra.mxu0 %v403
    %1327 = vmatprep.subr.mxu0 0.0
    %1328 = vmatpush1.msra.mxu0 %v404
    %1329 = vmatprep.subr.mxu0 0.0
    %1330 = vmatpush1.msra.mxu0 0.0
    %1331 = vmatprep.subr.mxu0 0.0
    %1332 = vmatpush1.msra.mxu0 0.0
    %1333 = vmatprep.subr.mxu0 0.0
    %1334 = vmatpush1.msra.mxu0 0.0
    %1335 = vmatprep.subr.mxu0 0.0
    %1336 = vmatpush1.msra.mxu0 0.0
    %1337 = vmatprep.subr.mxu0 0.0
    %1338 = vmatpush1.msra.mxu0 0.0
    %1339 = vmatprep.subr.mxu0 0.0
    %1340 = vmatpush1.msra.mxu0 0.0
    %1341 = vmatprep.subr.mxu0 0.0
    %1342 = vmatpush1.msra.mxu0 0.0
    %1343 = vmatprep.subr.mxu0 0.0
    %1344 = vmatpush1.msra.mxu0 0.0
    %1345 = vmatprep.subr.mxu0 0.0
    %1346 = vmatpush1.msra.mxu0 0.0
    %1347 = vmatprep.subr.mxu0 0.0
    %1348 = vmatpush1.msra.mxu0 0.0
    %1349 = vmatprep.subr.mxu0 0.0
    %1350 = vmatpush1.msra.mxu0 0.0
    %1351 = vmatprep.subr.mxu0 0.0
    %1352 = vmatpush1.msra.mxu0 0.0
    %1353 = vmatprep.subr.mxu0 0.0
    %1354 = vmatpush1.msra.mxu0 0.0
    %1355 = vmatprep.subr.mxu0 0.0
    %1356 = vmatpush1.msra.mxu0 0.0
    %1357 = vmatprep.subr.mxu0 0.0
    %1358 = vmatpush1.msra.mxu0 0.0
    %1359 = vmatprep.subr.mxu0 0.0
    %1360 = vmatpush1.msra.mxu0 0.0
    %1361 = vmatprep.subr.mxu0 0.0
    %1362 = vmatpush1.msra.mxu0 0.0
    %1363 = vmatprep.subr.mxu0 0.0
    %1364 = vmatpush1.msra.mxu0 0.0
    %1365 = vmatprep.subr.mxu0 0.0
    %1366 = vmatpush1.msra.mxu0 0.0
    %1367 = vmatprep.subr.mxu0 0.0
    %1368 = vmatpush1.msra.mxu0 0.0
    %1369 = vmatprep.subr.mxu0 0.0
    %1370 = vmatpush1.msra.mxu0 0.0
    %1371 = vmatprep.subr.mxu0 0.0
    %1372 = vmatpush1.msra.mxu0 0.0
    %1373 = vmatprep.subr.mxu0 0.0
    %1374 = vmatpush1.msra.mxu0 0.0
    %1375 = vmatprep.subr.mxu0 0.0
    %1376 = vmatpush1.msra.mxu0 0.0
    %1377 = vmatprep.subr.mxu0 0.0
    %1378 = vmatpush1.msra.mxu0 0.0
    %1379 = vmatprep.subr.mxu0 0.0
    %1380 = vmatpush1.msra.mxu0 0.0
    %1381 = vmatprep.subr.mxu0 0.0
    %1382 = vmatpush1.msra.mxu0 0.0
    %1383 = vmatprep.subr.mxu0 0.0
    %1384 = vmatpush1.msra.mxu0 0.0
    %1385 = vmatprep.mubr.f32.mxu0 0.0
    %1386 = vmatmul.mubr.f32.gmra.mrb[0].mxu0 %v1319
    %v1387 = vpop.f32.mrb[0].mxu0
    %v1388 = vadd.f32 0.0, %v1387
    %v1389 = vpop.f32.mrb[0].mxu0
    %1390 = vdwg.mxu0
    %v1392 = vrot.slane %v1388, 2
    %v1394 = vadd.f32 %v395, %v1392
    %v1395 = vxor.u32 %v1315, 2147483648
    %v1396 = vmul.f32 %v1395, 1.442695
    %v1397 = vpow.pop %v1396
    %v1398 = vadd.f32 %v1397, 1.0
    %v1399 = vrcp.pop %v1398
    %v1400 = vmul.f32 1.0, %v1399
    %v1401 = vtanh.pop %v1315
    %v1403 = vrot.slane %v1205, 6
    %v1405 = vmul.f32 %v1400, %v1403
    %1407 = vrot.lane.b32.xlu0 %v1401, 64
    %v1408 = vpop.permute.xlu0 %1407
    %v1410 = vmul.f32 %v1400, %v1408
    %1412 = vrot.lane.b32.xlu0 %v1410, 32
    %v1413 = vpop.permute.xlu0 %1412
    %v1415 = vadd.f32 %v1405, %v1413
    %v1416 = vtanh.pop %v1415
    %1418 = vrot.lane.b32.xlu0 %v1416, 64
    %v1419 = vpop.permute.xlu0 %1418
    %v1421 = vmul.f32 %v1400, %v1419
    %v1422 = vxor.u32 %v1394, 2147483648
    %v1423 = vmul.f32 %v1422, 1.442695
    %v1424 = vpow.pop %v1423
    %v1425 = vadd.f32 %v1424, 1.0
    %v1426 = vrcp.pop %v1425
    %v1427 = vmul.f32 1.0, %v1426
    %v1428 = vtanh.pop %v1394
    %v1430 = vrot.slane %v1232, 2
    %v1432 = vmul.f32 %v1427, %v1430
    %1434 = vrot.lane.b32.xlu0 %v1428, 64
    %v1435 = vpop.permute.xlu0 %1434
    %v1437 = vmul.f32 %v1427, %v1435
    %1439 = vrot.lane.b32.xlu0 %v1437, 32
    %v1440 = vpop.permute.xlu0 %1439
    %v1442 = vadd.f32 %v1432, %v1440
    %v1443 = vtanh.pop %v1442
    %1445 = vrot.lane.b32.xlu0 %v1443, 64
    %v1446 = vpop.permute.xlu0 %1445
    %v1448 = vmul.f32 %v1427, %v1446
    %1450 = vrot.lane.b32.xlu0 %v1421, 32
    %v1451 = vpop.permute.xlu0 %1450
    %v1452 = vsel %vm50, %v1451, 0
    %1454 = vmatprep.subr.mxu0 0.0
    %1455 = vmatpush1.msra.mxu0 %v397
    %1456 = vmatprep.subr.mxu0 0.0
    %1457 = vmatpush1.msra.mxu0 %v398
    %1458 = vmatprep.subr.mxu0 0.0
    %1459 = vmatpush1.msra.mxu0 %v399
    %1460 = vmatprep.subr.mxu0 0.0
    %1461 = vmatpush1.msra.mxu0 %v400
    %1462 = vmatprep.subr.mxu0 0.0
    %1463 = vmatpush1.msra.mxu0 0.0
    %1464 = vmatprep.subr.mxu0 0.0
    %1465 = vmatpush1.msra.mxu0 0.0
    %1466 = vmatprep.subr.mxu0 0.0
    %1467 = vmatpush1.msra.mxu0 0.0
    %1468 = vmatprep.subr.mxu0 0.0
    %1469 = vmatpush1.msra.mxu0 0.0
    %1470 = vmatprep.subr.mxu0 0.0
    %1471 = vmatpush1.msra.mxu0 0.0
    %1472 = vmatprep.subr.mxu0 0.0
    %1473 = vmatpush1.msra.mxu0 0.0
    %1474 = vmatprep.subr.mxu0 0.0
    %1475 = vmatpush1.msra.mxu0 0.0
    %1476 = vmatprep.subr.mxu0 0.0
    %1477 = vmatpush1.msra.mxu0 0.0
    %1478 = vmatprep.subr.mxu0 0.0
    %1479 = vmatpush1.msra.mxu0 0.0
    %1480 = vmatprep.subr.mxu0 0.0
    %1481 = vmatpush1.msra.mxu0 0.0
    %1482 = vmatprep.subr.mxu0 0.0
    %1483 = vmatpush1.msra.mxu0 0.0
    %1484 = vmatprep.subr.mxu0 0.0
    %1485 = vmatpush1.msra.mxu0 0.0
    %1486 = vmatprep.subr.mxu0 0.0
    %1487 = vmatpush1.msra.mxu0 0.0
    %1488 = vmatprep.subr.mxu0 0.0
    %1489 = vmatpush1.msra.mxu0 0.0
    %1490 = vmatprep.subr.mxu0 0.0
    %1491 = vmatpush1.msra.mxu0 0.0
    %1492 = vmatprep.subr.mxu0 0.0
    %1493 = vmatpush1.msra.mxu0 0.0
    %1494 = vmatprep.subr.mxu0 0.0
    %1495 = vmatpush1.msra.mxu0 0.0
    %1496 = vmatprep.subr.mxu0 0.0
    %1497 = vmatpush1.msra.mxu0 0.0
    %1498 = vmatprep.subr.mxu0 0.0
    %1499 = vmatpush1.msra.mxu0 0.0
    %1500 = vmatprep.subr.mxu0 0.0
    %1501 = vmatpush1.msra.mxu0 0.0
    %1502 = vmatprep.subr.mxu0 0.0
    %1503 = vmatpush1.msra.mxu0 0.0
    %1504 = vmatprep.subr.mxu0 0.0
    %1505 = vmatpush1.msra.mxu0 0.0
    %1506 = vmatprep.subr.mxu0 0.0
    %1507 = vmatpush1.msra.mxu0 0.0
    %1508 = vmatprep.subr.mxu0 0.0
    %1509 = vmatpush1.msra.mxu0 0.0
    %1510 = vmatprep.subr.mxu0 0.0
    %1511 = vmatpush1.msra.mxu0 0.0
    %1512 = vmatprep.subr.mxu0 0.0
    %1513 = vmatpush1.msra.mxu0 0.0
    %1514 = vmatprep.subr.mxu0 0.0
    %1515 = vmatpush1.msra.mxu0 0.0
    %1516 = vmatprep.subr.mxu0 0.0
    %1517 = vmatpush1.msra.mxu0 0.0
    %1518 = vmatprep.mubr.f32.mxu0 0.0
    %1519 = vmatmul.mubr.f32.gmra.mrb[0].mxu0 %v1452
    %v1520 = vpop.f32.mrb[0].mxu0
    %v1521 = vadd.f32 0.0, %v1520
    %v1522 = vpop.f32.mrb[0].mxu0
    %1523 = vdwg.mxu0
    %v1525 = vrot.slane %v1521, 6
    %v1527 = vadd.f32 %v315, %v1525
    %v1529 = vrot.slane %v1448, 6
    %1530 = vrot.lane.b32.xlu0 %v1529, 32
    %v1531 = vpop.permute.xlu0 %1530
    %v1532 = vsel %vm50, %v1531, 0
    %1534 = vmatprep.subr.mxu0 0.0
    %1535 = vmatpush1.msra.mxu0 %v401
    %1536 = vmatprep.subr.mxu0 0.0
    %1537 = vmatpush1.msra.mxu0 %v402
    %1538 = vmatprep.subr.mxu0 0.0
    %1539 = vmatpush1.msra.mxu0 %v403
    %1540 = vmatprep.subr.mxu0 0.0
    %1541 = vmatpush1.msra.mxu0 %v404
    %1542 = vmatprep.subr.mxu0 0.0
    %1543 = vmatpush1.msra.mxu0 0.0
    %1544 = vmatprep.subr.mxu0 0.0
    %1545 = vmatpush1.msra.mxu0 0.0
    %1546 = vmatprep.subr.mxu0 0.0
    %1547 = vmatpush1.msra.mxu0 0.0
    %1548 = vmatprep.subr.mxu0 0.0
    %1549 = vmatpush1.msra.mxu0 0.0
    %1550 = vmatprep.subr.mxu0 0.0
    %1551 = vmatpush1.msra.mxu0 0.0
    %1552 = vmatprep.subr.mxu0 0.0
    %1553 = vmatpush1.msra.mxu0 0.0
    %1554 = vmatprep.subr.mxu0 0.0
    %1555 = vmatpush1.msra.mxu0 0.0
    %1556 = vmatprep.subr.mxu0 0.0
    %1557 = vmatpush1.msra.mxu0 0.0
    %1558 = vmatprep.subr.mxu0 0.0
    %1559 = vmatpush1.msra.mxu0 0.0
    %1560 = vmatprep.subr.mxu0 0.0
    %1561 = vmatpush1.msra.mxu0 0.0
    %1562 = vmatprep.subr.mxu0 0.0
    %1563 = vmatpush1.msra.mxu0 0.0
    %1564 = vmatprep.subr.mxu0 0.0
    %1565 = vmatpush1.msra.mxu0 0.0
    %1566 = vmatprep.subr.mxu0 0.0
    %1567 = vmatpush1.msra.mxu0 0.0
    %1568 = vmatprep.subr.mxu0 0.0
    %1569 = vmatpush1.msra.mxu0 0.0
    %1570 = vmatprep.subr.mxu0 0.0
    %1571 = vmatpush1.msra.mxu0 0.0
    %1572 = vmatprep.subr.mxu0 0.0
    %1573 = vmatpush1.msra.mxu0 0.0
    %1574 = vmatprep.subr.mxu0 0.0
    %1575 = vmatpush1.msra.mxu0 0.0
    %1576 = vmatprep.subr.mxu0 0.0
    %1577 = vmatpush1.msra.mxu0 0.0
    %1578 = vmatprep.subr.mxu0 0.0
    %1579 = vmatpush1.msra.mxu0 0.0
    %1580 = vmatprep.subr.mxu0 0.0
    %1581 = vmatpush1.msra.mxu0 0.0
    %1582 = vmatprep.subr.mxu0 0.0
    %1583 = vmatpush1.msra.mxu0 0.0
    %1584 = vmatprep.subr.mxu0 0.0
    %1585 = vmatpush1.msra.mxu0 0.0
    %1586 = vmatprep.subr.mxu0 0.0
    %1587 = vmatpush1.msra.mxu0 0.0
    %1588 = vmatprep.subr.mxu0 0.0
    %1589 = vmatpush1.msra.mxu0 0.0
    %1590 = vmatprep.subr.mxu0 0.0
    %1591 = vmatpush1.msra.mxu0 0.0
    %1592 = vmatprep.subr.mxu0 0.0
    %1593 = vmatpush1.msra.mxu0 0.0
    %1594 = vmatprep.subr.mxu0 0.0
    %1595 = vmatpush1.msra.mxu0 0.0
    %1596 = vmatprep.subr.mxu0 0.0
    %1597 = vmatpush1.msra.mxu0 0.0
    %1598 = vmatprep.mubr.f32.mxu0 0.0
    %1599 = vmatmul.mubr.f32.gmra.mrb[0].mxu0 %v1532
    %v1600 = vpop.f32.mrb[0].mxu0
    %v1601 = vadd.f32 0.0, %v1600
    %v1602 = vpop.f32.mrb[0].mxu0
    %1603 = vdwg.mxu0
    %v1605 = vrot.slane %v1601, 4
    %v1607 = vadd.f32 %v395, %v1605
    %v1608 = vxor.u32 %v1527, 2147483648
    %v1609 = vmul.f32 %v1608, 1.442695
    %v1610 = vpow.pop %v1609
    %v1611 = vadd.f32 %v1610, 1.0
    %v1612 = vrcp.pop %v1611
    %v1613 = vmul.f32 1.0, %v1612
    %v1614 = vtanh.pop %v1527
    %v1616 = vrot.slane %v1415, 6
    %v1618 = vmul.f32 %v1613, %v1616
    %1620 = vrot.lane.b32.xlu0 %v1614, 64
    %v1621 = vpop.permute.xlu0 %1620
    %v1623 = vmul.f32 %v1613, %v1621
    %1625 = vrot.lane.b32.xlu0 %v1623, 32
    %v1626 = vpop.permute.xlu0 %1625
    %v1628 = vadd.f32 %v1618, %v1626
    %v1629 = vtanh.pop %v1628
    %1631 = vrot.lane.b32.xlu0 %v1629, 64
    %v1632 = vpop.permute.xlu0 %1631
    %v1634 = vmul.f32 %v1613, %v1632
    %v1635 = vxor.u32 %v1607, 2147483648
    %v1636 = vmul.f32 %v1635, 1.442695
    %v1637 = vpow.pop %v1636
    %v1638 = vadd.f32 %v1637, 1.0
    %v1639 = vrcp.pop %v1638
    %v1640 = vmul.f32 1.0, %v1639
    %v1641 = vtanh.pop %v1607
    %v1643 = vrot.slane %v1442, 2
    %v1645 = vmul.f32 %v1640, %v1643
    %1647 = vrot.lane.b32.xlu0 %v1641, 64
    %v1648 = vpop.permute.xlu0 %1647
    %v1650 = vmul.f32 %v1640, %v1648
    %1652 = vrot.lane.b32.xlu0 %v1650, 32
    %v1653 = vpop.permute.xlu0 %1652
    %v1655 = vadd.f32 %v1645, %v1653
    %v1656 = vtanh.pop %v1655
    %1658 = vrot.lane.b32.xlu0 %v1656, 64
    %v1659 = vpop.permute.xlu0 %1658
    %v1661 = vmul.f32 %v1640, %v1659
    %v1663 = vrot.slane %v1634, 2
    %1664 = vrot.lane.b32.xlu0 %v1663, 32
    %v1665 = vpop.permute.xlu0 %1664
    %v1666 = vsel %vm50, %v1665, 0
    %1668 = vmatprep.subr.mxu0 0.0
    %1669 = vmatpush1.msra.mxu0 %v397
    %1670 = vmatprep.subr.mxu0 0.0
    %1671 = vmatpush1.msra.mxu0 %v398
    %1672 = vmatprep.subr.mxu0 0.0
    %1673 = vmatpush1.msra.mxu0 %v399
    %1674 = vmatprep.subr.mxu0 0.0
    %1675 = vmatpush1.msra.mxu0 %v400
    %1676 = vmatprep.subr.mxu0 0.0
    %1677 = vmatpush1.msra.mxu0 0.0
    %1678 = vmatprep.subr.mxu0 0.0
    %1679 = vmatpush1.msra.mxu0 0.0
    %1680 = vmatprep.subr.mxu0 0.0
    %1681 = vmatpush1.msra.mxu0 0.0
    %1682 = vmatprep.subr.mxu0 0.0
    %1683 = vmatpush1.msra.mxu0 0.0
    %1684 = vmatprep.subr.mxu0 0.0
    %1685 = vmatpush1.msra.mxu0 0.0
    %1686 = vmatprep.subr.mxu0 0.0
    %1687 = vmatpush1.msra.mxu0 0.0
    %1688 = vmatprep.subr.mxu0 0.0
    %1689 = vmatpush1.msra.mxu0 0.0
    %1690 = vmatprep.subr.mxu0 0.0
    %1691 = vmatpush1.msra.mxu0 0.0
    %1692 = vmatprep.subr.mxu0 0.0
    %1693 = vmatpush1.msra.mxu0 0.0
    %1694 = vmatprep.subr.mxu0 0.0
    %1695 = vmatpush1.msra.mxu0 0.0
    %1696 = vmatprep.subr.mxu0 0.0
    %1697 = vmatpush1.msra.mxu0 0.0
    %1698 = vmatprep.subr.mxu0 0.0
    %1699 = vmatpush1.msra.mxu0 0.0
    %1700 = vmatprep.subr.mxu0 0.0
    %1701 = vmatpush1.msra.mxu0 0.0
    %1702 = vmatprep.subr.mxu0 0.0
    %1703 = vmatpush1.msra.mxu0 0.0
    %1704 = vmatprep.subr.mxu0 0.0
    %1705 = vmatpush1.msra.mxu0 0.0
    %1706 = vmatprep.subr.mxu0 0.0
    %1707 = vmatpush1.msra.mxu0 0.0
    %1708 = vmatprep.subr.mxu0 0.0
    %1709 = vmatpush1.msra.mxu0 0.0
    %1710 = vmatprep.subr.mxu0 0.0
    %1711 = vmatpush1.msra.mxu0 0.0
    %1712 = vmatprep.subr.mxu0 0.0
    %1713 = vmatpush1.msra.mxu0 0.0
    %1714 = vmatprep.subr.mxu0 0.0
    %1715 = vmatpush1.msra.mxu0 0.0
    %1716 = vmatprep.subr.mxu0 0.0
    %1717 = vmatpush1.msra.mxu0 0.0
    %1718 = vmatprep.subr.mxu0 0.0
    %1719 = vmatpush1.msra.mxu0 0.0
    %1720 = vmatprep.subr.mxu0 0.0
    %1721 = vmatpush1.msra.mxu0 0.0
    %1722 = vmatprep.subr.mxu0 0.0
    %1723 = vmatpush1.msra.mxu0 0.0
    %1724 = vmatprep.subr.mxu0 0.0
    %1725 = vmatpush1.msra.mxu0 0.0
    %1726 = vmatprep.subr.mxu0 0.0
    %1727 = vmatpush1.msra.mxu0 0.0
    %1728 = vmatprep.subr.mxu0 0.0
    %1729 = vmatpush1.msra.mxu0 0.0
    %1730 = vmatprep.subr.mxu0 0.0
    %1731 = vmatpush1.msra.mxu0 0.0
    %1732 = vmatprep.mubr.f32.mxu0 0.0
    %1733 = vmatmul.mubr.f32.gmra.mrb[0].mxu0 %v1666
    %v1734 = vpop.f32.mrb[0].mxu0
    %v1735 = vadd.f32 0.0, %v1734
    %v1736 = vpop.f32.mrb[0].mxu0
    %1737 = vdwg.mxu0
    %v1739 = vrot.slane %v1735, 4
    %v1741 = vadd.f32 %v315, %v1739
    %v1743 = vrot.slane %v1661, 4
    %1744 = vrot.lane.b32.xlu0 %v1743, 32
    %v1745 = vpop.permute.xlu0 %1744
    %v1746 = vsel %vm50, %v1745, 0
    %1748 = vmatprep.subr.mxu0 0.0
    %1749 = vmatpush1.msra.mxu0 %v401
    %1750 = vmatprep.subr.mxu0 0.0
    %1751 = vmatpush1.msra.mxu0 %v402
    %1752 = vmatprep.subr.mxu0 0.0
    %1753 = vmatpush1.msra.mxu0 %v403
    %1754 = vmatprep.subr.mxu0 0.0
    %1755 = vmatpush1.msra.mxu0 %v404
    %1756 = vmatprep.subr.mxu0 0.0
    %1757 = vmatpush1.msra.mxu0 0.0
    %1758 = vmatprep.subr.mxu0 0.0
    %1759 = vmatpush1.msra.mxu0 0.0
    %1760 = vmatprep.subr.mxu0 0.0
    %1761 = vmatpush1.msra.mxu0 0.0
    %1762 = vmatprep.subr.mxu0 0.0
    %1763 = vmatpush1.msra.mxu0 0.0
    %1764 = vmatprep.subr.mxu0 0.0
    %1765 = vmatpush1.msra.mxu0 0.0
    %1766 = vmatprep.subr.mxu0 0.0
    %1767 = vmatpush1.msra.mxu0 0.0
    %1768 = vmatprep.subr.mxu0 0.0
    %1769 = vmatpush1.msra.mxu0 0.0
    %1770 = vmatprep.subr.mxu0 0.0
    %1771 = vmatpush1.msra.mxu0 0.0
    %1772 = vmatprep.subr.mxu0 0.0
    %1773 = vmatpush1.msra.mxu0 0.0
    %1774 = vmatprep.subr.mxu0 0.0
    %1775 = vmatpush1.msra.mxu0 0.0
    %1776 = vmatprep.subr.mxu0 0.0
    %1777 = vmatpush1.msra.mxu0 0.0
    %1778 = vmatprep.subr.mxu0 0.0
    %1779 = vmatpush1.msra.mxu0 0.0
    %1780 = vmatprep.subr.mxu0 0.0
    %1781 = vmatpush1.msra.mxu0 0.0
    %1782 = vmatprep.subr.mxu0 0.0
    %1783 = vmatpush1.msra.mxu0 0.0
    %1784 = vmatprep.subr.mxu0 0.0
    %1785 = vmatpush1.msra.mxu0 0.0
    %1786 = vmatprep.subr.mxu0 0.0
    %1787 = vmatpush1.msra.mxu0 0.0
    %1788 = vmatprep.subr.mxu0 0.0
    %1789 = vmatpush1.msra.mxu0 0.0
    %1790 = vmatprep.subr.mxu0 0.0
    %1791 = vmatpush1.msra.mxu0 0.0
    %1792 = vmatprep.subr.mxu0 0.0
    %1793 = vmatpush1.msra.mxu0 0.0
    %1794 = vmatprep.subr.mxu0 0.0
    %1795 = vmatpush1.msra.mxu0 0.0
    %1796 = vmatprep.subr.mxu0 0.0
    %1797 = vmatpush1.msra.mxu0 0.0
    %1798 = vmatprep.subr.mxu0 0.0
    %1799 = vmatpush1.msra.mxu0 0.0
    %1800 = vmatprep.subr.mxu0 0.0
    %1801 = vmatpush1.msra.mxu0 0.0
    %1802 = vmatprep.subr.mxu0 0.0
    %1803 = vmatpush1.msra.mxu0 0.0
    %1804 = vmatprep.subr.mxu0 0.0
    %1805 = vmatpush1.msra.mxu0 0.0
    %1806 = vmatprep.subr.mxu0 0.0
    %1807 = vmatpush1.msra.mxu0 0.0
    %1808 = vmatprep.subr.mxu0 0.0
    %1809 = vmatpush1.msra.mxu0 0.0
    %1810 = vmatprep.subr.mxu0 0.0
    %1811 = vmatpush1.msra.mxu0 0.0
    %1812 = vmatprep.mubr.f32.mxu0 0.0
    %1813 = vmatmul.mubr.f32.gmra.mrb[0].mxu0 %v1746
    %v1814 = vpop.f32.mrb[0].mxu0
    %v1815 = vadd.f32 0.0, %v1814
    %v1816 = vpop.f32.mrb[0].mxu0
    %1817 = vdwg.mxu0
    %v1819 = vrot.slane %v1815, 6
    %v1821 = vadd.f32 %v395, %v1819
    %v1822 = vxor.u32 %v1741, 2147483648
    %v1823 = vmul.f32 %v1822, 1.442695
    %v1824 = vpow.pop %v1823
    %v1825 = vadd.f32 %v1824, 1.0
    %v1826 = vrcp.pop %v1825
    %v1827 = vmul.f32 1.0, %v1826
    %v1828 = vtanh.pop %v1741
    %v1830 = vrot.slane %v1628, 6
    %v1832 = vmul.f32 %v1827, %v1830
    %1834 = vrot.lane.b32.xlu0 %v1828, 64
    %v1835 = vpop.permute.xlu0 %1834
    %v1837 = vmul.f32 %v1827, %v1835
    %1839 = vrot.lane.b32.xlu0 %v1837, 32
    %v1840 = vpop.permute.xlu0 %1839
    %v1842 = vadd.f32 %v1832, %v1840
    %v1843 = vtanh.pop %v1842
    %1845 = vrot.lane.b32.xlu0 %v1843, 64
    %v1846 = vpop.permute.xlu0 %1845
    %v1848 = vmul.f32 %v1827, %v1846
    %v1849 = vxor.u32 %v1821, 2147483648
    %v1850 = vmul.f32 %v1849, 1.442695
    %v1851 = vpow.pop %v1850
    %v1852 = vadd.f32 %v1851, 1.0
    %v1853 = vrcp.pop %v1852
    %v1854 = vmul.f32 1.0, %v1853
    %v1855 = vtanh.pop %v1821
    %v1857 = vrot.slane %v1655, 2
    %v1859 = vmul.f32 %v1854, %v1857
    %1861 = vrot.lane.b32.xlu0 %v1855, 64
    %v1862 = vpop.permute.xlu0 %1861
    %v1864 = vmul.f32 %v1854, %v1862
    %1866 = vrot.lane.b32.xlu0 %v1864, 32
    %v1867 = vpop.permute.xlu0 %1866
    %v1869 = vadd.f32 %v1859, %v1867
    %v1870 = vtanh.pop %v1869
    %1872 = vrot.lane.b32.xlu0 %v1870, 64
    %v1873 = vpop.permute.xlu0 %1872
    %v1875 = vmul.f32 %v1854, %v1873
    %v1877 = vrot.slane %v1848, 4
    %1878 = vrot.lane.b32.xlu0 %v1877, 32
    %v1879 = vpop.permute.xlu0 %1878
    %v1880 = vsel %vm50, %v1879, 0
    %1882 = vmatprep.subr.mxu0 0.0
    %1883 = vmatpush1.msra.mxu0 %v397
    %1884 = vmatprep.subr.mxu0 0.0
    %1885 = vmatpush1.msra.mxu0 %v398
    %1886 = vmatprep.subr.mxu0 0.0
    %1887 = vmatpush1.msra.mxu0 %v399
    %1888 = vmatprep.subr.mxu0 0.0
    %1889 = vmatpush1.msra.mxu0 %v400
    %1890 = vmatprep.subr.mxu0 0.0
    %1891 = vmatpush1.msra.mxu0 0.0
    %1892 = vmatprep.subr.mxu0 0.0
    %1893 = vmatpush1.msra.mxu0 0.0
    %1894 = vmatprep.subr.mxu0 0.0
    %1895 = vmatpush1.msra.mxu0 0.0
    %1896 = vmatprep.subr.mxu0 0.0
    %1897 = vmatpush1.msra.mxu0 0.0
    %1898 = vmatprep.subr.mxu0 0.0
    %1899 = vmatpush1.msra.mxu0 0.0
    %1900 = vmatprep.subr.mxu0 0.0
    %1901 = vmatpush1.msra.mxu0 0.0
    %1902 = vmatprep.subr.mxu0 0.0
    %1903 = vmatpush1.msra.mxu0 0.0
    %1904 = vmatprep.subr.mxu0 0.0
    %1905 = vmatpush1.msra.mxu0 0.0
    %1906 = vmatprep.subr.mxu0 0.0
    %1907 = vmatpush1.msra.mxu0 0.0
    %1908 = vmatprep.subr.mxu0 0.0
    %1909 = vmatpush1.msra.mxu0 0.0
    %1910 = vmatprep.subr.mxu0 0.0
    %1911 = vmatpush1.msra.mxu0 0.0
    %1912 = vmatprep.subr.mxu0 0.0
    %1913 = vmatpush1.msra.mxu0 0.0
    %1914 = vmatprep.subr.mxu0 0.0
    %1915 = vmatpush1.msra.mxu0 0.0
    %1916 = vmatprep.subr.mxu0 0.0
    %1917 = vmatpush1.msra.mxu0 0.0
    %1918 = vmatprep.subr.mxu0 0.0
    %1919 = vmatpush1.msra.mxu0 0.0
    %1920 = vmatprep.subr.mxu0 0.0
    %1921 = vmatpush1.msra.mxu0 0.0
    %1922 = vmatprep.subr.mxu0 0.0
    %1923 = vmatpush1.msra.mxu0 0.0
    %1924 = vmatprep.subr.mxu0 0.0
    %1925 = vmatpush1.msra.mxu0 0.0
    %1926 = vmatprep.subr.mxu0 0.0
    %1927 = vmatpush1.msra.mxu0 0.0
    %1928 = vmatprep.subr.mxu0 0.0
    %1929 = vmatpush1.msra.mxu0 0.0
    %1930 = vmatprep.subr.mxu0 0.0
    %1931 = vmatpush1.msra.mxu0 0.0
    %1932 = vmatprep.subr.mxu0 0.0
    %1933 = vmatpush1.msra.mxu0 0.0
    %1934 = vmatprep.subr.mxu0 0.0
    %1935 = vmatpush1.msra.mxu0 0.0
    %1936 = vmatprep.subr.mxu0 0.0
    %1937 = vmatpush1.msra.mxu0 0.0
    %1938 = vmatprep.subr.mxu0 0.0
    %1939 = vmatpush1.msra.mxu0 0.0
    %1940 = vmatprep.subr.mxu0 0.0
    %1941 = vmatpush1.msra.mxu0 0.0
    %1942 = vmatprep.subr.mxu0 0.0
    %1943 = vmatpush1.msra.mxu0 0.0
    %1944 = vmatprep.subr.mxu0 0.0
    %1945 = vmatpush1.msra.mxu0 0.0
    %1946 = vmatprep.mubr.f32.mxu0 0.0
    %1947 = vmatmul.mubr.f32.gmra.mrb[0].mxu0 %v1880
    %v1948 = vpop.f32.mrb[0].mxu0
    %v1949 = vadd.f32 0.0, %v1948
    %v1950 = vpop.f32.mrb[0].mxu0
    %1951 = vdwg.mxu0
    %v1953 = vrot.slane %v1949, 2
    %v1955 = vadd.f32 %v315, %v1953
    %v1957 = vrot.slane %v1875, 2
    %1958 = vrot.lane.b32.xlu0 %v1957, 32
    %v1959 = vpop.permute.xlu0 %1958
    %v1960 = vsel %vm50, %v1959, 0
    %1962 = vmatprep.subr.mxu0 0.0
    %1963 = vmatpush1.msra.mxu0 %v401
    %1964 = vmatprep.subr.mxu0 0.0
    %1965 = vmatpush1.msra.mxu0 %v402
    %1966 = vmatprep.subr.mxu0 0.0
    %1967 = vmatpush1.msra.mxu0 %v403
    %1968 = vmatprep.subr.mxu0 0.0
    %1969 = vmatpush1.msra.mxu0 %v404
    %1970 = vmatprep.subr.mxu0 0.0
    %1971 = vmatpush1.msra.mxu0 0.0
    %1972 = vmatprep.subr.mxu0 0.0
    %1973 = vmatpush1.msra.mxu0 0.0
    %1974 = vmatprep.subr.mxu0 0.0
    %1975 = vmatpush1.msra.mxu0 0.0
    %1976 = vmatprep.subr.mxu0 0.0
    %1977 = vmatpush1.msra.mxu0 0.0
    %1978 = vmatprep.subr.mxu0 0.0
    %1979 = vmatpush1.msra.mxu0 0.0
    %1980 = vmatprep.subr.mxu0 0.0
    %1981 = vmatpush1.msra.mxu0 0.0
    %1982 = vmatprep.subr.mxu0 0.0
    %1983 = vmatpush1.msra.mxu0 0.0
    %1984 = vmatprep.subr.mxu0 0.0
    %1985 = vmatpush1.msra.mxu0 0.0
    %1986 = vmatprep.subr.mxu0 0.0
    %1987 = vmatpush1.msra.mxu0 0.0
    %1988 = vmatprep.subr.mxu0 0.0
    %1989 = vmatpush1.msra.mxu0 0.0
    %1990 = vmatprep.subr.mxu0 0.0
    %1991 = vmatpush1.msra.mxu0 0.0
    %1992 = vmatprep.subr.mxu0 0.0
    %1993 = vmatpush1.msra.mxu0 0.0
    %1994 = vmatprep.subr.mxu0 0.0
    %1995 = vmatpush1.msra.mxu0 0.0
    %1996 = vmatprep.subr.mxu0 0.0
    %1997 = vmatpush1.msra.mxu0 0.0
    %1998 = vmatprep.subr.mxu0 0.0
    %1999 = vmatpush1.msra.mxu0 0.0
    %2000 = vmatprep.subr.mxu0 0.0
    %2001 = vmatpush1.msra.mxu0 0.0
    %2002 = vmatprep.subr.mxu0 0.0
    %2003 = vmatpush1.msra.mxu0 0.0
    %2004 = vmatprep.subr.mxu0 0.0
    %2005 = vmatpush1.msra.mxu0 0.0
    %2006 = vmatprep.subr.mxu0 0.0
    %2007 = vmatpush1.msra.mxu0 0.0
    %2008 = vmatprep.subr.mxu0 0.0
    %2009 = vmatpush1.msra.mxu0 0.0
    %2010 = vmatprep.subr.mxu0 0.0
    %2011 = vmatpush1.msra.mxu0 0.0
    %2012 = vmatprep.subr.mxu0 0.0
    %2013 = vmatpush1.msra.mxu0 0.0
    %2014 = vmatprep.subr.mxu0 0.0
    %2015 = vmatpush1.msra.mxu0 0.0
    %2016 = vmatprep.subr.mxu0 0.0
    %2017 = vmatpush1.msra.mxu0 0.0
    %2018 = vmatprep.subr.mxu0 0.0
    %2019 = vmatpush1.msra.mxu0 0.0
    %2020 = vmatprep.subr.mxu0 0.0
    %2021 = vmatpush1.msra.mxu0 0.0
    %2022 = vmatprep.subr.mxu0 0.0
    %2023 = vmatpush1.msra.mxu0 0.0
    %2024 = vmatprep.subr.mxu0 0.0
    %2025 = vmatpush1.msra.mxu0 0.0
    %2026 = vmatprep.mubr.f32.mxu0 0.0
    %2027 = vmatmul.mubr.f32.gmra.mrb[0].mxu0 %v1960
    %v2028 = vpop.f32.mrb[0].mxu0
    %v2029 = vadd.f32 0.0, %v2028
    %v2030 = vpop.f32.mrb[0].mxu0
    %2031 = vdwg.mxu0
    %v2032 = vadd.f32 %v395, %v2029
    %v2033 = vxor.u32 %v1955, 2147483648
    %v2034 = vmul.f32 %v2033, 1.442695
    %v2035 = vpow.pop %v2034
    %v2036 = vadd.f32 %v2035, 1.0
    %v2037 = vrcp.pop %v2036
    %v2038 = vmul.f32 1.0, %v2037
    %v2039 = vtanh.pop %v1955
    %v2041 = vrot.slane %v1842, 6
    %v2043 = vmul.f32 %v2038, %v2041
    %2045 = vrot.lane.b32.xlu0 %v2039, 64
    %v2046 = vpop.permute.xlu0 %2045
    %v2048 = vmul.f32 %v2038, %v2046
    %2050 = vrot.lane.b32.xlu0 %v2048, 32
    %v2051 = vpop.permute.xlu0 %2050
    %v2053 = vadd.f32 %v2043, %v2051
    %v2054 = vtanh.pop %v2053
    %2056 = vrot.lane.b32.xlu0 %v2054, 64
    %v2057 = vpop.permute.xlu0 %2056
    %v2059 = vmul.f32 %v2038, %v2057
    %v2060 = vxor.u32 %v2032, 2147483648
    %v2061 = vmul.f32 %v2060, 1.442695
    %v2062 = vpow.pop %v2061
    %v2063 = vadd.f32 %v2062, 1.0
    %v2064 = vrcp.pop %v2063
    %v2065 = vmul.f32 1.0, %v2064
    %v2066 = vtanh.pop %v2032
    %v2068 = vrot.slane %v1869, 2
    %v2070 = vmul.f32 %v2065, %v2068
    %2072 = vrot.lane.b32.xlu0 %v2066, 64
    %v2073 = vpop.permute.xlu0 %2072
    %v2075 = vmul.f32 %v2065, %v2073
    %2077 = vrot.lane.b32.xlu0 %v2075, 32
    %v2078 = vpop.permute.xlu0 %2077
    %v2080 = vadd.f32 %v2070, %v2078
    %v2081 = vtanh.pop %v2080
    %2083 = vrot.lane.b32.xlu0 %v2081, 64
    %v2084 = vpop.permute.xlu0 %2083
    %v2086 = vmul.f32 %v2065, %v2084
    %v2087 = vld [vmem:[%s10] sm:$0xff]
    %v2088 = vld [vmem:[%s10 + $0x8] sm:$0xff]
    %v2089 = vld [vmem:[%s10 + $0x10] sm:$0xff]
    %v2090 = vld [vmem:[%s10 + $0x18] sm:$0xff]
    %v2091 = vld [vmem:[%s10 + $0x20] sm:$0xff]
    %v2092 = vld [vmem:[%s10 + $0x28] sm:$0xff]
    %v2093 = vld [vmem:[%s10 + $0x30] sm:$0xff]
    %v2094 = vld [vmem:[%s10 + $0x38] sm:$0xff]
    %v2095 = vld [vmem:[%s10 + $0x40] sm:$0xff]
    %v2096 = vld [vmem:[%s10 + $0x48] sm:$0xff]
    %v2097 = vld [vmem:[%s10 + $0x50] sm:$0xff]
    %v2098 = vld [vmem:[%s10 + $0x58] sm:$0xff]
    %v2099 = vld [vmem:[%s10 + $0x60] sm:$0xff]
    %v2100 = vld [vmem:[%s10 + $0x68] sm:$0xff]
    %v2101 = vld [vmem:[%s10 + $0x70] sm:$0xff]
    %v2102 = vld [vmem:[%s10 + $0x78] sm:$0xff]
    %2104 = vrot.lane.b32.xlu0 %v2086, 32
    %v2105 = vpop.permute.xlu0 %2104
    %v2106 = vsel %vm50, %v2105, 0
    %2108 = vmatprep.subr.mxu0 0.0
    %2109 = vmatpush1.msra.mxu0 %v2091
    %2110 = vmatprep.subr.mxu0 0.0
    %2111 = vmatpush1.msra.mxu0 %v2092
    %2112 = vmatprep.subr.mxu0 0.0
    %2113 = vmatpush1.msra.mxu0 %v2093
    %2114 = vmatprep.subr.mxu0 0.0
    %2115 = vmatpush1.msra.mxu0 %v2094
    %2116 = vmatprep.subr.mxu0 0.0
    %2117 = vmatpush1.msra.mxu0 0.0
    %2118 = vmatprep.subr.mxu0 0.0
    %2119 = vmatpush1.msra.mxu0 0.0
    %2120 = vmatprep.subr.mxu0 0.0
    %2121 = vmatpush1.msra.mxu0 0.0
    %2122 = vmatprep.subr.mxu0 0.0
    %2123 = vmatpush1.msra.mxu0 0.0
    %2124 = vmatprep.subr.mxu0 0.0
    %2125 = vmatpush1.msra.mxu0 0.0
    %2126 = vmatprep.subr.mxu0 0.0
    %2127 = vmatpush1.msra.mxu0 0.0
    %2128 = vmatprep.subr.mxu0 0.0
    %2129 = vmatpush1.msra.mxu0 0.0
    %2130 = vmatprep.subr.mxu0 0.0
    %2131 = vmatpush1.msra.mxu0 0.0
    %2132 = vmatprep.subr.mxu0 0.0
    %2133 = vmatpush1.msra.mxu0 0.0
    %2134 = vmatprep.subr.mxu0 0.0
    %2135 = vmatpush1.msra.mxu0 0.0
    %2136 = vmatprep.subr.mxu0 0.0
    %2137 = vmatpush1.msra.mxu0 0.0
    %2138 = vmatprep.subr.mxu0 0.0
    %2139 = vmatpush1.msra.mxu0 0.0
    %2140 = vmatprep.subr.mxu0 0.0
    %2141 = vmatpush1.msra.mxu0 0.0
    %2142 = vmatprep.subr.mxu0 0.0
    %2143 = vmatpush1.msra.mxu0 0.0
    %2144 = vmatprep.subr.mxu0 0.0
    %2145 = vmatpush1.msra.mxu0 0.0
    %2146 = vmatprep.subr.mxu0 0.0
    %2147 = vmatpush1.msra.mxu0 0.0
    %2148 = vmatprep.subr.mxu0 0.0
    %2149 = vmatpush1.msra.mxu0 0.0
    %2150 = vmatprep.subr.mxu0 0.0
    %2151 = vmatpush1.msra.mxu0 0.0
    %2152 = vmatprep.subr.mxu0 0.0
    %2153 = vmatpush1.msra.mxu0 0.0
    %2154 = vmatprep.subr.mxu0 0.0
    %2155 = vmatpush1.msra.mxu0 0.0
    %2156 = vmatprep.subr.mxu0 0.0
    %2157 = vmatpush1.msra.mxu0 0.0
    %2158 = vmatprep.subr.mxu0 0.0
    %2159 = vmatpush1.msra.mxu0 0.0
    %2160 = vmatprep.subr.mxu0 0.0
    %2161 = vmatpush1.msra.mxu0 0.0
    %2162 = vmatprep.subr.mxu0 0.0
    %2163 = vmatpush1.msra.mxu0 0.0
    %2164 = vmatprep.subr.mxu0 0.0
    %2165 = vmatpush1.msra.mxu0 0.0
    %2166 = vmatprep.subr.mxu0 0.0
    %2167 = vmatpush1.msra.mxu0 0.0
    %2168 = vmatprep.subr.mxu0 0.0
    %2169 = vmatpush1.msra.mxu0 0.0
    %2170 = vmatprep.subr.mxu0 0.0
    %2171 = vmatpush1.msra.mxu0 0.0
    %2172 = vmatprep.mubr.f32.mxu0 0.0
    %2173 = vmatmul.mubr.f32.gmra.mrb[0].mxu0 %v2106
    %v2174 = vpop.f32.mrb[0].mxu0
    %v2175 = vadd.f32 0.0, %v2174
    %v2176 = vpop.f32.mrb[0].mxu0
    %2177 = vdwg.mxu0
    %2178 = vmatprep.subr.mxu0 0.0
    %2179 = vmatpush1.msra.mxu0 %v2087
    %2180 = vmatprep.subr.mxu0 0.0
    %2181 = vmatpush1.msra.mxu0 %v2088
    %2182 = vmatprep.subr.mxu0 0.0
    %2183 = vmatpush1.msra.mxu0 %v2089
    %2184 = vmatprep.subr.mxu0 0.0
    %2185 = vmatpush1.msra.mxu0 %v2090
    %2186 = vmatprep.subr.mxu0 0.0
    %2187 = vmatpush1.msra.mxu0 0.0
    %2188 = vmatprep.subr.mxu0 0.0
    %2189 = vmatpush1.msra.mxu0 0.0
    %2190 = vmatprep.subr.mxu0 0.0
    %2191 = vmatpush1.msra.mxu0 0.0
    %2192 = vmatprep.subr.mxu0 0.0
    %2193 = vmatpush1.msra.mxu0 0.0
    %2194 = vmatprep.subr.mxu0 0.0
    %2195 = vmatpush1.msra.mxu0 0.0
    %2196 = vmatprep.subr.mxu0 0.0
    %2197 = vmatpush1.msra.mxu0 0.0
    %2198 = vmatprep.subr.mxu0 0.0
    %2199 = vmatpush1.msra.mxu0 0.0
    %2200 = vmatprep.subr.mxu0 0.0
    %2201 = vmatpush1.msra.mxu0 0.0
    %2202 = vmatprep.subr.mxu0 0.0
    %2203 = vmatpush1.msra.mxu0 0.0
    %2204 = vmatprep.subr.mxu0 0.0
    %2205 = vmatpush1.msra.mxu0 0.0
    %2206 = vmatprep.subr.mxu0 0.0
    %2207 = vmatpush1.msra.mxu0 0.0
    %2208 = vmatprep.subr.mxu0 0.0
    %2209 = vmatpush1.msra.mxu0 0.0
    %2210 = vmatprep.subr.mxu0 0.0
    %2211 = vmatpush1.msra.mxu0 0.0
    %2212 = vmatprep.subr.mxu0 0.0
    %2213 = vmatpush1.msra.mxu0 0.0
    %2214 = vmatprep.subr.mxu0 0.0
    %2215 = vmatpush1.msra.mxu0 0.0
    %2216 = vmatprep.subr.mxu0 0.0
    %2217 = vmatpush1.msra.mxu0 0.0
    %2218 = vmatprep.subr.mxu0 0.0
    %2219 = vmatpush1.msra.mxu0 0.0
    %2220 = vmatprep.subr.mxu0 0.0
    %2221 = vmatpush1.msra.mxu0 0.0
    %2222 = vmatprep.subr.mxu0 0.0
    %2223 = vmatpush1.msra.mxu0 0.0
    %2224 = vmatprep.subr.mxu0 0.0
    %2225 = vmatpush1.msra.mxu0 0.0
    %2226 = vmatprep.subr.mxu0 0.0
    %2227 = vmatpush1.msra.mxu0 0.0
    %2228 = vmatprep.subr.mxu0 0.0
    %2229 = vmatpush1.msra.mxu0 0.0
    %2230 = vmatprep.subr.mxu0 0.0
    %2231 = vmatpush1.msra.mxu0 0.0
    %2232 = vmatprep.subr.mxu0 0.0
    %2233 = vmatpush1.msra.mxu0 0.0
    %2234 = vmatprep.subr.mxu0 0.0
    %2235 = vmatpush1.msra.mxu0 0.0
    %2236 = vmatprep.subr.mxu0 0.0
    %2237 = vmatpush1.msra.mxu0 0.0
    %2238 = vmatprep.subr.mxu0 0.0
    %2239 = vmatpush1.msra.mxu0 0.0
    %2240 = vmatprep.subr.mxu0 0.0
    %2241 = vmatpush1.msra.mxu0 0.0
    %2242 = vmatprep.mubr.f32.mxu0 0.0
    %2243 = vmatmul.mubr.f32.gmra.mrb[0].mxu0 %v604
    %v2244 = vpop.f32.mrb[0].mxu0
    %v2245 = vadd.f32 %v2175, %v2244
    %v2246 = vpop.f32.mrb[0].mxu0
    %2247 = vdwg.mxu0
    %v2249 = vrot.slane %v2059, 6
    %2250 = vrot.lane.b32.xlu0 %v2249, 32
    %v2251 = vpop.permute.xlu0 %2250
    %v2252 = vsel %vm50, %v2251, 0
    %2254 = vmatprep.subr.mxu0 0.0
    %2255 = vmatpush1.msra.mxu0 %v2095
    %2256 = vmatprep.subr.mxu0 0.0
    %2257 = vmatpush1.msra.mxu0 %v2096
    %2258 = vmatprep.subr.mxu0 0.0
    %2259 = vmatpush1.msra.mxu0 %v2097
    %2260 = vmatprep.subr.mxu0 0.0
    %2261 = vmatpush1.msra.mxu0 %v2098
    %2262 = vmatprep.subr.mxu0 0.0
    %2263 = vmatpush1.msra.mxu0 0.0
    %2264 = vmatprep.subr.mxu0 0.0
    %2265 = vmatpush1.msra.mxu0 0.0
    %2266 = vmatprep.subr.mxu0 0.0
    %2267 = vmatpush1.msra.mxu0 0.0
    %2268 = vmatprep.subr.mxu0 0.0
    %2269 = vmatpush1.msra.mxu0 0.0
    %2270 = vmatprep.subr.mxu0 0.0
    %2271 = vmatpush1.msra.mxu0 0.0
    %2272 = vmatprep.subr.mxu0 0.0
    %2273 = vmatpush1.msra.mxu0 0.0
    %2274 = vmatprep.subr.mxu0 0.0
    %2275 = vmatpush1.msra.mxu0 0.0
    %2276 = vmatprep.subr.mxu0 0.0
    %2277 = vmatpush1.msra.mxu0 0.0
    %2278 = vmatprep.subr.mxu0 0.0
    %2279 = vmatpush1.msra.mxu0 0.0
    %2280 = vmatprep.subr.mxu0 0.0
    %2281 = vmatpush1.msra.mxu0 0.0
    %2282 = vmatprep.subr.mxu0 0.0
    %2283 = vmatpush1.msra.mxu0 0.0
    %2284 = vmatprep.subr.mxu0 0.0
    %2285 = vmatpush1.msra.mxu0 0.0
    %2286 = vmatprep.subr.mxu0 0.0
    %2287 = vmatpush1.msra.mxu0 0.0
    %2288 = vmatprep.subr.mxu0 0.0
    %2289 = vmatpush1.msra.mxu0 0.0
    %2290 = vmatprep.subr.mxu0 0.0
    %2291 = vmatpush1.msra.mxu0 0.0
    %2292 = vmatprep.subr.mxu0 0.0
    %2293 = vmatpush1.msra.mxu0 0.0
    %2294 = vmatprep.subr.mxu0 0.0
    %2295 = vmatpush1.msra.mxu0 0.0
    %2296 = vmatprep.subr.mxu0 0.0
    %2297 = vmatpush1.msra.mxu0 0.0
    %2298 = vmatprep.subr.mxu0 0.0
    %2299 = vmatpush1.msra.mxu0 0.0
    %2300 = vmatprep.subr.mxu0 0.0
    %2301 = vmatpush1.msra.mxu0 0.0
    %2302 = vmatprep.subr.mxu0 0.0
    %2303 = vmatpush1.msra.mxu0 0.0
    %2304 = vmatprep.subr.mxu0 0.0
    %2305 = vmatpush1.msra.mxu0 0.0
    %2306 = vmatprep.subr.mxu0 0.0
    %2307 = vmatpush1.msra.mxu0 0.0
    %2308 = vmatprep.subr.mxu0 0.0
    %2309 = vmatpush1.msra.mxu0 0.0
    %2310 = vmatprep.subr.mxu0 0.0
    %2311 = vmatpush1.msra.mxu0 0.0
    %2312 = vmatprep.subr.mxu0 0.0
    %2313 = vmatpush1.msra.mxu0 0.0
    %2314 = vmatprep.subr.mxu0 0.0
    %2315 = vmatpush1.msra.mxu0 0.0
    %2316 = vmatprep.subr.mxu0 0.0
    %2317 = vmatpush1.msra.mxu0 0.0
    %2318 = vmatprep.mubr.f32.mxu0 0.0
    %2319 = vmatmul.mubr.f32.gmra.mrb[0].mxu0 %v2252
    %v2320 = vpop.f32.mrb[0].mxu0
    %v2321 = vadd.f32 0.0, %v2320
    %v2322 = vpop.f32.mrb[0].mxu0
    %2323 = vdwg.mxu0
    %v2324 = vadd.f32 %v2245, %v2321
    %2325 = vmatprep.subr.mxu0 0.0
    %2326 = vmatpush1.msra.mxu0 %v2099
    %2327 = vmatprep.subr.mxu0 0.0
    %2328 = vmatpush1.msra.mxu0 %v2100
    %2329 = vmatprep.subr.mxu0 0.0
    %2330 = vmatpush1.msra.mxu0 %v2101
    %2331 = vmatprep.subr.mxu0 0.0
    %2332 = vmatpush1.msra.mxu0 %v2102
    %2333 = vmatprep.subr.mxu0 0.0
    %2334 = vmatpush1.msra.mxu0 0.0
    %2335 = vmatprep.subr.mxu0 0.0
    %2336 = vmatpush1.msra.mxu0 0.0
    %2337 = vmatprep.subr.mxu0 0.0
    %2338 = vmatpush1.msra.mxu0 0.0
    %2339 = vmatprep.subr.mxu0 0.0
    %2340 = vmatpush1.msra.mxu0 0.0
    %2341 = vmatprep.subr.mxu0 0.0
    %2342 = vmatpush1.msra.mxu0 0.0
    %2343 = vmatprep.subr.mxu0 0.0
    %2344 = vmatpush1.msra.mxu0 0.0
    %2345 = vmatprep.subr.mxu0 0.0
    %2346 = vmatpush1.msra.mxu0 0.0
    %2347 = vmatprep.subr.mxu0 0.0
    %2348 = vmatpush1.msra.mxu0 0.0
    %2349 = vmatprep.subr.mxu0 0.0
    %2350 = vmatpush1.msra.mxu0 0.0
    %2351 = vmatprep.subr.mxu0 0.0
    %2352 = vmatpush1.msra.mxu0 0.0
    %2353 = vmatprep.subr.mxu0 0.0
    %2354 = vmatpush1.msra.mxu0 0.0
    %2355 = vmatprep.subr.mxu0 0.0
    %2356 = vmatpush1.msra.mxu0 0.0
    %2357 = vmatprep.subr.mxu0 0.0
    %2358 = vmatpush1.msra.mxu0 0.0
    %2359 = vmatprep.subr.mxu0 0.0
    %2360 = vmatpush1.msra.mxu0 0.0
    %2361 = vmatprep.subr.mxu0 0.0
    %2362 = vmatpush1.msra.mxu0 0.0
    %2363 = vmatprep.subr.mxu0 0.0
    %2364 = vmatpush1.msra.mxu0 0.0
    %2365 = vmatprep.subr.mxu0 0.0
    %2366 = vmatpush1.msra.mxu0 0.0
    %2367 = vmatprep.subr.mxu0 0.0
    %2368 = vmatpush1.msra.mxu0 0.0
    %2369 = vmatprep.subr.mxu0 0.0
    %2370 = vmatpush1.msra.mxu0 0.0
    %2371 = vmatprep.subr.mxu0 0.0
    %2372 = vmatpush1.msra.mxu0 0.0
    %2373 = vmatprep.subr.mxu0 0.0
    %2374 = vmatpush1.msra.mxu0 0.0
    %2375 = vmatprep.subr.mxu0 0.0
    %2376 = vmatpush1.msra.mxu0 0.0
    %2377 = vmatprep.subr.mxu0 0.0
    %2378 = vmatpush1.msra.mxu0 0.0
    %2379 = vmatprep.subr.mxu0 0.0
    %2380 = vmatpush1.msra.mxu0 0.0
    %2381 = vmatprep.subr.mxu0 0.0
    %2382 = vmatpush1.msra.mxu0 0.0
    %2383 = vmatprep.subr.mxu0 0.0
    %2384 = vmatpush1.msra.mxu0 0.0
    %2385 = vmatprep.subr.mxu0 0.0
    %2386 = vmatpush1.msra.mxu0 0.0
    %2387 = vmatprep.subr.mxu0 0.0
    %2388 = vmatpush1.msra.mxu0 0.0
    %2389 = vmatprep.mubr.f32.mxu0 0.0
    %2390 = vmatmul.mubr.f32.gmra.mrb[0].mxu0 %v684
    %v2391 = vpop.f32.mrb[0].mxu0
    %v2392 = vadd.f32 0.0, %v2391
    %v2393 = vpop.f32.mrb[0].mxu0
    %2394 = vdwg.mxu0
    %v2395 = vadd.f32 %v2324, %v2392
    %v2396 = vld [vmem:[%s11] sm:$0x1]
    %v2398 = vlaneseq
    %v2399 = vshrl.u32 %v2398, 7
    %v2400 = vsub.s32 0, %v2399
    %v2401 = vrot.slane %v2396, %v2400
    %v2403 = vadd.f32 %v2395, %v2401
    %vm2404 = vcmask 9216
    %2405 = vst.msk [vmem:[#allocation2] sm:$0x3] %vm2404, %v2403
    // Predicated region
    $region50: #{birnn_forward.3} parent=1 // pred_check
      _
    $region51: #{birnn_forward.3} parent=1 // pred_check_branch
      %2407 = sbr.rel (0) target = $region53
    $region52: #{birnn_forward.3} parent=1 // pred_region
      %s2409 = ssub.s32 32, 32
      %2410 = vsyncadd [#allocation3], %s2409
      %s2412 = sshll.u32 [#allocation2], 4
      %s2413 = int_to_ptr.vmem [resolvable:$true] %s2412
      %2415 = dma.vmem_to_hbm [thread:$0]  %s2413, 32, %s12, [#allocation3]
    $region53: #{birnn_forward.3} parent=1 // pred_fallthru
      _
    // Predicated region
    $region54: #{birnn_forward.3} parent=1 // pred_check
      _
    $region55: #{birnn_forward.3} parent=1 // pred_check_branch
      %2417 = sbr.rel (0) target = $region57
    $region56: #{birnn_forward.3} parent=1 // pred_region
      %2418 = dma.done [#allocation3], 32
    $region57: #{birnn_forward.3} parent=1 // pred_fallthru
      _
    %2419 = vsyncpa [#allocation3], 1

</llo_original>
